<compile_context>
chip_gen: v7x
topology: tpu7x:2x2x1
jax: 0.10.0
libtpu: 0.0.40
codegen_flags: <defaults>
</compile_context>

<pallas_src>
import functools

import jax
import jax.numpy as jnp
from jax.experimental import pallas as pl
from jax.experimental.pallas import tpu as pltpu


def _nbytes(shape, dtype):
    n = 1
    for s in shape:
        n *= int(s)
    return n * jnp.dtype(dtype).itemsize


def _vmem_limit(block_bytes, scratch_bytes):
    # double-buffered pipeline blocks + scratch + margin; floor so the compiler
    # never caps tile size below what we asked for, cap inside v7x's 64 MiB.
    need = 2 * block_bytes + scratch_bytes + (2 << 20)
    return int(min(max(need, 32 << 20), 48 << 20))


# -----------------------------------------------------------------------------
# Elementwise LSTM cell update (PyTorch gate order i, f, g, o; all math in f32).
# NOTE: in production pick H as a multiple of 128 so each gate slice starts on
# a lane boundary and the (B,H)x(H,4H) matmul fills the MXU.
# -----------------------------------------------------------------------------
def _cell(gates, c_prev, H):
    i = jax.nn.sigmoid(gates[:, 0 * H:1 * H])
    f = jax.nn.sigmoid(gates[:, 1 * H:2 * H])
    g = jnp.tanh(gates[:, 2 * H:3 * H])
    o = jax.nn.sigmoid(gates[:, 3 * H:4 * H])
    c_new = f * c_prev + i * g
    h_new = o * jnp.tanh(c_new)
    return h_new, c_new


def _bidir_steps(gxf_ref, gxb_ref, whf_ref, whb_ref, hf, hb, cf, cb,
                 *, H, T, emit_f, emit_b):
    """T timesteps of the forward chain (local time ascending) and the backward
    chain (local time descending), interleaved, with static in-chunk indices.

    emit_f(u, h_f32, h_bf16) / emit_b(t, h_f32, h_bf16) are trace-time hooks.
    """
    for u in range(T):                      # static Python loop == unroll by T
        tb = T - 1 - u
        # Two independent recurrences: issue both matmuls back-to-back so the
        # MXU stays busy while the other chain's gates run on VPU/EUP.
        gf = gxf_ref[u].astype(jnp.float32) + jnp.dot(
            hf[...], whf_ref[...], preferred_element_type=jnp.float32)
        gb = gxb_ref[tb].astype(jnp.float32) + jnp.dot(
            hb[...], whb_ref[...], preferred_element_type=jnp.float32)

        hf_new, cf_new = _cell(gf, cf[...], H)
        hb_new, cb_new = _cell(gb, cb[...], H)
        cf[...] = cf_new
        cb[...] = cb_new

        hf_bf = hf_new.astype(jnp.bfloat16)
        hb_bf = hb_new.astype(jnp.bfloat16)
        hf[...] = hf_bf          # h kept in bf16: feeds next step's MXU directly
        hb[...] = hb_bf

        emit_f(u, hf_new, hf_bf)
        emit_b(tb, hb_new, hb_bf)


# -----------------------------------------------------------------------------
# Variant A (intermediate layers): emit the full per-direction hidden sequence.
# grid = (S // T,) recurrent chunks.
# -----------------------------------------------------------------------------
def _lstm_seq_kernel(gxf_ref, gxb_ref, whf_ref, whb_ref, of_ref, ob_ref,
                     hf, hb, cf, cb, *, H, T):
    @pl.when(pl.program_id(0) == 0)
    def _():
        hf[...] = jnp.zeros(hf.shape, hf.dtype)
        hb[...] = jnp.zeros(hb.shape, hb.dtype)
        cf[...] = jnp.zeros(cf.shape, cf.dtype)
        cb[...] = jnp.zeros(cb.shape, cb.dtype)

    def emit_f(u, _h32, h16):
        of_ref[u] = h16

    def emit_b(t, _h32, h16):
        ob_ref[t] = h16

    _bidir_steps(gxf_ref, gxb_ref, whf_ref, whb_ref, hf, hb, cf, cb,
                 H=H, T=T, emit_f=emit_f, emit_b=emit_b)


# -----------------------------------------------------------------------------
# Variant B (last layer): running max over time in VMEM + fused classifier head
# in the finalize block.  The (S,B,2H) last-layer sequence and the pooled
# features never touch HBM.
# -----------------------------------------------------------------------------
def _lstm_pool_head_kernel(gxf_ref, gxb_ref, whf_ref, whb_ref, wo_ref, bo_ref,
                           out_ref, hf, hb, cf, cb, mxf, mxb, *, H, T):
    c_idx = pl.program_id(0)

    @pl.when(c_idx == 0)
    def _():
        hf[...] = jnp.zeros(hf.shape, hf.dtype)
        hb[...] = jnp.zeros(hb.shape, hb.dtype)
        cf[...] = jnp.zeros(cf.shape, cf.dtype)
        cb[...] = jnp.zeros(cb.shape, cb.dtype)
        mxf[...] = jnp.full(mxf.shape, -jnp.inf, mxf.dtype)
        mxb[...] = jnp.full(mxb.shape, -jnp.inf, mxb.dtype)

    def emit_f(_u, h32, _h16):
        mxf[...] = jnp.maximum(mxf[...], h32)

    def emit_b(_t, h32, _h16):
        mxb[...] = jnp.maximum(mxb[...], h32)

    _bidir_steps(gxf_ref, gxb_ref, whf_ref, whb_ref, hf, hb, cf, cb,
                 H=H, T=T, emit_f=emit_f, emit_b=emit_b)

    @pl.when(c_idx == pl.num_programs(0) - 1)
    def _():
        # Linear(2H -> 1) + sigmoid: VPU multiply + lane reduction (no N=1 MXU).
        sf = jnp.sum(mxf[...] * wo_ref[0:1, :], axis=-1, keepdims=True)   # (B,1)
        sb = jnp.sum(mxb[...] * wo_ref[1:2, :], axis=-1, keepdims=True)   # (B,1)
        out_ref[...] = jax.nn.sigmoid(sf + sb + bo_ref[...])


# -----------------------------------------------------------------------------
# Wrappers
# -----------------------------------------------------------------------------
def lstm_bidir_seq(gx_f, gx_b, whh_f, whh_b, *, time_chunk):
    """gx_*: (S, B, 4H) bf16 precomputed input gates per direction.
       whh_*: (H, 4H) bf16.  Returns (y_f, y_b), each (S, B, H) bf16."""
    S, B, _ = gx_f.shape
    H = whh_f.shape[0]
    T = time_chunk
    assert S % T == 0, "time_chunk must divide sequence length"
    nc = S // T

    fwd_map = lambda c: (c, 0, 0)              # forward walks chunks 0..nc-1
    bwd_map = lambda c: (nc - 1 - c, 0, 0)     # backward walks nc-1..0

    in_specs = [
        pl.BlockSpec((T, B, 4 * H), fwd_map),
        pl.BlockSpec((T, B, 4 * H), bwd_map),
        pl.BlockSpec((H, 4 * H), lambda c: (0, 0)),
        pl.BlockSpec((H, 4 * H), lambda c: (0, 0)),
    ]
    out_specs = [
        pl.BlockSpec((T, B, H), fwd_map),
        pl.BlockSpec((T, B, H), bwd_map),
    ]
    out_shape = (jax.ShapeDtypeStruct((S, B, H), jnp.bfloat16),
                 jax.ShapeDtypeStruct((S, B, H), jnp.bfloat16))
    scratch = [
        pltpu.VMEM((B, H), jnp.bfloat16),   # h fwd (bf16 on purpose)
        pltpu.VMEM((B, H), jnp.bfloat16),   # h bwd
        pltpu.VMEM((B, H), jnp.float32),    # c fwd
        pltpu.VMEM((B, H), jnp.float32),    # c bwd
    ]

    block_bytes = (2 * _nbytes((T, B, 4 * H), jnp.bfloat16)
                   + 2 * _nbytes((T, B, H), jnp.bfloat16)
                   + 2 * _nbytes((H, 4 * H), jnp.bfloat16))
    scratch_bytes = (2 * _nbytes((B, H), jnp.bfloat16)
                     + 2 * _nbytes((B, H), jnp.float32))

    return pl.pallas_call(
        functools.partial(_lstm_seq_kernel, H=H, T=T),
        out_shape=out_shape,
        grid_spec=pltpu.PrefetchScalarGridSpec(
            num_scalar_prefetch=0,
            grid=(nc,),
            in_specs=in_specs,
            out_specs=out_specs,
            scratch_shapes=scratch),
        compiler_params=pltpu.CompilerParams(
            dimension_semantics=("arbitrary",),
            vmem_limit_bytes=_vmem_limit(block_bytes, scratch_bytes)),
    )(gx_f, gx_b, whh_f, whh_b)


def lstm_bidir_pool_head(gx_f, gx_b, whh_f, whh_b, w_out, b_out, *, time_chunk):
    """Last layer: recurrence + max-pool over time + Linear(2H->1) + sigmoid.
       w_out: (2, H) f32 = fc weight split into [forward, backward] halves.
       b_out: (1, 1) f32.  Returns (B, 1) f32 probabilities."""
    S, B, _ = gx_f.shape
    H = whh_f.shape[0]
    T = time_chunk
    assert S % T == 0, "time_chunk must divide sequence length"
    nc = S // T

    fwd_map = lambda c: (c, 0, 0)
    bwd_map = lambda c: (nc - 1 - c, 0, 0)

    in_specs = [
        pl.BlockSpec((T, B, 4 * H), fwd_map),
        pl.BlockSpec((T, B, 4 * H), bwd_map),
        pl.BlockSpec((H, 4 * H), lambda c: (0, 0)),
        pl.BlockSpec((H, 4 * H), lambda c: (0, 0)),
        pl.BlockSpec((2, H), lambda c: (0, 0)),
        pl.BlockSpec((1, 1), lambda c: (0, 0)),
    ]
    out_specs = pl.BlockSpec((B, 1), lambda c: (0, 0))
    out_shape = jax.ShapeDtypeStruct((B, 1), jnp.float32)
    scratch = [
        pltpu.VMEM((B, H), jnp.bfloat16),   # h fwd
        pltpu.VMEM((B, H), jnp.bfloat16),   # h bwd
        pltpu.VMEM((B, H), jnp.float32),    # c fwd
        pltpu.VMEM((B, H), jnp.float32),    # c bwd
        pltpu.VMEM((B, H), jnp.float32),    # running max fwd
        pltpu.VMEM((B, H), jnp.float32),    # running max bwd
    ]

    block_bytes = (2 * _nbytes((T, B, 4 * H), jnp.bfloat16)
                   + 2 * _nbytes((H, 4 * H), jnp.bfloat16)
                   + _nbytes((2, H), jnp.float32)
                   + _nbytes((B, 1), jnp.float32))
    scratch_bytes = (2 * _nbytes((B, H), jnp.bfloat16)
                     + 4 * _nbytes((B, H), jnp.float32))

    return pl.pallas_call(
        functools.partial(_lstm_pool_head_kernel, H=H, T=T),
        out_shape=out_shape,
        grid_spec=pltpu.PrefetchScalarGridSpec(
            num_scalar_prefetch=0,
            grid=(nc,),
            in_specs=in_specs,
            out_specs=out_specs,
            scratch_shapes=scratch),
        compiler_params=pltpu.CompilerParams(
            dimension_semantics=("arbitrary",),
            vmem_limit_bytes=_vmem_limit(block_bytes, scratch_bytes)),
    )(gx_f, gx_b, whh_f, whh_b, w_out, b_out)


# -----------------------------------------------------------------------------
# Full forward pass: embedding gather + hoisted input-projection GEMMs are
# plain XLA glue; the recurrence, max-pool and classifier head are Pallas.
# -----------------------------------------------------------------------------
def lstm_pooling_classifier_forward(tokens, params, *, num_layers, time_chunk):
    emb = jnp.take(params["embedding"], tokens, axis=0)        # (B, S, E) f32
    x = jnp.transpose(emb, (1, 0, 2)).astype(jnp.bfloat16)     # (S, B, E) bf16

    y_f = y_b = None
    out = None
    for l in range(num_layers):
        wih = params[f"wih_{l}"]        # l==0: (2,E,4H) ; else (2,2,H,4H) bf16
        whh = params[f"whh_{l}"]        # (2,H,4H) bf16
        b = params[f"b_{l}"]            # (2,4H) f32 (= b_ih + b_hh)

        # Input projection hoisted out of the recurrence: one big GEMM per
        # direction (bf16 MXU, f32 accumulate).  Per-source-direction GEMMs
        # keep the contraction contiguous (no (2,S,B,H)->(S,B,2H) concat pass).
        if l == 0:
            gx_f = jnp.einsum("sbe,eg->sbg", x, wih[0],
                              preferred_element_type=jnp.float32)
            gx_b = jnp.einsum("sbe,eg->sbg", x, wih[1],
                              preferred_element_type=jnp.float32)
        else:
            gx_f = (jnp.einsum("sbh,hg->sbg", y_f, wih[0, 0],
                               preferred_element_type=jnp.float32)
                    + jnp.einsum("sbh,hg->sbg", y_b, wih[0, 1],
                                 preferred_element_type=jnp.float32))
            gx_b = (jnp.einsum("sbh,hg->sbg", y_f, wih[1, 0],
                               preferred_element_type=jnp.float32)
                    + jnp.einsum("sbh,hg->sbg", y_b, wih[1, 1],
                                 preferred_element_type=jnp.float32))
        # Bias add + bf16 cast: elementwise consumer of the dot -> fuses into
        # the GEMM epilogue (no extra HBM pass over the (S,B,4H) tensor).
        gx_f = (gx_f + b[0]).astype(jnp.bfloat16)
        gx_b = (gx_b + b[1]).astype(jnp.bfloat16)

        if l == num_layers - 1:
            out = lstm_bidir_pool_head(gx_f, gx_b, whh[0], whh[1],
                                       params["w_out"], params["b_out"],
                                       time_chunk=time_chunk)
        else:
            y_f, y_b = lstm_bidir_seq(gx_f, gx_b, whh[0], whh[1],
                                      time_chunk=time_chunk)
            # TODO(synk): inter-layer LSTM dropout (p=0.5) omitted — eval mode.

    # TODO(synk): nn.Dropout on pooled features omitted — eval-mode semantics.
    # NOTE: like the PyTorch reference (no pack_padded_sequence), the max-pool
    # includes padding positions.
    return out[:, 0]                                           # (B,)


# -----------------------------------------------------------------------------
# Deterministic synthetic parameters (PyTorch-shaped, reorganized:
#   wih_{l>0} axis0 = destination direction, axis1 = source direction, i.e.
#   the [forward H | backward H] column split of weight_ih_l{n};
#   w_out rows = [forward, backward] halves of the fc weight).
# -----------------------------------------------------------------------------
def init_params(key, *, vocab, embed_dim, hidden, num_layers, pad_idx):
    params = {}
    key, k_emb = jax.random.split(key)
    emb = jax.random.normal(k_emb, (vocab, embed_dim), jnp.float32) * 0.1
    params["embedding"] = emb.at[pad_idx].set(0.0)             # padding_idx row

    bound = 1.0 / (hidden ** 0.5)
    for l in range(num_layers):
        key, k1, k2, k3, k4 = jax.random.split(key, 5)
        if l == 0:
            wih_shape = (2, embed_dim, 4 * hidden)
        else:
            wih_shape = (2, 2, hidden, 4 * hidden)
        params[f"wih_{l}"] = jax.random.uniform(
            k1, wih_shape, jnp.float32, -bound, bound).astype(jnp.bfloat16)
        params[f"whh_{l}"] = jax.random.uniform(
            k2, (2, hidden, 4 * hidden), jnp.float32, -bound, bound
        ).astype(jnp.bfloat16)
        # combined bias = b_ih + b_hh (sum of two uniforms, matching PyTorch)
        b_ih = jax.random.uniform(k3, (2, 4 * hidden), jnp.float32, -bound, bound)
        b_hh = jax.random.uniform(k4, (2, 4 * hidden), jnp.float32, -bound, bound)
        params[f"b_{l}"] = b_ih + b_hh

    head_bound = 1.0 / ((2 * hidden) ** 0.5)
    key, kw, kb = jax.random.split(key, 3)
    params["w_out"] = jax.random.uniform(
        kw, (2, hidden), jnp.float32, -head_bound, head_bound)
    params["b_out"] = jax.random.uniform(
        kb, (1, 1), jnp.float32, -head_bound, head_bound)
    return params


if __name__ == "__main__":
    B, S = 2, 8
    VOCAB, E, H, L = 50, 16, 32, 2
    PAD_IDX = 0
    TIME_CHUNK = 4          # 2 chunks of 4 steps -> exercises chunked recurrence

    key = jax.random.PRNGKey(0)
    key, k_tok = jax.random.split(key)
    tokens = jax.random.randint(k_tok, (B, S), 1, VOCAB, dtype=jnp.int32)
    tokens = tokens.at[0, -2:].set(PAD_IDX)                    # some padding

    params = init_params(key, vocab=VOCAB, embed_dim=E, hidden=H,
                         num_layers=L, pad_idx=PAD_IDX)

    fwd = jax.jit(functools.partial(lstm_pooling_classifier_forward,
                                    num_layers=L, time_chunk=TIME_CHUNK))
    out = jax.block_until_ready(fwd(tokens, params))
    assert out.shape == (B,)
    print("KERNEL_OK")
</pallas_src>

<mosaic_0001>
module attributes {stable_mosaic.version = 11 : i64} {
  func.func @_lstm_seq_kernel(%arg0: i32, %arg1: memref<4x2x128xbf16, #tpu.memory_space<vmem>>, %arg2: memref<4x2x128xbf16, #tpu.memory_space<vmem>>, %arg3: memref<32x128xbf16, #tpu.memory_space<vmem>>, %arg4: memref<32x128xbf16, #tpu.memory_space<vmem>>, %arg5: memref<4x2x32xbf16, #tpu.memory_space<vmem>>, %arg6: memref<4x2x32xbf16, #tpu.memory_space<vmem>>, %arg7: memref<2x32xbf16, #tpu.memory_space<vmem>>, %arg8: memref<2x32xbf16, #tpu.memory_space<vmem>>, %arg9: memref<2x32xf32, #tpu.memory_space<vmem>>, %arg10: memref<2x32xf32, #tpu.memory_space<vmem>>) attributes {dimension_semantics = [#tpu.dimension_semantics<arbitrary>], iteration_bounds = array<i64: 2>, scalar_prefetch = 0 : i64, scratch_operands = 4 : i64, tpu.core_type = #tpu.core_type<tc>, window_params = [{transform_indices = @transform_0, window_bounds = array<i64: 4, 2, 128>}, {transform_indices = @transform_1, window_bounds = array<i64: 4, 2, 128>}, {pipeline_mode = #tpu.pipeline_mode<synchronous>, transform_indices = @transform_2, window_bounds = array<i64: 32, 128>}, {pipeline_mode = #tpu.pipeline_mode<synchronous>, transform_indices = @transform_3, window_bounds = array<i64: 32, 128>}, {transform_indices = @transform_4, window_bounds = array<i64: 4, 2, 32>}, {transform_indices = @transform_5, window_bounds = array<i64: 4, 2, 32>}]} {
    %c0_i32 = arith.constant 0 : i32
    %0 = arith.cmpi eq, %arg0, %c0_i32 : i32
    %1 = arith.extui %0 : i1 to i32
    %c0_i32_0 = arith.constant 0 : i32
    %2 = arith.cmpi ne, %1, %c0_i32_0 : i32
    scf.if %2 {
      %cst_156 = arith.constant 0.000000e+00 : bf16
      %315 = vector.broadcast %cst_156 : bf16 to vector<2x32xbf16>
      %c0_157 = arith.constant 0 : index
      %c0_158 = arith.constant 0 : index
      %316 = vector.load %arg7[%c0_157, %c0_158] : memref<2x32xbf16, #tpu.memory_space<vmem>>, vector<2x32xbf16>
      tpu.vector_store %arg7[%c0_157, %c0_158], %315 {strides = array<i32>} : memref<2x32xbf16, #tpu.memory_space<vmem>>, vector<2x32xbf16>,
      %cst_159 = arith.constant 0.000000e+00 : bf16
      %317 = vector.broadcast %cst_159 : bf16 to vector<2x32xbf16>
      %c0_160 = arith.constant 0 : index
      %c0_161 = arith.constant 0 : index
      %318 = vector.load %arg8[%c0_160, %c0_161] : memref<2x32xbf16, #tpu.memory_space<vmem>>, vector<2x32xbf16>
      tpu.vector_store %arg8[%c0_160, %c0_161], %317 {strides = array<i32>} : memref<2x32xbf16, #tpu.memory_space<vmem>>, vector<2x32xbf16>,
      %cst_162 = arith.constant 0.000000e+00 : f32
      %319 = vector.broadcast %cst_162 : f32 to vector<2x32xf32>
      %c0_163 = arith.constant 0 : index
      %c0_164 = arith.constant 0 : index
      %320 = vector.load %arg9[%c0_163, %c0_164] : memref<2x32xf32, #tpu.memory_space<vmem>>, vector<2x32xf32>
      tpu.vector_store %arg9[%c0_163, %c0_164], %319 {strides = array<i32>} : memref<2x32xf32, #tpu.memory_space<vmem>>, vector<2x32xf32>,
      %cst_165 = arith.constant 0.000000e+00 : f32
      %321 = vector.broadcast %cst_165 : f32 to vector<2x32xf32>
      %c0_166 = arith.constant 0 : index
      %c0_167 = arith.constant 0 : index
      %322 = vector.load %arg10[%c0_166, %c0_167] : memref<2x32xf32, #tpu.memory_space<vmem>>, vector<2x32xf32>
      tpu.vector_store %arg10[%c0_166, %c0_167], %321 {strides = array<i32>} : memref<2x32xf32, #tpu.memory_space<vmem>>, vector<2x32xf32>,
    } else {
    }
    %c0 = arith.constant 0 : index
    %c0_1 = arith.constant 0 : index
    %c0_2 = arith.constant 0 : index
    %3 = vector.load %arg1[%c0, %c0_1, %c0_2] : memref<4x2x128xbf16, #tpu.memory_space<vmem>>, vector<1x2x128xbf16>
    %4 = vector.shape_cast %3 : vector<1x2x128xbf16> to vector<2x128xbf16>
    %5 = arith.extf %4 : vector<2x128xbf16> to vector<2x128xf32>
    %c0_3 = arith.constant 0 : index
    %c0_4 = arith.constant 0 : index
    %6 = vector.load %arg7[%c0_3, %c0_4] : memref<2x32xbf16, #tpu.memory_space<vmem>>, vector<2x32xbf16>
    %c0_5 = arith.constant 0 : index
    %c0_6 = arith.constant 0 : index
    %7 = vector.load %arg3[%c0_5, %c0_6] : memref<32x128xbf16, #tpu.memory_space<vmem>>, vector<32x128xbf16>
    %cst = arith.constant dense<0.000000e+00> : vector<2x128xf32>
    %8 = tpu.matmul %6, %7, %cst {dimension_numbers = #tpu.dot_dimension_numbers<[1], [0], [0], [1], [0, 0, 1, 1], [], []>} : vector<2x32xbf16>, vector<32x128xbf16>, vector<2x128xf32> -> vector<2x128xf32>
    %9 = arith.addf %5, %8 : vector<2x128xf32>
    %c3 = arith.constant 3 : index
    %c0_7 = arith.constant 0 : index
    %c0_8 = arith.constant 0 : index
    %10 = vector.load %arg2[%c3, %c0_7, %c0_8] : memref<4x2x128xbf16, #tpu.memory_space<vmem>>, vector<1x2x128xbf16>
    %11 = vector.shape_cast %10 : vector<1x2x128xbf16> to vector<2x128xbf16>
    %12 = arith.extf %11 : vector<2x128xbf16> to vector<2x128xf32>
    %c0_9 = arith.constant 0 : index
    %c0_10 = arith.constant 0 : index
    %13 = vector.load %arg8[%c0_9, %c0_10] : memref<2x32xbf16, #tpu.memory_space<vmem>>, vector<2x32xbf16>
    %c0_11 = arith.constant 0 : index
    %c0_12 = arith.constant 0 : index
    %14 = vector.load %arg4[%c0_11, %c0_12] : memref<32x128xbf16, #tpu.memory_space<vmem>>, vector<32x128xbf16>
    %cst_13 = arith.constant dense<0.000000e+00> : vector<2x128xf32>
    %15 = tpu.matmul %13, %14, %cst_13 {dimension_numbers = #tpu.dot_dimension_numbers<[1], [0], [0], [1], [0, 0, 1, 1], [], []>} : vector<2x32xbf16>, vector<32x128xbf16>, vector<2x128xf32> -> vector<2x128xf32>
    %16 = arith.addf %12, %15 : vector<2x128xf32>
    %c0_14 = arith.constant 0 : index
    %c0_15 = arith.constant 0 : index
    %17 = vector.load %arg9[%c0_14, %c0_15] : memref<2x32xf32, #tpu.memory_space<vmem>>, vector<2x32xf32>
    %18 = vector.extract_strided_slice %9 {offsets = [0, 0], sizes = [2, 32], strides = [1, 1]} : vector<2x128xf32> to vector<2x32xf32>
    %19 = arith.negf %18 : vector<2x32xf32>
    %20 = math.exp %19 : vector<2x32xf32>
    %cst_16 = arith.constant 1.000000e+00 : f32
    %21 = vector.broadcast %cst_16 : f32 to vector<2x32xf32>
    %22 = arith.addf %21, %20 : vector<2x32xf32>
    %23 = arith.divf %21, %22 : vector<2x32xf32>
    %24 = vector.extract_strided_slice %9 {offsets = [0, 32], sizes = [2, 32], strides = [1, 1]} : vector<2x128xf32> to vector<2x32xf32>
    %25 = arith.negf %24 : vector<2x32xf32>
    %26 = math.exp %25 : vector<2x32xf32>
    %cst_17 = arith.constant 1.000000e+00 : f32
    %27 = vector.broadcast %cst_17 : f32 to vector<2x32xf32>
    %28 = arith.addf %27, %26 : vector<2x32xf32>
    %29 = arith.divf %27, %28 : vector<2x32xf32>
    %30 = vector.extract_strided_slice %9 {offsets = [0, 64], sizes = [2, 32], strides = [1, 1]} : vector<2x128xf32> to vector<2x32xf32>
    %31 = math.tanh %30 : vector<2x32xf32>
    %32 = vector.extract_strided_slice %9 {offsets = [0, 96], sizes = [2, 32], strides = [1, 1]} : vector<2x128xf32> to vector<2x32xf32>
    %33 = arith.negf %32 : vector<2x32xf32>
    %34 = math.exp %33 : vector<2x32xf32>
    %cst_18 = arith.constant 1.000000e+00 : f32
    %35 = vector.broadcast %cst_18 : f32 to vector<2x32xf32>
    %36 = arith.addf %35, %34 : vector<2x32xf32>
    %37 = arith.divf %35, %36 : vector<2x32xf32>
    %38 = arith.mulf %29, %17 : vector<2x32xf32>
    %39 = arith.mulf %23, %31 : vector<2x32xf32>
    %40 = arith.addf %38, %39 : vector<2x32xf32>
    %41 = math.tanh %40 : vector<2x32xf32>
    %42 = arith.mulf %37, %41 : vector<2x32xf32>
    %c0_19 = arith.constant 0 : index
    %c0_20 = arith.constant 0 : index
    %43 = vector.load %arg10[%c0_19, %c0_20] : memref<2x32xf32, #tpu.memory_space<vmem>>, vector<2x32xf32>
    %44 = vector.extract_strided_slice %16 {offsets = [0, 0], sizes = [2, 32], strides = [1, 1]} : vector<2x128xf32> to vector<2x32xf32>
    %45 = arith.negf %44 : vector<2x32xf32>
    %46 = math.exp %45 : vector<2x32xf32>
    %cst_21 = arith.constant 1.000000e+00 : f32
    %47 = vector.broadcast %cst_21 : f32 to vector<2x32xf32>
    %48 = arith.addf %47, %46 : vector<2x32xf32>
    %49 = arith.divf %47, %48 : vector<2x32xf32>
    %50 = vector.extract_strided_slice %16 {offsets = [0, 32], sizes = [2, 32], strides = [1, 1]} : vector<2x128xf32> to vector<2x32xf32>
    %51 = arith.negf %50 : vector<2x32xf32>
    %52 = math.exp %51 : vector<2x32xf32>
    %cst_22 = arith.constant 1.000000e+00 : f32
    %53 = vector.broadcast %cst_22 : f32 to vector<2x32xf32>
    %54 = arith.addf %53, %52 : vector<2x32xf32>
    %55 = arith.divf %53, %54 : vector<2x32xf32>
    %56 = vector.extract_strided_slice %16 {offsets = [0, 64], sizes = [2, 32], strides = [1, 1]} : vector<2x128xf32> to vector<2x32xf32>
    %57 = math.tanh %56 : vector<2x32xf32>
    %58 = vector.extract_strided_slice %16 {offsets = [0, 96], sizes = [2, 32], strides = [1, 1]} : vector<2x128xf32> to vector<2x32xf32>
    %59 = arith.negf %58 : vector<2x32xf32>
    %60 = math.exp %59 : vector<2x32xf32>
    %cst_23 = arith.constant 1.000000e+00 : f32
    %61 = vector.broadcast %cst_23 : f32 to vector<2x32xf32>
    %62 = arith.addf %61, %60 : vector<2x32xf32>
    %63 = arith.divf %61, %62 : vector<2x32xf32>
    %64 = arith.mulf %55, %43 : vector<2x32xf32>
    %65 = arith.mulf %49, %57 : vector<2x32xf32>
    %66 = arith.addf %64, %65 : vector<2x32xf32>
    %67 = math.tanh %66 : vector<2x32xf32>
    %68 = arith.mulf %63, %67 : vector<2x32xf32>
    %c0_24 = arith.constant 0 : index
    %c0_25 = arith.constant 0 : index
    %69 = vector.load %arg9[%c0_24, %c0_25] : memref<2x32xf32, #tpu.memory_space<vmem>>, vector<2x32xf32>
    tpu.vector_store %arg9[%c0_24, %c0_25], %40 {strides = array<i32>} : memref<2x32xf32, #tpu.memory_space<vmem>>, vector<2x32xf32>,
    %c0_26 = arith.constant 0 : index
    %c0_27 = arith.constant 0 : index
    %70 = vector.load %arg10[%c0_26, %c0_27] : memref<2x32xf32, #tpu.memory_space<vmem>>, vector<2x32xf32>
    tpu.vector_store %arg10[%c0_26, %c0_27], %66 {strides = array<i32>} : memref<2x32xf32, #tpu.memory_space<vmem>>, vector<2x32xf32>,
    %71 = arith.truncf %42 : vector<2x32xf32> to vector<2x32xbf16>
    %72 = arith.truncf %68 : vector<2x32xf32> to vector<2x32xbf16>
    %c0_28 = arith.constant 0 : index
    %c0_29 = arith.constant 0 : index
    %73 = vector.load %arg7[%c0_28, %c0_29] : memref<2x32xbf16, #tpu.memory_space<vmem>>, vector<2x32xbf16>
    tpu.vector_store %arg7[%c0_28, %c0_29], %71 {strides = array<i32>} : memref<2x32xbf16, #tpu.memory_space<vmem>>, vector<2x32xbf16>,
    %c0_30 = arith.constant 0 : index
    %c0_31 = arith.constant 0 : index
    %74 = vector.load %arg8[%c0_30, %c0_31] : memref<2x32xbf16, #tpu.memory_space<vmem>>, vector<2x32xbf16>
    tpu.vector_store %arg8[%c0_30, %c0_31], %72 {strides = array<i32>} : memref<2x32xbf16, #tpu.memory_space<vmem>>, vector<2x32xbf16>,
    %c0_32 = arith.constant 0 : index
    %c0_33 = arith.constant 0 : index
    %c0_34 = arith.constant 0 : index
    %75 = vector.load %arg5[%c0_32, %c0_33, %c0_34] : memref<4x2x32xbf16, #tpu.memory_space<vmem>>, vector<1x2x32xbf16>
    %76 = vector.shape_cast %75 : vector<1x2x32xbf16> to vector<2x32xbf16>
    %77 = vector.shape_cast %71 : vector<2x32xbf16> to vector<1x2x32xbf16>
    tpu.vector_store %arg5[%c0_32, %c0_33, %c0_34], %77 {strides = array<i32>} : memref<4x2x32xbf16, #tpu.memory_space<vmem>>, vector<1x2x32xbf16>,
    %c3_35 = arith.constant 3 : index
    %c0_36 = arith.constant 0 : index
    %c0_37 = arith.constant 0 : index
    %78 = vector.load %arg6[%c3_35, %c0_36, %c0_37] : memref<4x2x32xbf16, #tpu.memory_space<vmem>>, vector<1x2x32xbf16>
    %79 = vector.shape_cast %78 : vector<1x2x32xbf16> to vector<2x32xbf16>
    %80 = vector.shape_cast %72 : vector<2x32xbf16> to vector<1x2x32xbf16>
    tpu.vector_store %arg6[%c3_35, %c0_36, %c0_37], %80 {strides = array<i32>} : memref<4x2x32xbf16, #tpu.memory_space<vmem>>, vector<1x2x32xbf16>,
    %c1 = arith.constant 1 : index
    %c0_38 = arith.constant 0 : index
    %c0_39 = arith.constant 0 : index
    %81 = vector.load %arg1[%c1, %c0_38, %c0_39] : memref<4x2x128xbf16, #tpu.memory_space<vmem>>, vector<1x2x128xbf16>
    %82 = vector.shape_cast %81 : vector<1x2x128xbf16> to vector<2x128xbf16>
    %83 = arith.extf %82 : vector<2x128xbf16> to vector<2x128xf32>
    %c0_40 = arith.constant 0 : index
    %c0_41 = arith.constant 0 : index
    %84 = vector.load %arg7[%c0_40, %c0_41] : memref<2x32xbf16, #tpu.memory_space<vmem>>, vector<2x32xbf16>
    %c0_42 = arith.constant 0 : index
    %c0_43 = arith.constant 0 : index
    %85 = vector.load %arg3[%c0_42, %c0_43] : memref<32x128xbf16, #tpu.memory_space<vmem>>, vector<32x128xbf16>
    %cst_44 = arith.constant dense<0.000000e+00> : vector<2x128xf32>
    %86 = tpu.matmul %84, %85, %cst_44 {dimension_numbers = #tpu.dot_dimension_numbers<[1], [0], [0], [1], [0, 0, 1, 1], [], []>} : vector<2x32xbf16>, vector<32x128xbf16>, vector<2x128xf32> -> vector<2x128xf32>
    %87 = arith.addf %83, %86 : vector<2x128xf32>
    %c2 = arith.constant 2 : index
    %c0_45 = arith.constant 0 : index
    %c0_46 = arith.constant 0 : index
    %88 = vector.load %arg2[%c2, %c0_45, %c0_46] : memref<4x2x128xbf16, #tpu.memory_space<vmem>>, vector<1x2x128xbf16>
    %89 = vector.shape_cast %88 : vector<1x2x128xbf16> to vector<2x128xbf16>
    %90 = arith.extf %89 : vector<2x128xbf16> to vector<2x128xf32>
    %c0_47 = arith.constant 0 : index
    %c0_48 = arith.constant 0 : index
    %91 = vector.load %arg8[%c0_47, %c0_48] : memref<2x32xbf16, #tpu.memory_space<vmem>>, vector<2x32xbf16>
    %c0_49 = arith.constant 0 : index
    %c0_50 = arith.constant 0 : index
    %92 = vector.load %arg4[%c0_49, %c0_50] : memref<32x128xbf16, #tpu.memory_space<vmem>>, vector<32x128xbf16>
    %cst_51 = arith.constant dense<0.000000e+00> : vector<2x128xf32>
    %93 = tpu.matmul %91, %92, %cst_51 {dimension_numbers = #tpu.dot_dimension_numbers<[1], [0], [0], [1], [0, 0, 1, 1], [], []>} : vector<2x32xbf16>, vector<32x128xbf16>, vector<2x128xf32> -> vector<2x128xf32>
    %94 = arith.addf %90, %93 : vector<2x128xf32>
    %c0_52 = arith.constant 0 : index
    %c0_53 = arith.constant 0 : index
    %95 = vector.load %arg9[%c0_52, %c0_53] : memref<2x32xf32, #tpu.memory_space<vmem>>, vector<2x32xf32>
    %96 = vector.extract_strided_slice %87 {offsets = [0, 0], sizes = [2, 32], strides = [1, 1]} : vector<2x128xf32> to vector<2x32xf32>
    %97 = arith.negf %96 : vector<2x32xf32>
    %98 = math.exp %97 : vector<2x32xf32>
    %cst_54 = arith.constant 1.000000e+00 : f32
    %99 = vector.broadcast %cst_54 : f32 to vector<2x32xf32>
    %100 = arith.addf %99, %98 : vector<2x32xf32>
    %101 = arith.divf %99, %100 : vector<2x32xf32>
    %102 = vector.extract_strided_slice %87 {offsets = [0, 32], sizes = [2, 32], strides = [1, 1]} : vector<2x128xf32> to vector<2x32xf32>
    %103 = arith.negf %102 : vector<2x32xf32>
    %104 = math.exp %103 : vector<2x32xf32>
    %cst_55 = arith.constant 1.000000e+00 : f32
    %105 = vector.broadcast %cst_55 : f32 to vector<2x32xf32>
    %106 = arith.addf %105, %104 : vector<2x32xf32>
    %107 = arith.divf %105, %106 : vector<2x32xf32>
    %108 = vector.extract_strided_slice %87 {offsets = [0, 64], sizes = [2, 32], strides = [1, 1]} : vector<2x128xf32> to vector<2x32xf32>
    %109 = math.tanh %108 : vector<2x32xf32>
    %110 = vector.extract_strided_slice %87 {offsets = [0, 96], sizes = [2, 32], strides = [1, 1]} : vector<2x128xf32> to vector<2x32xf32>
    %111 = arith.negf %110 : vector<2x32xf32>
    %112 = math.exp %111 : vector<2x32xf32>
    %cst_56 = arith.constant 1.000000e+00 : f32
    %113 = vector.broadcast %cst_56 : f32 to vector<2x32xf32>
    %114 = arith.addf %113, %112 : vector<2x32xf32>
    %115 = arith.divf %113, %114 : vector<2x32xf32>
    %116 = arith.mulf %107, %95 : vector<2x32xf32>
    %117 = arith.mulf %101, %109 : vector<2x32xf32>
    %118 = arith.addf %116, %117 : vector<2x32xf32>
    %119 = math.tanh %118 : vector<2x32xf32>
    %120 = arith.mulf %115, %119 : vector<2x32xf32>
    %c0_57 = arith.constant 0 : index
    %c0_58 = arith.constant 0 : index
    %121 = vector.load %arg10[%c0_57, %c0_58] : memref<2x32xf32, #tpu.memory_space<vmem>>, vector<2x32xf32>
    %122 = vector.extract_strided_slice %94 {offsets = [0, 0], sizes = [2, 32], strides = [1, 1]} : vector<2x128xf32> to vector<2x32xf32>
    %123 = arith.negf %122 : vector<2x32xf32>
    %124 = math.exp %123 : vector<2x32xf32>
    %cst_59 = arith.constant 1.000000e+00 : f32
    %125 = vector.broadcast %cst_59 : f32 to vector<2x32xf32>
    %126 = arith.addf %125, %124 : vector<2x32xf32>
    %127 = arith.divf %125, %126 : vector<2x32xf32>
    %128 = vector.extract_strided_slice %94 {offsets = [0, 32], sizes = [2, 32], strides = [1, 1]} : vector<2x128xf32> to vector<2x32xf32>
    %129 = arith.negf %128 : vector<2x32xf32>
    %130 = math.exp %129 : vector<2x32xf32>
    %cst_60 = arith.constant 1.000000e+00 : f32
    %131 = vector.broadcast %cst_60 : f32 to vector<2x32xf32>
    %132 = arith.addf %131, %130 : vector<2x32xf32>
    %133 = arith.divf %131, %132 : vector<2x32xf32>
    %134 = vector.extract_strided_slice %94 {offsets = [0, 64], sizes = [2, 32], strides = [1, 1]} : vector<2x128xf32> to vector<2x32xf32>
    %135 = math.tanh %134 : vector<2x32xf32>
    %136 = vector.extract_strided_slice %94 {offsets = [0, 96], sizes = [2, 32], strides = [1, 1]} : vector<2x128xf32> to vector<2x32xf32>
    %137 = arith.negf %136 : vector<2x32xf32>
    %138 = math.exp %137 : vector<2x32xf32>
    %cst_61 = arith.constant 1.000000e+00 : f32
    %139 = vector.broadcast %cst_61 : f32 to vector<2x32xf32>
    %140 = arith.addf %139, %138 : vector<2x32xf32>
    %141 = arith.divf %139, %140 : vector<2x32xf32>
    %142 = arith.mulf %133, %121 : vector<2x32xf32>
    %143 = arith.mulf %127, %135 : vector<2x32xf32>
    %144 = arith.addf %142, %143 : vector<2x32xf32>
    %145 = math.tanh %144 : vector<2x32xf32>
    %146 = arith.mulf %141, %145 : vector<2x32xf32>
    %c0_62 = arith.constant 0 : index
    %c0_63 = arith.constant 0 : index
    %147 = vector.load %arg9[%c0_62, %c0_63] : memref<2x32xf32, #tpu.memory_space<vmem>>, vector<2x32xf32>
    tpu.vector_store %arg9[%c0_62, %c0_63], %118 {strides = array<i32>} : memref<2x32xf32, #tpu.memory_space<vmem>>, vector<2x32xf32>,
    %c0_64 = arith.constant 0 : index
    %c0_65 = arith.constant 0 : index
    %148 = vector.load %arg10[%c0_64, %c0_65] : memref<2x32xf32, #tpu.memory_space<vmem>>, vector<2x32xf32>
    tpu.vector_store %arg10[%c0_64, %c0_65], %144 {strides = array<i32>} : memref<2x32xf32, #tpu.memory_space<vmem>>, vector<2x32xf32>,
    %149 = arith.truncf %120 : vector<2x32xf32> to vector<2x32xbf16>
    %150 = arith.truncf %146 : vector<2x32xf32> to vector<2x32xbf16>
    %c0_66 = arith.constant 0 : index
    %c0_67 = arith.constant 0 : index
    %151 = vector.load %arg7[%c0_66, %c0_67] : memref<2x32xbf16, #tpu.memory_space<vmem>>, vector<2x32xbf16>
    tpu.vector_store %arg7[%c0_66, %c0_67], %149 {strides = array<i32>} : memref<2x32xbf16, #tpu.memory_space<vmem>>, vector<2x32xbf16>,
    %c0_68 = arith.constant 0 : index
    %c0_69 = arith.constant 0 : index
    %152 = vector.load %arg8[%c0_68, %c0_69] : memref<2x32xbf16, #tpu.memory_space<vmem>>, vector<2x32xbf16>
    tpu.vector_store %arg8[%c0_68, %c0_69], %150 {strides = array<i32>} : memref<2x32xbf16, #tpu.memory_space<vmem>>, vector<2x32xbf16>,
    %c1_70 = arith.constant 1 : index
    %c0_71 = arith.constant 0 : index
    %c0_72 = arith.constant 0 : index
    %153 = vector.load %arg5[%c1_70, %c0_71, %c0_72] : memref<4x2x32xbf16, #tpu.memory_space<vmem>>, vector<1x2x32xbf16>
    %154 = vector.shape_cast %153 : vector<1x2x32xbf16> to vector<2x32xbf16>
    %155 = vector.shape_cast %149 : vector<2x32xbf16> to vector<1x2x32xbf16>
    tpu.vector_store %arg5[%c1_70, %c0_71, %c0_72], %155 {strides = array<i32>} : memref<4x2x32xbf16, #tpu.memory_space<vmem>>, vector<1x2x32xbf16>,
    %c2_73 = arith.constant 2 : index
    %c0_74 = arith.constant 0 : index
    %c0_75 = arith.constant 0 : index
    %156 = vector.load %arg6[%c2_73, %c0_74, %c0_75] : memref<4x2x32xbf16, #tpu.memory_space<vmem>>, vector<1x2x32xbf16>
    %157 = vector.shape_cast %156 : vector<1x2x32xbf16> to vector<2x32xbf16>
    %158 = vector.shape_cast %150 : vector<2x32xbf16> to vector<1x2x32xbf16>
    tpu.vector_store %arg6[%c2_73, %c0_74, %c0_75], %158 {strides = array<i32>} : memref<4x2x32xbf16, #tpu.memory_space<vmem>>, vector<1x2x32xbf16>,
    %c2_76 = arith.constant 2 : index
    %c0_77 = arith.constant 0 : index
    %c0_78 = arith.constant 0 : index
    %159 = vector.load %arg1[%c2_76, %c0_77, %c0_78] : memref<4x2x128xbf16, #tpu.memory_space<vmem>>, vector<1x2x128xbf16>
    %160 = vector.shape_cast %159 : vector<1x2x128xbf16> to vector<2x128xbf16>
    %161 = arith.extf %160 : vector<2x128xbf16> to vector<2x128xf32>
    %c0_79 = arith.constant 0 : index
    %c0_80 = arith.constant 0 : index
    %162 = vector.load %arg7[%c0_79, %c0_80] : memref<2x32xbf16, #tpu.memory_space<vmem>>, vector<2x32xbf16>
    %c0_81 = arith.constant 0 : index
    %c0_82 = arith.constant 0 : index
    %163 = vector.load %arg3[%c0_81, %c0_82] : memref<32x128xbf16, #tpu.memory_space<vmem>>, vector<32x128xbf16>
    %cst_83 = arith.constant dense<0.000000e+00> : vector<2x128xf32>
    %164 = tpu.matmul %162, %163, %cst_83 {dimension_numbers = #tpu.dot_dimension_numbers<[1], [0], [0], [1], [0, 0, 1, 1], [], []>} : vector<2x32xbf16>, vector<32x128xbf16>, vector<2x128xf32> -> vector<2x128xf32>
    %165 = arith.addf %161, %164 : vector<2x128xf32>
    %c1_84 = arith.constant 1 : index
    %c0_85 = arith.constant 0 : index
    %c0_86 = arith.constant 0 : index
    %166 = vector.load %arg2[%c1_84, %c0_85, %c0_86] : memref<4x2x128xbf16, #tpu.memory_space<vmem>>, vector<1x2x128xbf16>
    %167 = vector.shape_cast %166 : vector<1x2x128xbf16> to vector<2x128xbf16>
    %168 = arith.extf %167 : vector<2x128xbf16> to vector<2x128xf32>
    %c0_87 = arith.constant 0 : index
    %c0_88 = arith.constant 0 : index
    %169 = vector.load %arg8[%c0_87, %c0_88] : memref<2x32xbf16, #tpu.memory_space<vmem>>, vector<2x32xbf16>
    %c0_89 = arith.constant 0 : index
    %c0_90 = arith.constant 0 : index
    %170 = vector.load %arg4[%c0_89, %c0_90] : memref<32x128xbf16, #tpu.memory_space<vmem>>, vector<32x128xbf16>
    %cst_91 = arith.constant dense<0.000000e+00> : vector<2x128xf32>
    %171 = tpu.matmul %169, %170, %cst_91 {dimension_numbers = #tpu.dot_dimension_numbers<[1], [0], [0], [1], [0, 0, 1, 1], [], []>} : vector<2x32xbf16>, vector<32x128xbf16>, vector<2x128xf32> -> vector<2x128xf32>
    %172 = arith.addf %168, %171 : vector<2x128xf32>
    %c0_92 = arith.constant 0 : index
    %c0_93 = arith.constant 0 : index
    %173 = vector.load %arg9[%c0_92, %c0_93] : memref<2x32xf32, #tpu.memory_space<vmem>>, vector<2x32xf32>
    %174 = vector.extract_strided_slice %165 {offsets = [0, 0], sizes = [2, 32], strides = [1, 1]} : vector<2x128xf32> to vector<2x32xf32>
    %175 = arith.negf %174 : vector<2x32xf32>
    %176 = math.exp %175 : vector<2x32xf32>
    %cst_94 = arith.constant 1.000000e+00 : f32
    %177 = vector.broadcast %cst_94 : f32 to vector<2x32xf32>
    %178 = arith.addf %177, %176 : vector<2x32xf32>
    %179 = arith.divf %177, %178 : vector<2x32xf32>
    %180 = vector.extract_strided_slice %165 {offsets = [0, 32], sizes = [2, 32], strides = [1, 1]} : vector<2x128xf32> to vector<2x32xf32>
    %181 = arith.negf %180 : vector<2x32xf32>
    %182 = math.exp %181 : vector<2x32xf32>
    %cst_95 = arith.constant 1.000000e+00 : f32
    %183 = vector.broadcast %cst_95 : f32 to vector<2x32xf32>
    %184 = arith.addf %183, %182 : vector<2x32xf32>
    %185 = arith.divf %183, %184 : vector<2x32xf32>
    %186 = vector.extract_strided_slice %165 {offsets = [0, 64], sizes = [2, 32], strides = [1, 1]} : vector<2x128xf32> to vector<2x32xf32>
    %187 = math.tanh %186 : vector<2x32xf32>
    %188 = vector.extract_strided_slice %165 {offsets = [0, 96], sizes = [2, 32], strides = [1, 1]} : vector<2x128xf32> to vector<2x32xf32>
    %189 = arith.negf %188 : vector<2x32xf32>
    %190 = math.exp %189 : vector<2x32xf32>
    %cst_96 = arith.constant 1.000000e+00 : f32
    %191 = vector.broadcast %cst_96 : f32 to vector<2x32xf32>
    %192 = arith.addf %191, %190 : vector<2x32xf32>
    %193 = arith.divf %191, %192 : vector<2x32xf32>
    %194 = arith.mulf %185, %173 : vector<2x32xf32>
    %195 = arith.mulf %179, %187 : vector<2x32xf32>
    %196 = arith.addf %194, %195 : vector<2x32xf32>
    %197 = math.tanh %196 : vector<2x32xf32>
    %198 = arith.mulf %193, %197 : vector<2x32xf32>
    %c0_97 = arith.constant 0 : index
    %c0_98 = arith.constant 0 : index
    %199 = vector.load %arg10[%c0_97, %c0_98] : memref<2x32xf32, #tpu.memory_space<vmem>>, vector<2x32xf32>
    %200 = vector.extract_strided_slice %172 {offsets = [0, 0], sizes = [2, 32], strides = [1, 1]} : vector<2x128xf32> to vector<2x32xf32>
    %201 = arith.negf %200 : vector<2x32xf32>
    %202 = math.exp %201 : vector<2x32xf32>
    %cst_99 = arith.constant 1.000000e+00 : f32
    %203 = vector.broadcast %cst_99 : f32 to vector<2x32xf32>
    %204 = arith.addf %203, %202 : vector<2x32xf32>
    %205 = arith.divf %203, %204 : vector<2x32xf32>
    %206 = vector.extract_strided_slice %172 {offsets = [0, 32], sizes = [2, 32], strides = [1, 1]} : vector<2x128xf32> to vector<2x32xf32>
    %207 = arith.negf %206 : vector<2x32xf32>
    %208 = math.exp %207 : vector<2x32xf32>
    %cst_100 = arith.constant 1.000000e+00 : f32
    %209 = vector.broadcast %cst_100 : f32 to vector<2x32xf32>
    %210 = arith.addf %209, %208 : vector<2x32xf32>
    %211 = arith.divf %209, %210 : vector<2x32xf32>
    %212 = vector.extract_strided_slice %172 {offsets = [0, 64], sizes = [2, 32], strides = [1, 1]} : vector<2x128xf32> to vector<2x32xf32>
    %213 = math.tanh %212 : vector<2x32xf32>
    %214 = vector.extract_strided_slice %172 {offsets = [0, 96], sizes = [2, 32], strides = [1, 1]} : vector<2x128xf32> to vector<2x32xf32>
    %215 = arith.negf %214 : vector<2x32xf32>
    %216 = math.exp %215 : vector<2x32xf32>
    %cst_101 = arith.constant 1.000000e+00 : f32
    %217 = vector.broadcast %cst_101 : f32 to vector<2x32xf32>
    %218 = arith.addf %217, %216 : vector<2x32xf32>
    %219 = arith.divf %217, %218 : vector<2x32xf32>
    %220 = arith.mulf %211, %199 : vector<2x32xf32>
    %221 = arith.mulf %205, %213 : vector<2x32xf32>
    %222 = arith.addf %220, %221 : vector<2x32xf32>
    %223 = math.tanh %222 : vector<2x32xf32>
    %224 = arith.mulf %219, %223 : vector<2x32xf32>
    %c0_102 = arith.constant 0 : index
    %c0_103 = arith.constant 0 : index
    %225 = vector.load %arg9[%c0_102, %c0_103] : memref<2x32xf32, #tpu.memory_space<vmem>>, vector<2x32xf32>
    tpu.vector_store %arg9[%c0_102, %c0_103], %196 {strides = array<i32>} : memref<2x32xf32, #tpu.memory_space<vmem>>, vector<2x32xf32>,
    %c0_104 = arith.constant 0 : index
    %c0_105 = arith.constant 0 : index
    %226 = vector.load %arg10[%c0_104, %c0_105] : memref<2x32xf32, #tpu.memory_space<vmem>>, vector<2x32xf32>
    tpu.vector_store %arg10[%c0_104, %c0_105], %222 {strides = array<i32>} : memref<2x32xf32, #tpu.memory_space<vmem>>, vector<2x32xf32>,
    %227 = arith.truncf %198 : vector<2x32xf32> to vector<2x32xbf16>
    %228 = arith.truncf %224 : vector<2x32xf32> to vector<2x32xbf16>
    %c0_106 = arith.constant 0 : index
    %c0_107 = arith.constant 0 : index
    %229 = vector.load %arg7[%c0_106, %c0_107] : memref<2x32xbf16, #tpu.memory_space<vmem>>, vector<2x32xbf16>
    tpu.vector_store %arg7[%c0_106, %c0_107], %227 {strides = array<i32>} : memref<2x32xbf16, #tpu.memory_space<vmem>>, vector<2x32xbf16>,
    %c0_108 = arith.constant 0 : index
    %c0_109 = arith.constant 0 : index
    %230 = vector.load %arg8[%c0_108, %c0_109] : memref<2x32xbf16, #tpu.memory_space<vmem>>, vector<2x32xbf16>
    tpu.vector_store %arg8[%c0_108, %c0_109], %228 {strides = array<i32>} : memref<2x32xbf16, #tpu.memory_space<vmem>>, vector<2x32xbf16>,
    %c2_110 = arith.constant 2 : index
    %c0_111 = arith.constant 0 : index
    %c0_112 = arith.constant 0 : index
    %231 = vector.load %arg5[%c2_110, %c0_111, %c0_112] : memref<4x2x32xbf16, #tpu.memory_space<vmem>>, vector<1x2x32xbf16>
    %232 = vector.shape_cast %231 : vector<1x2x32xbf16> to vector<2x32xbf16>
    %233 = vector.shape_cast %227 : vector<2x32xbf16> to vector<1x2x32xbf16>
    tpu.vector_store %arg5[%c2_110, %c0_111, %c0_112], %233 {strides = array<i32>} : memref<4x2x32xbf16, #tpu.memory_space<vmem>>, vector<1x2x32xbf16>,
    %c1_113 = arith.constant 1 : index
    %c0_114 = arith.constant 0 : index
    %c0_115 = arith.constant 0 : index
    %234 = vector.load %arg6[%c1_113, %c0_114, %c0_115] : memref<4x2x32xbf16, #tpu.memory_space<vmem>>, vector<1x2x32xbf16>
    %235 = vector.shape_cast %234 : vector<1x2x32xbf16> to vector<2x32xbf16>
    %236 = vector.shape_cast %228 : vector<2x32xbf16> to vector<1x2x32xbf16>
    tpu.vector_store %arg6[%c1_113, %c0_114, %c0_115], %236 {strides = array<i32>} : memref<4x2x32xbf16, #tpu.memory_space<vmem>>, vector<1x2x32xbf16>,
    %c3_116 = arith.constant 3 : index
    %c0_117 = arith.constant 0 : index
    %c0_118 = arith.constant 0 : index
    %237 = vector.load %arg1[%c3_116, %c0_117, %c0_118] : memref<4x2x128xbf16, #tpu.memory_space<vmem>>, vector<1x2x128xbf16>
    %238 = vector.shape_cast %237 : vector<1x2x128xbf16> to vector<2x128xbf16>
    %239 = arith.extf %238 : vector<2x128xbf16> to vector<2x128xf32>
    %c0_119 = arith.constant 0 : index
    %c0_120 = arith.constant 0 : index
    %240 = vector.load %arg7[%c0_119, %c0_120] : memref<2x32xbf16, #tpu.memory_space<vmem>>, vector<2x32xbf16>
    %c0_121 = arith.constant 0 : index
    %c0_122 = arith.constant 0 : index
    %241 = vector.load %arg3[%c0_121, %c0_122] : memref<32x128xbf16, #tpu.memory_space<vmem>>, vector<32x128xbf16>
    %cst_123 = arith.constant dense<0.000000e+00> : vector<2x128xf32>
    %242 = tpu.matmul %240, %241, %cst_123 {dimension_numbers = #tpu.dot_dimension_numbers<[1], [0], [0], [1], [0, 0, 1, 1], [], []>} : vector<2x32xbf16>, vector<32x128xbf16>, vector<2x128xf32> -> vector<2x128xf32>
    %243 = arith.addf %239, %242 : vector<2x128xf32>
    %c0_124 = arith.constant 0 : index
    %c0_125 = arith.constant 0 : index
    %c0_126 = arith.constant 0 : index
    %244 = vector.load %arg2[%c0_124, %c0_125, %c0_126] : memref<4x2x128xbf16, #tpu.memory_space<vmem>>, vector<1x2x128xbf16>
    %245 = vector.shape_cast %244 : vector<1x2x128xbf16> to vector<2x128xbf16>
    %246 = arith.extf %245 : vector<2x128xbf16> to vector<2x128xf32>
    %c0_127 = arith.constant 0 : index
    %c0_128 = arith.constant 0 : index
    %247 = vector.load %arg8[%c0_127, %c0_128] : memref<2x32xbf16, #tpu.memory_space<vmem>>, vector<2x32xbf16>
    %c0_129 = arith.constant 0 : index
    %c0_130 = arith.constant 0 : index
    %248 = vector.load %arg4[%c0_129, %c0_130] : memref<32x128xbf16, #tpu.memory_space<vmem>>, vector<32x128xbf16>
    %cst_131 = arith.constant dense<0.000000e+00> : vector<2x128xf32>
    %249 = tpu.matmul %247, %248, %cst_131 {dimension_numbers = #tpu.dot_dimension_numbers<[1], [0], [0], [1], [0, 0, 1, 1], [], []>} : vector<2x32xbf16>, vector<32x128xbf16>, vector<2x128xf32> -> vector<2x128xf32>
    %250 = arith.addf %246, %249 : vector<2x128xf32>
    %c0_132 = arith.constant 0 : index
    %c0_133 = arith.constant 0 : index
    %251 = vector.load %arg9[%c0_132, %c0_133] : memref<2x32xf32, #tpu.memory_space<vmem>>, vector<2x32xf32>
    %252 = vector.extract_strided_slice %243 {offsets = [0, 0], sizes = [2, 32], strides = [1, 1]} : vector<2x128xf32> to vector<2x32xf32>
    %253 = arith.negf %252 : vector<2x32xf32>
    %254 = math.exp %253 : vector<2x32xf32>
    %cst_134 = arith.constant 1.000000e+00 : f32
    %255 = vector.broadcast %cst_134 : f32 to vector<2x32xf32>
    %256 = arith.addf %255, %254 : vector<2x32xf32>
    %257 = arith.divf %255, %256 : vector<2x32xf32>
    %258 = vector.extract_strided_slice %243 {offsets = [0, 32], sizes = [2, 32], strides = [1, 1]} : vector<2x128xf32> to vector<2x32xf32>
    %259 = arith.negf %258 : vector<2x32xf32>
    %260 = math.exp %259 : vector<2x32xf32>
    %cst_135 = arith.constant 1.000000e+00 : f32
    %261 = vector.broadcast %cst_135 : f32 to vector<2x32xf32>
    %262 = arith.addf %261, %260 : vector<2x32xf32>
    %263 = arith.divf %261, %262 : vector<2x32xf32>
    %264 = vector.extract_strided_slice %243 {offsets = [0, 64], sizes = [2, 32], strides = [1, 1]} : vector<2x128xf32> to vector<2x32xf32>
    %265 = math.tanh %264 : vector<2x32xf32>
    %266 = vector.extract_strided_slice %243 {offsets = [0, 96], sizes = [2, 32], strides = [1, 1]} : vector<2x128xf32> to vector<2x32xf32>
    %267 = arith.negf %266 : vector<2x32xf32>
    %268 = math.exp %267 : vector<2x32xf32>
    %cst_136 = arith.constant 1.000000e+00 : f32
    %269 = vector.broadcast %cst_136 : f32 to vector<2x32xf32>
    %270 = arith.addf %269, %268 : vector<2x32xf32>
    %271 = arith.divf %269, %270 : vector<2x32xf32>
    %272 = arith.mulf %263, %251 : vector<2x32xf32>
    %273 = arith.mulf %257, %265 : vector<2x32xf32>
    %274 = arith.addf %272, %273 : vector<2x32xf32>
    %275 = math.tanh %274 : vector<2x32xf32>
    %276 = arith.mulf %271, %275 : vector<2x32xf32>
    %c0_137 = arith.constant 0 : index
    %c0_138 = arith.constant 0 : index
    %277 = vector.load %arg10[%c0_137, %c0_138] : memref<2x32xf32, #tpu.memory_space<vmem>>, vector<2x32xf32>
    %278 = vector.extract_strided_slice %250 {offsets = [0, 0], sizes = [2, 32], strides = [1, 1]} : vector<2x128xf32> to vector<2x32xf32>
    %279 = arith.negf %278 : vector<2x32xf32>
    %280 = math.exp %279 : vector<2x32xf32>
    %cst_139 = arith.constant 1.000000e+00 : f32
    %281 = vector.broadcast %cst_139 : f32 to vector<2x32xf32>
    %282 = arith.addf %281, %280 : vector<2x32xf32>
    %283 = arith.divf %281, %282 : vector<2x32xf32>
    %284 = vector.extract_strided_slice %250 {offsets = [0, 32], sizes = [2, 32], strides = [1, 1]} : vector<2x128xf32> to vector<2x32xf32>
    %285 = arith.negf %284 : vector<2x32xf32>
    %286 = math.exp %285 : vector<2x32xf32>
    %cst_140 = arith.constant 1.000000e+00 : f32
    %287 = vector.broadcast %cst_140 : f32 to vector<2x32xf32>
    %288 = arith.addf %287, %286 : vector<2x32xf32>
    %289 = arith.divf %287, %288 : vector<2x32xf32>
    %290 = vector.extract_strided_slice %250 {offsets = [0, 64], sizes = [2, 32], strides = [1, 1]} : vector<2x128xf32> to vector<2x32xf32>
    %291 = math.tanh %290 : vector<2x32xf32>
    %292 = vector.extract_strided_slice %250 {offsets = [0, 96], sizes = [2, 32], strides = [1, 1]} : vector<2x128xf32> to vector<2x32xf32>
    %293 = arith.negf %292 : vector<2x32xf32>
    %294 = math.exp %293 : vector<2x32xf32>
    %cst_141 = arith.constant 1.000000e+00 : f32
    %295 = vector.broadcast %cst_141 : f32 to vector<2x32xf32>
    %296 = arith.addf %295, %294 : vector<2x32xf32>
    %297 = arith.divf %295, %296 : vector<2x32xf32>
    %298 = arith.mulf %289, %277 : vector<2x32xf32>
    %299 = arith.mulf %283, %291 : vector<2x32xf32>
    %300 = arith.addf %298, %299 : vector<2x32xf32>
    %301 = math.tanh %300 : vector<2x32xf32>
    %302 = arith.mulf %297, %301 : vector<2x32xf32>
    %c0_142 = arith.constant 0 : index
    %c0_143 = arith.constant 0 : index
    %303 = vector.load %arg9[%c0_142, %c0_143] : memref<2x32xf32, #tpu.memory_space<vmem>>, vector<2x32xf32>
    tpu.vector_store %arg9[%c0_142, %c0_143], %274 {strides = array<i32>} : memref<2x32xf32, #tpu.memory_space<vmem>>, vector<2x32xf32>,
    %c0_144 = arith.constant 0 : index
    %c0_145 = arith.constant 0 : index
    %304 = vector.load %arg10[%c0_144, %c0_145] : memref<2x32xf32, #tpu.memory_space<vmem>>, vector<2x32xf32>
    tpu.vector_store %arg10[%c0_144, %c0_145], %300 {strides = array<i32>} : memref<2x32xf32, #tpu.memory_space<vmem>>, vector<2x32xf32>,
    %305 = arith.truncf %276 : vector<2x32xf32> to vector<2x32xbf16>
    %306 = arith.truncf %302 : vector<2x32xf32> to vector<2x32xbf16>
    %c0_146 = arith.constant 0 : index
    %c0_147 = arith.constant 0 : index
    %307 = vector.load %arg7[%c0_146, %c0_147] : memref<2x32xbf16, #tpu.memory_space<vmem>>, vector<2x32xbf16>
    tpu.vector_store %arg7[%c0_146, %c0_147], %305 {strides = array<i32>} : memref<2x32xbf16, #tpu.memory_space<vmem>>, vector<2x32xbf16>,
    %c0_148 = arith.constant 0 : index
    %c0_149 = arith.constant 0 : index
    %308 = vector.load %arg8[%c0_148, %c0_149] : memref<2x32xbf16, #tpu.memory_space<vmem>>, vector<2x32xbf16>
    tpu.vector_store %arg8[%c0_148, %c0_149], %306 {strides = array<i32>} : memref<2x32xbf16, #tpu.memory_space<vmem>>, vector<2x32xbf16>,
    %c3_150 = arith.constant 3 : index
    %c0_151 = arith.constant 0 : index
    %c0_152 = arith.constant 0 : index
    %309 = vector.load %arg5[%c3_150, %c0_151, %c0_152] : memref<4x2x32xbf16, #tpu.memory_space<vmem>>, vector<1x2x32xbf16>
    %310 = vector.shape_cast %309 : vector<1x2x32xbf16> to vector<2x32xbf16>
    %311 = vector.shape_cast %305 : vector<2x32xbf16> to vector<1x2x32xbf16>
    tpu.vector_store %arg5[%c3_150, %c0_151, %c0_152], %311 {strides = array<i32>} : memref<4x2x32xbf16, #tpu.memory_space<vmem>>, vector<1x2x32xbf16>,
    %c0_153 = arith.constant 0 : index
    %c0_154 = arith.constant 0 : index
    %c0_155 = arith.constant 0 : index
    %312 = vector.load %arg6[%c0_153, %c0_154, %c0_155] : memref<4x2x32xbf16, #tpu.memory_space<vmem>>, vector<1x2x32xbf16>
    %313 = vector.shape_cast %312 : vector<1x2x32xbf16> to vector<2x32xbf16>
    %314 = vector.shape_cast %306 : vector<2x32xbf16> to vector<1x2x32xbf16>
    tpu.vector_store %arg6[%c0_153, %c0_154, %c0_155], %314 {strides = array<i32>} : memref<4x2x32xbf16, #tpu.memory_space<vmem>>, vector<1x2x32xbf16>,
    return
  }
  func.func @transform_0(%arg0: i32) -> (i32, i32, i32) {
    %c0_i32 = arith.constant 0 : i32
    %c0_i32_0 = arith.constant 0 : i32
    %c0_i32_1 = arith.constant 0 : i32
    return %arg0, %c0_i32, %c0_i32_0 : i32, i32, i32
  }
  func.func @transform_1(%arg0: i32) -> (i32, i32, i32) {
    %c1_i32 = arith.constant 1 : i32
    %0 = arith.subi %c1_i32, %arg0 : i32
    %c0_i32 = arith.constant 0 : i32
    %c0_i32_0 = arith.constant 0 : i32
    %c0_i32_1 = arith.constant 0 : i32
    return %0, %c0_i32, %c0_i32_0 : i32, i32, i32
  }
  func.func @transform_2(%arg0: i32) -> (i32, i32) {
    %c0_i32 = arith.constant 0 : i32
    %c0_i32_0 = arith.constant 0 : i32
    %c0_i32_1 = arith.constant 0 : i32
    return %c0_i32, %c0_i32_0 : i32, i32
  }
  func.func @transform_3(%arg0: i32) -> (i32, i32) {
    %c0_i32 = arith.constant 0 : i32
    %c0_i32_0 = arith.constant 0 : i32
    %c0_i32_1 = arith.constant 0 : i32
    return %c0_i32, %c0_i32_0 : i32, i32
  }
  func.func @transform_4(%arg0: i32) -> (i32, i32, i32) {
    %c0_i32 = arith.constant 0 : i32
    %c0_i32_0 = arith.constant 0 : i32
    %c0_i32_1 = arith.constant 0 : i32
    return %arg0, %c0_i32, %c0_i32_0 : i32, i32, i32
  }
  func.func @transform_5(%arg0: i32) -> (i32, i32, i32) {
    %c1_i32 = arith.constant 1 : i32
    %0 = arith.subi %c1_i32, %arg0 : i32
    %c0_i32 = arith.constant 0 : i32
    %c0_i32_0 = arith.constant 0 : i32
    %c0_i32_1 = arith.constant 0 : i32
    return %0, %c0_i32, %c0_i32_0 : i32, i32, i32
  }
}

module attributes {stable_mosaic.version = 11 : i64} {
  func.func @_lstm_pool_head_kernel(%arg0: i32, %arg1: memref<4x2x128xbf16, #tpu.memory_space<vmem>>, %arg2: memref<4x2x128xbf16, #tpu.memory_space<vmem>>, %arg3: memref<32x128xbf16, #tpu.memory_space<vmem>>, %arg4: memref<32x128xbf16, #tpu.memory_space<vmem>>, %arg5: memref<2x32xf32, #tpu.memory_space<vmem>>, %arg6: memref<1x1xf32, #tpu.memory_space<vmem>>, %arg7: memref<2x1xf32, #tpu.memory_space<vmem>>, %arg8: memref<2x32xbf16, #tpu.memory_space<vmem>>, %arg9: memref<2x32xbf16, #tpu.memory_space<vmem>>, %arg10: memref<2x32xf32, #tpu.memory_space<vmem>>, %arg11: memref<2x32xf32, #tpu.memory_space<vmem>>, %arg12: memref<2x32xf32, #tpu.memory_space<vmem>>, %arg13: memref<2x32xf32, #tpu.memory_space<vmem>>) attributes {dimension_semantics = [#tpu.dimension_semantics<arbitrary>], iteration_bounds = array<i64: 2>, scalar_prefetch = 0 : i64, scratch_operands = 6 : i64, tpu.core_type = #tpu.core_type<tc>, window_params = [{transform_indices = @transform_0, window_bounds = array<i64: 4, 2, 128>}, {transform_indices = @transform_1, window_bounds = array<i64: 4, 2, 128>}, {pipeline_mode = #tpu.pipeline_mode<synchronous>, transform_indices = @transform_2, window_bounds = array<i64: 32, 128>}, {pipeline_mode = #tpu.pipeline_mode<synchronous>, transform_indices = @transform_3, window_bounds = array<i64: 32, 128>}, {pipeline_mode = #tpu.pipeline_mode<synchronous>, transform_indices = @transform_4, window_bounds = array<i64: 2, 32>}, {pipeline_mode = #tpu.pipeline_mode<synchronous>, transform_indices = @transform_5, window_bounds = array<i64: 1, 1>}, {pipeline_mode = #tpu.pipeline_mode<synchronous>, transform_indices = @transform_6, window_bounds = array<i64: 2, 1>}]} {
    %c0_i32 = arith.constant 0 : i32
    %0 = arith.cmpi eq, %arg0, %c0_i32 : i32
    %1 = arith.extui %0 : i1 to i32
    %c0_i32_0 = arith.constant 0 : i32
    %2 = arith.cmpi ne, %1, %c0_i32_0 : i32
    scf.if %2 {
      %cst_165 = arith.constant 0.000000e+00 : bf16
      %318 = vector.broadcast %cst_165 : bf16 to vector<2x32xbf16>
      %c0_166 = arith.constant 0 : index
      %c0_167 = arith.constant 0 : index
      %319 = vector.load %arg8[%c0_166, %c0_167] : memref<2x32xbf16, #tpu.memory_space<vmem>>, vector<2x32xbf16>
      tpu.vector_store %arg8[%c0_166, %c0_167], %318 {strides = array<i32>} : memref<2x32xbf16, #tpu.memory_space<vmem>>, vector<2x32xbf16>,
      %cst_168 = arith.constant 0.000000e+00 : bf16
      %320 = vector.broadcast %cst_168 : bf16 to vector<2x32xbf16>
      %c0_169 = arith.constant 0 : index
      %c0_170 = arith.constant 0 : index
      %321 = vector.load %arg9[%c0_169, %c0_170] : memref<2x32xbf16, #tpu.memory_space<vmem>>, vector<2x32xbf16>
      tpu.vector_store %arg9[%c0_169, %c0_170], %320 {strides = array<i32>} : memref<2x32xbf16, #tpu.memory_space<vmem>>, vector<2x32xbf16>,
      %cst_171 = arith.constant 0.000000e+00 : f32
      %322 = vector.broadcast %cst_171 : f32 to vector<2x32xf32>
      %c0_172 = arith.constant 0 : index
      %c0_173 = arith.constant 0 : index
      %323 = vector.load %arg10[%c0_172, %c0_173] : memref<2x32xf32, #tpu.memory_space<vmem>>, vector<2x32xf32>
      tpu.vector_store %arg10[%c0_172, %c0_173], %322 {strides = array<i32>} : memref<2x32xf32, #tpu.memory_space<vmem>>, vector<2x32xf32>,
      %cst_174 = arith.constant 0.000000e+00 : f32
      %324 = vector.broadcast %cst_174 : f32 to vector<2x32xf32>
      %c0_175 = arith.constant 0 : index
      %c0_176 = arith.constant 0 : index
      %325 = vector.load %arg11[%c0_175, %c0_176] : memref<2x32xf32, #tpu.memory_space<vmem>>, vector<2x32xf32>
      tpu.vector_store %arg11[%c0_175, %c0_176], %324 {strides = array<i32>} : memref<2x32xf32, #tpu.memory_space<vmem>>, vector<2x32xf32>,
      %cst_177 = arith.constant 0xFF800000 : f32
      %326 = vector.broadcast %cst_177 : f32 to vector<2x32xf32>
      %c0_178 = arith.constant 0 : index
      %c0_179 = arith.constant 0 : index
      %327 = vector.load %arg12[%c0_178, %c0_179] : memref<2x32xf32, #tpu.memory_space<vmem>>, vector<2x32xf32>
      tpu.vector_store %arg12[%c0_178, %c0_179], %326 {strides = array<i32>} : memref<2x32xf32, #tpu.memory_space<vmem>>, vector<2x32xf32>,
      %cst_180 = arith.constant 0xFF800000 : f32
      %328 = vector.broadcast %cst_180 : f32 to vector<2x32xf32>
      %c0_181 = arith.constant 0 : index
      %c0_182 = arith.constant 0 : index
      %329 = vector.load %arg13[%c0_181, %c0_182] : memref<2x32xf32, #tpu.memory_space<vmem>>, vector<2x32xf32>
      tpu.vector_store %arg13[%c0_181, %c0_182], %328 {strides = array<i32>} : memref<2x32xf32, #tpu.memory_space<vmem>>, vector<2x32xf32>,
    } else {
    }
    %c0 = arith.constant 0 : index
    %c0_1 = arith.constant 0 : index
    %c0_2 = arith.constant 0 : index
    %3 = vector.load %arg1[%c0, %c0_1, %c0_2] : memref<4x2x128xbf16, #tpu.memory_space<vmem>>, vector<1x2x128xbf16>
    %4 = vector.shape_cast %3 : vector<1x2x128xbf16> to vector<2x128xbf16>
    %5 = arith.extf %4 : vector<2x128xbf16> to vector<2x128xf32>
    %c0_3 = arith.constant 0 : index
    %c0_4 = arith.constant 0 : index
    %6 = vector.load %arg8[%c0_3, %c0_4] : memref<2x32xbf16, #tpu.memory_space<vmem>>, vector<2x32xbf16>
    %c0_5 = arith.constant 0 : index
    %c0_6 = arith.constant 0 : index
    %7 = vector.load %arg3[%c0_5, %c0_6] : memref<32x128xbf16, #tpu.memory_space<vmem>>, vector<32x128xbf16>
    %cst = arith.constant dense<0.000000e+00> : vector<2x128xf32>
    %8 = tpu.matmul %6, %7, %cst {dimension_numbers = #tpu.dot_dimension_numbers<[1], [0], [0], [1], [0, 0, 1, 1], [], []>} : vector<2x32xbf16>, vector<32x128xbf16>, vector<2x128xf32> -> vector<2x128xf32>
    %9 = arith.addf %5, %8 : vector<2x128xf32>
    %c3 = arith.constant 3 : index
    %c0_7 = arith.constant 0 : index
    %c0_8 = arith.constant 0 : index
    %10 = vector.load %arg2[%c3, %c0_7, %c0_8] : memref<4x2x128xbf16, #tpu.memory_space<vmem>>, vector<1x2x128xbf16>
    %11 = vector.shape_cast %10 : vector<1x2x128xbf16> to vector<2x128xbf16>
    %12 = arith.extf %11 : vector<2x128xbf16> to vector<2x128xf32>
    %c0_9 = arith.constant 0 : index
    %c0_10 = arith.constant 0 : index
    %13 = vector.load %arg9[%c0_9, %c0_10] : memref<2x32xbf16, #tpu.memory_space<vmem>>, vector<2x32xbf16>
    %c0_11 = arith.constant 0 : index
    %c0_12 = arith.constant 0 : index
    %14 = vector.load %arg4[%c0_11, %c0_12] : memref<32x128xbf16, #tpu.memory_space<vmem>>, vector<32x128xbf16>
    %cst_13 = arith.constant dense<0.000000e+00> : vector<2x128xf32>
    %15 = tpu.matmul %13, %14, %cst_13 {dimension_numbers = #tpu.dot_dimension_numbers<[1], [0], [0], [1], [0, 0, 1, 1], [], []>} : vector<2x32xbf16>, vector<32x128xbf16>, vector<2x128xf32> -> vector<2x128xf32>
    %16 = arith.addf %12, %15 : vector<2x128xf32>
    %c0_14 = arith.constant 0 : index
    %c0_15 = arith.constant 0 : index
    %17 = vector.load %arg10[%c0_14, %c0_15] : memref<2x32xf32, #tpu.memory_space<vmem>>, vector<2x32xf32>
    %18 = vector.extract_strided_slice %9 {offsets = [0, 0], sizes = [2, 32], strides = [1, 1]} : vector<2x128xf32> to vector<2x32xf32>
    %19 = arith.negf %18 : vector<2x32xf32>
    %20 = math.exp %19 : vector<2x32xf32>
    %cst_16 = arith.constant 1.000000e+00 : f32
    %21 = vector.broadcast %cst_16 : f32 to vector<2x32xf32>
    %22 = arith.addf %21, %20 : vector<2x32xf32>
    %23 = arith.divf %21, %22 : vector<2x32xf32>
    %24 = vector.extract_strided_slice %9 {offsets = [0, 32], sizes = [2, 32], strides = [1, 1]} : vector<2x128xf32> to vector<2x32xf32>
    %25 = arith.negf %24 : vector<2x32xf32>
    %26 = math.exp %25 : vector<2x32xf32>
    %cst_17 = arith.constant 1.000000e+00 : f32
    %27 = vector.broadcast %cst_17 : f32 to vector<2x32xf32>
    %28 = arith.addf %27, %26 : vector<2x32xf32>
    %29 = arith.divf %27, %28 : vector<2x32xf32>
    %30 = vector.extract_strided_slice %9 {offsets = [0, 64], sizes = [2, 32], strides = [1, 1]} : vector<2x128xf32> to vector<2x32xf32>
    %31 = math.tanh %30 : vector<2x32xf32>
    %32 = vector.extract_strided_slice %9 {offsets = [0, 96], sizes = [2, 32], strides = [1, 1]} : vector<2x128xf32> to vector<2x32xf32>
    %33 = arith.negf %32 : vector<2x32xf32>
    %34 = math.exp %33 : vector<2x32xf32>
    %cst_18 = arith.constant 1.000000e+00 : f32
    %35 = vector.broadcast %cst_18 : f32 to vector<2x32xf32>
    %36 = arith.addf %35, %34 : vector<2x32xf32>
    %37 = arith.divf %35, %36 : vector<2x32xf32>
    %38 = arith.mulf %29, %17 : vector<2x32xf32>
    %39 = arith.mulf %23, %31 : vector<2x32xf32>
    %40 = arith.addf %38, %39 : vector<2x32xf32>
    %41 = math.tanh %40 : vector<2x32xf32>
    %42 = arith.mulf %37, %41 : vector<2x32xf32>
    %c0_19 = arith.constant 0 : index
    %c0_20 = arith.constant 0 : index
    %43 = vector.load %arg11[%c0_19, %c0_20] : memref<2x32xf32, #tpu.memory_space<vmem>>, vector<2x32xf32>
    %44 = vector.extract_strided_slice %16 {offsets = [0, 0], sizes = [2, 32], strides = [1, 1]} : vector<2x128xf32> to vector<2x32xf32>
    %45 = arith.negf %44 : vector<2x32xf32>
    %46 = math.exp %45 : vector<2x32xf32>
    %cst_21 = arith.constant 1.000000e+00 : f32
    %47 = vector.broadcast %cst_21 : f32 to vector<2x32xf32>
    %48 = arith.addf %47, %46 : vector<2x32xf32>
    %49 = arith.divf %47, %48 : vector<2x32xf32>
    %50 = vector.extract_strided_slice %16 {offsets = [0, 32], sizes = [2, 32], strides = [1, 1]} : vector<2x128xf32> to vector<2x32xf32>
    %51 = arith.negf %50 : vector<2x32xf32>
    %52 = math.exp %51 : vector<2x32xf32>
    %cst_22 = arith.constant 1.000000e+00 : f32
    %53 = vector.broadcast %cst_22 : f32 to vector<2x32xf32>
    %54 = arith.addf %53, %52 : vector<2x32xf32>
    %55 = arith.divf %53, %54 : vector<2x32xf32>
    %56 = vector.extract_strided_slice %16 {offsets = [0, 64], sizes = [2, 32], strides = [1, 1]} : vector<2x128xf32> to vector<2x32xf32>
    %57 = math.tanh %56 : vector<2x32xf32>
    %58 = vector.extract_strided_slice %16 {offsets = [0, 96], sizes = [2, 32], strides = [1, 1]} : vector<2x128xf32> to vector<2x32xf32>
    %59 = arith.negf %58 : vector<2x32xf32>
    %60 = math.exp %59 : vector<2x32xf32>
    %cst_23 = arith.constant 1.000000e+00 : f32
    %61 = vector.broadcast %cst_23 : f32 to vector<2x32xf32>
    %62 = arith.addf %61, %60 : vector<2x32xf32>
    %63 = arith.divf %61, %62 : vector<2x32xf32>
    %64 = arith.mulf %55, %43 : vector<2x32xf32>
    %65 = arith.mulf %49, %57 : vector<2x32xf32>
    %66 = arith.addf %64, %65 : vector<2x32xf32>
    %67 = math.tanh %66 : vector<2x32xf32>
    %68 = arith.mulf %63, %67 : vector<2x32xf32>
    %c0_24 = arith.constant 0 : index
    %c0_25 = arith.constant 0 : index
    %69 = vector.load %arg10[%c0_24, %c0_25] : memref<2x32xf32, #tpu.memory_space<vmem>>, vector<2x32xf32>
    tpu.vector_store %arg10[%c0_24, %c0_25], %40 {strides = array<i32>} : memref<2x32xf32, #tpu.memory_space<vmem>>, vector<2x32xf32>,
    %c0_26 = arith.constant 0 : index
    %c0_27 = arith.constant 0 : index
    %70 = vector.load %arg11[%c0_26, %c0_27] : memref<2x32xf32, #tpu.memory_space<vmem>>, vector<2x32xf32>
    tpu.vector_store %arg11[%c0_26, %c0_27], %66 {strides = array<i32>} : memref<2x32xf32, #tpu.memory_space<vmem>>, vector<2x32xf32>,
    %71 = arith.truncf %42 : vector<2x32xf32> to vector<2x32xbf16>
    %72 = arith.truncf %68 : vector<2x32xf32> to vector<2x32xbf16>
    %c0_28 = arith.constant 0 : index
    %c0_29 = arith.constant 0 : index
    %73 = vector.load %arg8[%c0_28, %c0_29] : memref<2x32xbf16, #tpu.memory_space<vmem>>, vector<2x32xbf16>
    tpu.vector_store %arg8[%c0_28, %c0_29], %71 {strides = array<i32>} : memref<2x32xbf16, #tpu.memory_space<vmem>>, vector<2x32xbf16>,
    %c0_30 = arith.constant 0 : index
    %c0_31 = arith.constant 0 : index
    %74 = vector.load %arg9[%c0_30, %c0_31] : memref<2x32xbf16, #tpu.memory_space<vmem>>, vector<2x32xbf16>
    tpu.vector_store %arg9[%c0_30, %c0_31], %72 {strides = array<i32>} : memref<2x32xbf16, #tpu.memory_space<vmem>>, vector<2x32xbf16>,
    %c0_32 = arith.constant 0 : index
    %c0_33 = arith.constant 0 : index
    %75 = vector.load %arg12[%c0_32, %c0_33] : memref<2x32xf32, #tpu.memory_space<vmem>>, vector<2x32xf32>
    %76 = arith.maximumf %75, %42 : vector<2x32xf32>
    %c0_34 = arith.constant 0 : index
    %c0_35 = arith.constant 0 : index
    %77 = vector.load %arg12[%c0_34, %c0_35] : memref<2x32xf32, #tpu.memory_space<vmem>>, vector<2x32xf32>
    tpu.vector_store %arg12[%c0_34, %c0_35], %76 {strides = array<i32>} : memref<2x32xf32, #tpu.memory_space<vmem>>, vector<2x32xf32>,
    %c0_36 = arith.constant 0 : index
    %c0_37 = arith.constant 0 : index
    %78 = vector.load %arg13[%c0_36, %c0_37] : memref<2x32xf32, #tpu.memory_space<vmem>>, vector<2x32xf32>
    %79 = arith.maximumf %78, %68 : vector<2x32xf32>
    %c0_38 = arith.constant 0 : index
    %c0_39 = arith.constant 0 : index
    %80 = vector.load %arg13[%c0_38, %c0_39] : memref<2x32xf32, #tpu.memory_space<vmem>>, vector<2x32xf32>
    tpu.vector_store %arg13[%c0_38, %c0_39], %79 {strides = array<i32>} : memref<2x32xf32, #tpu.memory_space<vmem>>, vector<2x32xf32>,
    %c1 = arith.constant 1 : index
    %c0_40 = arith.constant 0 : index
    %c0_41 = arith.constant 0 : index
    %81 = vector.load %arg1[%c1, %c0_40, %c0_41] : memref<4x2x128xbf16, #tpu.memory_space<vmem>>, vector<1x2x128xbf16>
    %82 = vector.shape_cast %81 : vector<1x2x128xbf16> to vector<2x128xbf16>
    %83 = arith.extf %82 : vector<2x128xbf16> to vector<2x128xf32>
    %c0_42 = arith.constant 0 : index
    %c0_43 = arith.constant 0 : index
    %84 = vector.load %arg8[%c0_42, %c0_43] : memref<2x32xbf16, #tpu.memory_space<vmem>>, vector<2x32xbf16>
    %c0_44 = arith.constant 0 : index
    %c0_45 = arith.constant 0 : index
    %85 = vector.load %arg3[%c0_44, %c0_45] : memref<32x128xbf16, #tpu.memory_space<vmem>>, vector<32x128xbf16>
    %cst_46 = arith.constant dense<0.000000e+00> : vector<2x128xf32>
    %86 = tpu.matmul %84, %85, %cst_46 {dimension_numbers = #tpu.dot_dimension_numbers<[1], [0], [0], [1], [0, 0, 1, 1], [], []>} : vector<2x32xbf16>, vector<32x128xbf16>, vector<2x128xf32> -> vector<2x128xf32>
    %87 = arith.addf %83, %86 : vector<2x128xf32>
    %c2 = arith.constant 2 : index
    %c0_47 = arith.constant 0 : index
    %c0_48 = arith.constant 0 : index
    %88 = vector.load %arg2[%c2, %c0_47, %c0_48] : memref<4x2x128xbf16, #tpu.memory_space<vmem>>, vector<1x2x128xbf16>
    %89 = vector.shape_cast %88 : vector<1x2x128xbf16> to vector<2x128xbf16>
    %90 = arith.extf %89 : vector<2x128xbf16> to vector<2x128xf32>
    %c0_49 = arith.constant 0 : index
    %c0_50 = arith.constant 0 : index
    %91 = vector.load %arg9[%c0_49, %c0_50] : memref<2x32xbf16, #tpu.memory_space<vmem>>, vector<2x32xbf16>
    %c0_51 = arith.constant 0 : index
    %c0_52 = arith.constant 0 : index
    %92 = vector.load %arg4[%c0_51, %c0_52] : memref<32x128xbf16, #tpu.memory_space<vmem>>, vector<32x128xbf16>
    %cst_53 = arith.constant dense<0.000000e+00> : vector<2x128xf32>
    %93 = tpu.matmul %91, %92, %cst_53 {dimension_numbers = #tpu.dot_dimension_numbers<[1], [0], [0], [1], [0, 0, 1, 1], [], []>} : vector<2x32xbf16>, vector<32x128xbf16>, vector<2x128xf32> -> vector<2x128xf32>
    %94 = arith.addf %90, %93 : vector<2x128xf32>
    %c0_54 = arith.constant 0 : index
    %c0_55 = arith.constant 0 : index
    %95 = vector.load %arg10[%c0_54, %c0_55] : memref<2x32xf32, #tpu.memory_space<vmem>>, vector<2x32xf32>
    %96 = vector.extract_strided_slice %87 {offsets = [0, 0], sizes = [2, 32], strides = [1, 1]} : vector<2x128xf32> to vector<2x32xf32>
    %97 = arith.negf %96 : vector<2x32xf32>
    %98 = math.exp %97 : vector<2x32xf32>
    %cst_56 = arith.constant 1.000000e+00 : f32
    %99 = vector.broadcast %cst_56 : f32 to vector<2x32xf32>
    %100 = arith.addf %99, %98 : vector<2x32xf32>
    %101 = arith.divf %99, %100 : vector<2x32xf32>
    %102 = vector.extract_strided_slice %87 {offsets = [0, 32], sizes = [2, 32], strides = [1, 1]} : vector<2x128xf32> to vector<2x32xf32>
    %103 = arith.negf %102 : vector<2x32xf32>
    %104 = math.exp %103 : vector<2x32xf32>
    %cst_57 = arith.constant 1.000000e+00 : f32
    %105 = vector.broadcast %cst_57 : f32 to vector<2x32xf32>
    %106 = arith.addf %105, %104 : vector<2x32xf32>
    %107 = arith.divf %105, %106 : vector<2x32xf32>
    %108 = vector.extract_strided_slice %87 {offsets = [0, 64], sizes = [2, 32], strides = [1, 1]} : vector<2x128xf32> to vector<2x32xf32>
    %109 = math.tanh %108 : vector<2x32xf32>
    %110 = vector.extract_strided_slice %87 {offsets = [0, 96], sizes = [2, 32], strides = [1, 1]} : vector<2x128xf32> to vector<2x32xf32>
    %111 = arith.negf %110 : vector<2x32xf32>
    %112 = math.exp %111 : vector<2x32xf32>
    %cst_58 = arith.constant 1.000000e+00 : f32
    %113 = vector.broadcast %cst_58 : f32 to vector<2x32xf32>
    %114 = arith.addf %113, %112 : vector<2x32xf32>
    %115 = arith.divf %113, %114 : vector<2x32xf32>
    %116 = arith.mulf %107, %95 : vector<2x32xf32>
    %117 = arith.mulf %101, %109 : vector<2x32xf32>
    %118 = arith.addf %116, %117 : vector<2x32xf32>
    %119 = math.tanh %118 : vector<2x32xf32>
    %120 = arith.mulf %115, %119 : vector<2x32xf32>
    %c0_59 = arith.constant 0 : index
    %c0_60 = arith.constant 0 : index
    %121 = vector.load %arg11[%c0_59, %c0_60] : memref<2x32xf32, #tpu.memory_space<vmem>>, vector<2x32xf32>
    %122 = vector.extract_strided_slice %94 {offsets = [0, 0], sizes = [2, 32], strides = [1, 1]} : vector<2x128xf32> to vector<2x32xf32>
    %123 = arith.negf %122 : vector<2x32xf32>
    %124 = math.exp %123 : vector<2x32xf32>
    %cst_61 = arith.constant 1.000000e+00 : f32
    %125 = vector.broadcast %cst_61 : f32 to vector<2x32xf32>
    %126 = arith.addf %125, %124 : vector<2x32xf32>
    %127 = arith.divf %125, %126 : vector<2x32xf32>
    %128 = vector.extract_strided_slice %94 {offsets = [0, 32], sizes = [2, 32], strides = [1, 1]} : vector<2x128xf32> to vector<2x32xf32>
    %129 = arith.negf %128 : vector<2x32xf32>
    %130 = math.exp %129 : vector<2x32xf32>
    %cst_62 = arith.constant 1.000000e+00 : f32
    %131 = vector.broadcast %cst_62 : f32 to vector<2x32xf32>
    %132 = arith.addf %131, %130 : vector<2x32xf32>
    %133 = arith.divf %131, %132 : vector<2x32xf32>
    %134 = vector.extract_strided_slice %94 {offsets = [0, 64], sizes = [2, 32], strides = [1, 1]} : vector<2x128xf32> to vector<2x32xf32>
    %135 = math.tanh %134 : vector<2x32xf32>
    %136 = vector.extract_strided_slice %94 {offsets = [0, 96], sizes = [2, 32], strides = [1, 1]} : vector<2x128xf32> to vector<2x32xf32>
    %137 = arith.negf %136 : vector<2x32xf32>
    %138 = math.exp %137 : vector<2x32xf32>
    %cst_63 = arith.constant 1.000000e+00 : f32
    %139 = vector.broadcast %cst_63 : f32 to vector<2x32xf32>
    %140 = arith.addf %139, %138 : vector<2x32xf32>
    %141 = arith.divf %139, %140 : vector<2x32xf32>
    %142 = arith.mulf %133, %121 : vector<2x32xf32>
    %143 = arith.mulf %127, %135 : vector<2x32xf32>
    %144 = arith.addf %142, %143 : vector<2x32xf32>
    %145 = math.tanh %144 : vector<2x32xf32>
    %146 = arith.mulf %141, %145 : vector<2x32xf32>
    %c0_64 = arith.constant 0 : index
    %c0_65 = arith.constant 0 : index
    %147 = vector.load %arg10[%c0_64, %c0_65] : memref<2x32xf32, #tpu.memory_space<vmem>>, vector<2x32xf32>
    tpu.vector_store %arg10[%c0_64, %c0_65], %118 {strides = array<i32>} : memref<2x32xf32, #tpu.memory_space<vmem>>, vector<2x32xf32>,
    %c0_66 = arith.constant 0 : index
    %c0_67 = arith.constant 0 : index
    %148 = vector.load %arg11[%c0_66, %c0_67] : memref<2x32xf32, #tpu.memory_space<vmem>>, vector<2x32xf32>
    tpu.vector_store %arg11[%c0_66, %c0_67], %144 {strides = array<i32>} : memref<2x32xf32, #tpu.memory_space<vmem>>, vector<2x32xf32>,
    %149 = arith.truncf %120 : vector<2x32xf32> to vector<2x32xbf16>
    %150 = arith.truncf %146 : vector<2x32xf32> to vector<2x32xbf16>
    %c0_68 = arith.constant 0 : index
    %c0_69 = arith.constant 0 : index
    %151 = vector.load %arg8[%c0_68, %c0_69] : memref<2x32xbf16, #tpu.memory_space<vmem>>, vector<2x32xbf16>
    tpu.vector_store %arg8[%c0_68, %c0_69], %149 {strides = array<i32>} : memref<2x32xbf16, #tpu.memory_space<vmem>>, vector<2x32xbf16>,
    %c0_70 = arith.constant 0 : index
    %c0_71 = arith.constant 0 : index
    %152 = vector.load %arg9[%c0_70, %c0_71] : memref<2x32xbf16, #tpu.memory_space<vmem>>, vector<2x32xbf16>
    tpu.vector_store %arg9[%c0_70, %c0_71], %150 {strides = array<i32>} : memref<2x32xbf16, #tpu.memory_space<vmem>>, vector<2x32xbf16>,
    %c0_72 = arith.constant 0 : index
    %c0_73 = arith.constant 0 : index
    %153 = vector.load %arg12[%c0_72, %c0_73] : memref<2x32xf32, #tpu.memory_space<vmem>>, vector<2x32xf32>
    %154 = arith.maximumf %153, %120 : vector<2x32xf32>
    %c0_74 = arith.constant 0 : index
    %c0_75 = arith.constant 0 : index
    %155 = vector.load %arg12[%c0_74, %c0_75] : memref<2x32xf32, #tpu.memory_space<vmem>>, vector<2x32xf32>
    tpu.vector_store %arg12[%c0_74, %c0_75], %154 {strides = array<i32>} : memref<2x32xf32, #tpu.memory_space<vmem>>, vector<2x32xf32>,
    %c0_76 = arith.constant 0 : index
    %c0_77 = arith.constant 0 : index
    %156 = vector.load %arg13[%c0_76, %c0_77] : memref<2x32xf32, #tpu.memory_space<vmem>>, vector<2x32xf32>
    %157 = arith.maximumf %156, %146 : vector<2x32xf32>
    %c0_78 = arith.constant 0 : index
    %c0_79 = arith.constant 0 : index
    %158 = vector.load %arg13[%c0_78, %c0_79] : memref<2x32xf32, #tpu.memory_space<vmem>>, vector<2x32xf32>
    tpu.vector_store %arg13[%c0_78, %c0_79], %157 {strides = array<i32>} : memref<2x32xf32, #tpu.memory_space<vmem>>, vector<2x32xf32>,
    %c2_80 = arith.constant 2 : index
    %c0_81 = arith.constant 0 : index
    %c0_82 = arith.constant 0 : index
    %159 = vector.load %arg1[%c2_80, %c0_81, %c0_82] : memref<4x2x128xbf16, #tpu.memory_space<vmem>>, vector<1x2x128xbf16>
    %160 = vector.shape_cast %159 : vector<1x2x128xbf16> to vector<2x128xbf16>
    %161 = arith.extf %160 : vector<2x128xbf16> to vector<2x128xf32>
    %c0_83 = arith.constant 0 : index
    %c0_84 = arith.constant 0 : index
    %162 = vector.load %arg8[%c0_83, %c0_84] : memref<2x32xbf16, #tpu.memory_space<vmem>>, vector<2x32xbf16>
    %c0_85 = arith.constant 0 : index
    %c0_86 = arith.constant 0 : index
    %163 = vector.load %arg3[%c0_85, %c0_86] : memref<32x128xbf16, #tpu.memory_space<vmem>>, vector<32x128xbf16>
    %cst_87 = arith.constant dense<0.000000e+00> : vector<2x128xf32>
    %164 = tpu.matmul %162, %163, %cst_87 {dimension_numbers = #tpu.dot_dimension_numbers<[1], [0], [0], [1], [0, 0, 1, 1], [], []>} : vector<2x32xbf16>, vector<32x128xbf16>, vector<2x128xf32> -> vector<2x128xf32>
    %165 = arith.addf %161, %164 : vector<2x128xf32>
    %c1_88 = arith.constant 1 : index
    %c0_89 = arith.constant 0 : index
    %c0_90 = arith.constant 0 : index
    %166 = vector.load %arg2[%c1_88, %c0_89, %c0_90] : memref<4x2x128xbf16, #tpu.memory_space<vmem>>, vector<1x2x128xbf16>
    %167 = vector.shape_cast %166 : vector<1x2x128xbf16> to vector<2x128xbf16>
    %168 = arith.extf %167 : vector<2x128xbf16> to vector<2x128xf32>
    %c0_91 = arith.constant 0 : index
    %c0_92 = arith.constant 0 : index
    %169 = vector.load %arg9[%c0_91, %c0_92] : memref<2x32xbf16, #tpu.memory_space<vmem>>, vector<2x32xbf16>
    %c0_93 = arith.constant 0 : index
    %c0_94 = arith.constant 0 : index
    %170 = vector.load %arg4[%c0_93, %c0_94] : memref<32x128xbf16, #tpu.memory_space<vmem>>, vector<32x128xbf16>
    %cst_95 = arith.constant dense<0.000000e+00> : vector<2x128xf32>
    %171 = tpu.matmul %169, %170, %cst_95 {dimension_numbers = #tpu.dot_dimension_numbers<[1], [0], [0], [1], [0, 0, 1, 1], [], []>} : vector<2x32xbf16>, vector<32x128xbf16>, vector<2x128xf32> -> vector<2x128xf32>
    %172 = arith.addf %168, %171 : vector<2x128xf32>
    %c0_96 = arith.constant 0 : index
    %c0_97 = arith.constant 0 : index
    %173 = vector.load %arg10[%c0_96, %c0_97] : memref<2x32xf32, #tpu.memory_space<vmem>>, vector<2x32xf32>
    %174 = vector.extract_strided_slice %165 {offsets = [0, 0], sizes = [2, 32], strides = [1, 1]} : vector<2x128xf32> to vector<2x32xf32>
    %175 = arith.negf %174 : vector<2x32xf32>
    %176 = math.exp %175 : vector<2x32xf32>
    %cst_98 = arith.constant 1.000000e+00 : f32
    %177 = vector.broadcast %cst_98 : f32 to vector<2x32xf32>
    %178 = arith.addf %177, %176 : vector<2x32xf32>
    %179 = arith.divf %177, %178 : vector<2x32xf32>
    %180 = vector.extract_strided_slice %165 {offsets = [0, 32], sizes = [2, 32], strides = [1, 1]} : vector<2x128xf32> to vector<2x32xf32>
    %181 = arith.negf %180 : vector<2x32xf32>
    %182 = math.exp %181 : vector<2x32xf32>
    %cst_99 = arith.constant 1.000000e+00 : f32
    %183 = vector.broadcast %cst_99 : f32 to vector<2x32xf32>
    %184 = arith.addf %183, %182 : vector<2x32xf32>
    %185 = arith.divf %183, %184 : vector<2x32xf32>
    %186 = vector.extract_strided_slice %165 {offsets = [0, 64], sizes = [2, 32], strides = [1, 1]} : vector<2x128xf32> to vector<2x32xf32>
    %187 = math.tanh %186 : vector<2x32xf32>
    %188 = vector.extract_strided_slice %165 {offsets = [0, 96], sizes = [2, 32], strides = [1, 1]} : vector<2x128xf32> to vector<2x32xf32>
    %189 = arith.negf %188 : vector<2x32xf32>
    %190 = math.exp %189 : vector<2x32xf32>
    %cst_100 = arith.constant 1.000000e+00 : f32
    %191 = vector.broadcast %cst_100 : f32 to vector<2x32xf32>
    %192 = arith.addf %191, %190 : vector<2x32xf32>
    %193 = arith.divf %191, %192 : vector<2x32xf32>
    %194 = arith.mulf %185, %173 : vector<2x32xf32>
    %195 = arith.mulf %179, %187 : vector<2x32xf32>
    %196 = arith.addf %194, %195 : vector<2x32xf32>
    %197 = math.tanh %196 : vector<2x32xf32>
    %198 = arith.mulf %193, %197 : vector<2x32xf32>
    %c0_101 = arith.constant 0 : index
    %c0_102 = arith.constant 0 : index
    %199 = vector.load %arg11[%c0_101, %c0_102] : memref<2x32xf32, #tpu.memory_space<vmem>>, vector<2x32xf32>
    %200 = vector.extract_strided_slice %172 {offsets = [0, 0], sizes = [2, 32], strides = [1, 1]} : vector<2x128xf32> to vector<2x32xf32>
    %201 = arith.negf %200 : vector<2x32xf32>
    %202 = math.exp %201 : vector<2x32xf32>
    %cst_103 = arith.constant 1.000000e+00 : f32
    %203 = vector.broadcast %cst_103 : f32 to vector<2x32xf32>
    %204 = arith.addf %203, %202 : vector<2x32xf32>
    %205 = arith.divf %203, %204 : vector<2x32xf32>
    %206 = vector.extract_strided_slice %172 {offsets = [0, 32], sizes = [2, 32], strides = [1, 1]} : vector<2x128xf32> to vector<2x32xf32>
    %207 = arith.negf %206 : vector<2x32xf32>
    %208 = math.exp %207 : vector<2x32xf32>
    %cst_104 = arith.constant 1.000000e+00 : f32
    %209 = vector.broadcast %cst_104 : f32 to vector<2x32xf32>
    %210 = arith.addf %209, %208 : vector<2x32xf32>
    %211 = arith.divf %209, %210 : vector<2x32xf32>
    %212 = vector.extract_strided_slice %172 {offsets = [0, 64], sizes = [2, 32], strides = [1, 1]} : vector<2x128xf32> to vector<2x32xf32>
    %213 = math.tanh %212 : vector<2x32xf32>
    %214 = vector.extract_strided_slice %172 {offsets = [0, 96], sizes = [2, 32], strides = [1, 1]} : vector<2x128xf32> to vector<2x32xf32>
    %215 = arith.negf %214 : vector<2x32xf32>
    %216 = math.exp %215 : vector<2x32xf32>
    %cst_105 = arith.constant 1.000000e+00 : f32
    %217 = vector.broadcast %cst_105 : f32 to vector<2x32xf32>
    %218 = arith.addf %217, %216 : vector<2x32xf32>
    %219 = arith.divf %217, %218 : vector<2x32xf32>
    %220 = arith.mulf %211, %199 : vector<2x32xf32>
    %221 = arith.mulf %205, %213 : vector<2x32xf32>
    %222 = arith.addf %220, %221 : vector<2x32xf32>
    %223 = math.tanh %222 : vector<2x32xf32>
    %224 = arith.mulf %219, %223 : vector<2x32xf32>
    %c0_106 = arith.constant 0 : index
    %c0_107 = arith.constant 0 : index
    %225 = vector.load %arg10[%c0_106, %c0_107] : memref<2x32xf32, #tpu.memory_space<vmem>>, vector<2x32xf32>
    tpu.vector_store %arg10[%c0_106, %c0_107], %196 {strides = array<i32>} : memref<2x32xf32, #tpu.memory_space<vmem>>, vector<2x32xf32>,
    %c0_108 = arith.constant 0 : index
    %c0_109 = arith.constant 0 : index
    %226 = vector.load %arg11[%c0_108, %c0_109] : memref<2x32xf32, #tpu.memory_space<vmem>>, vector<2x32xf32>
    tpu.vector_store %arg11[%c0_108, %c0_109], %222 {strides = array<i32>} : memref<2x32xf32, #tpu.memory_space<vmem>>, vector<2x32xf32>,
    %227 = arith.truncf %198 : vector<2x32xf32> to vector<2x32xbf16>
    %228 = arith.truncf %224 : vector<2x32xf32> to vector<2x32xbf16>
    %c0_110 = arith.constant 0 : index
    %c0_111 = arith.constant 0 : index
    %229 = vector.load %arg8[%c0_110, %c0_111] : memref<2x32xbf16, #tpu.memory_space<vmem>>, vector<2x32xbf16>
    tpu.vector_store %arg8[%c0_110, %c0_111], %227 {strides = array<i32>} : memref<2x32xbf16, #tpu.memory_space<vmem>>, vector<2x32xbf16>,
    %c0_112 = arith.constant 0 : index
    %c0_113 = arith.constant 0 : index
    %230 = vector.load %arg9[%c0_112, %c0_113] : memref<2x32xbf16, #tpu.memory_space<vmem>>, vector<2x32xbf16>
    tpu.vector_store %arg9[%c0_112, %c0_113], %228 {strides = array<i32>} : memref<2x32xbf16, #tpu.memory_space<vmem>>, vector<2x32xbf16>,
    %c0_114 = arith.constant 0 : index
    %c0_115 = arith.constant 0 : index
    %231 = vector.load %arg12[%c0_114, %c0_115] : memref<2x32xf32, #tpu.memory_space<vmem>>, vector<2x32xf32>
    %232 = arith.maximumf %231, %198 : vector<2x32xf32>
    %c0_116 = arith.constant 0 : index
    %c0_117 = arith.constant 0 : index
    %233 = vector.load %arg12[%c0_116, %c0_117] : memref<2x32xf32, #tpu.memory_space<vmem>>, vector<2x32xf32>
    tpu.vector_store %arg12[%c0_116, %c0_117], %232 {strides = array<i32>} : memref<2x32xf32, #tpu.memory_space<vmem>>, vector<2x32xf32>,
    %c0_118 = arith.constant 0 : index
    %c0_119 = arith.constant 0 : index
    %234 = vector.load %arg13[%c0_118, %c0_119] : memref<2x32xf32, #tpu.memory_space<vmem>>, vector<2x32xf32>
    %235 = arith.maximumf %234, %224 : vector<2x32xf32>
    %c0_120 = arith.constant 0 : index
    %c0_121 = arith.constant 0 : index
    %236 = vector.load %arg13[%c0_120, %c0_121] : memref<2x32xf32, #tpu.memory_space<vmem>>, vector<2x32xf32>
    tpu.vector_store %arg13[%c0_120, %c0_121], %235 {strides = array<i32>} : memref<2x32xf32, #tpu.memory_space<vmem>>, vector<2x32xf32>,
    %c3_122 = arith.constant 3 : index
    %c0_123 = arith.constant 0 : index
    %c0_124 = arith.constant 0 : index
    %237 = vector.load %arg1[%c3_122, %c0_123, %c0_124] : memref<4x2x128xbf16, #tpu.memory_space<vmem>>, vector<1x2x128xbf16>
    %238 = vector.shape_cast %237 : vector<1x2x128xbf16> to vector<2x128xbf16>
    %239 = arith.extf %238 : vector<2x128xbf16> to vector<2x128xf32>
    %c0_125 = arith.constant 0 : index
    %c0_126 = arith.constant 0 : index
    %240 = vector.load %arg8[%c0_125, %c0_126] : memref<2x32xbf16, #tpu.memory_space<vmem>>, vector<2x32xbf16>
    %c0_127 = arith.constant 0 : index
    %c0_128 = arith.constant 0 : index
    %241 = vector.load %arg3[%c0_127, %c0_128] : memref<32x128xbf16, #tpu.memory_space<vmem>>, vector<32x128xbf16>
    %cst_129 = arith.constant dense<0.000000e+00> : vector<2x128xf32>
    %242 = tpu.matmul %240, %241, %cst_129 {dimension_numbers = #tpu.dot_dimension_numbers<[1], [0], [0], [1], [0, 0, 1, 1], [], []>} : vector<2x32xbf16>, vector<32x128xbf16>, vector<2x128xf32> -> vector<2x128xf32>
    %243 = arith.addf %239, %242 : vector<2x128xf32>
    %c0_130 = arith.constant 0 : index
    %c0_131 = arith.constant 0 : index
    %c0_132 = arith.constant 0 : index
    %244 = vector.load %arg2[%c0_130, %c0_131, %c0_132] : memref<4x2x128xbf16, #tpu.memory_space<vmem>>, vector<1x2x128xbf16>
    %245 = vector.shape_cast %244 : vector<1x2x128xbf16> to vector<2x128xbf16>
    %246 = arith.extf %245 : vector<2x128xbf16> to vector<2x128xf32>
    %c0_133 = arith.constant 0 : index
    %c0_134 = arith.constant 0 : index
    %247 = vector.load %arg9[%c0_133, %c0_134] : memref<2x32xbf16, #tpu.memory_space<vmem>>, vector<2x32xbf16>
    %c0_135 = arith.constant 0 : index
    %c0_136 = arith.constant 0 : index
    %248 = vector.load %arg4[%c0_135, %c0_136] : memref<32x128xbf16, #tpu.memory_space<vmem>>, vector<32x128xbf16>
    %cst_137 = arith.constant dense<0.000000e+00> : vector<2x128xf32>
    %249 = tpu.matmul %247, %248, %cst_137 {dimension_numbers = #tpu.dot_dimension_numbers<[1], [0], [0], [1], [0, 0, 1, 1], [], []>} : vector<2x32xbf16>, vector<32x128xbf16>, vector<2x128xf32> -> vector<2x128xf32>
    %250 = arith.addf %246, %249 : vector<2x128xf32>
    %c0_138 = arith.constant 0 : index
    %c0_139 = arith.constant 0 : index
    %251 = vector.load %arg10[%c0_138, %c0_139] : memref<2x32xf32, #tpu.memory_space<vmem>>, vector<2x32xf32>
    %252 = vector.extract_strided_slice %243 {offsets = [0, 0], sizes = [2, 32], strides = [1, 1]} : vector<2x128xf32> to vector<2x32xf32>
    %253 = arith.negf %252 : vector<2x32xf32>
    %254 = math.exp %253 : vector<2x32xf32>
    %cst_140 = arith.constant 1.000000e+00 : f32
    %255 = vector.broadcast %cst_140 : f32 to vector<2x32xf32>
    %256 = arith.addf %255, %254 : vector<2x32xf32>
    %257 = arith.divf %255, %256 : vector<2x32xf32>
    %258 = vector.extract_strided_slice %243 {offsets = [0, 32], sizes = [2, 32], strides = [1, 1]} : vector<2x128xf32> to vector<2x32xf32>
    %259 = arith.negf %258 : vector<2x32xf32>
    %260 = math.exp %259 : vector<2x32xf32>
    %cst_141 = arith.constant 1.000000e+00 : f32
    %261 = vector.broadcast %cst_141 : f32 to vector<2x32xf32>
    %262 = arith.addf %261, %260 : vector<2x32xf32>
    %263 = arith.divf %261, %262 : vector<2x32xf32>
    %264 = vector.extract_strided_slice %243 {offsets = [0, 64], sizes = [2, 32], strides = [1, 1]} : vector<2x128xf32> to vector<2x32xf32>
    %265 = math.tanh %264 : vector<2x32xf32>
    %266 = vector.extract_strided_slice %243 {offsets = [0, 96], sizes = [2, 32], strides = [1, 1]} : vector<2x128xf32> to vector<2x32xf32>
    %267 = arith.negf %266 : vector<2x32xf32>
    %268 = math.exp %267 : vector<2x32xf32>
    %cst_142 = arith.constant 1.000000e+00 : f32
    %269 = vector.broadcast %cst_142 : f32 to vector<2x32xf32>
    %270 = arith.addf %269, %268 : vector<2x32xf32>
    %271 = arith.divf %269, %270 : vector<2x32xf32>
    %272 = arith.mulf %263, %251 : vector<2x32xf32>
    %273 = arith.mulf %257, %265 : vector<2x32xf32>
    %274 = arith.addf %272, %273 : vector<2x32xf32>
    %275 = math.tanh %274 : vector<2x32xf32>
    %276 = arith.mulf %271, %275 : vector<2x32xf32>
    %c0_143 = arith.constant 0 : index
    %c0_144 = arith.constant 0 : index
    %277 = vector.load %arg11[%c0_143, %c0_144] : memref<2x32xf32, #tpu.memory_space<vmem>>, vector<2x32xf32>
    %278 = vector.extract_strided_slice %250 {offsets = [0, 0], sizes = [2, 32], strides = [1, 1]} : vector<2x128xf32> to vector<2x32xf32>
    %279 = arith.negf %278 : vector<2x32xf32>
    %280 = math.exp %279 : vector<2x32xf32>
    %cst_145 = arith.constant 1.000000e+00 : f32
    %281 = vector.broadcast %cst_145 : f32 to vector<2x32xf32>
    %282 = arith.addf %281, %280 : vector<2x32xf32>
    %283 = arith.divf %281, %282 : vector<2x32xf32>
    %284 = vector.extract_strided_slice %250 {offsets = [0, 32], sizes = [2, 32], strides = [1, 1]} : vector<2x128xf32> to vector<2x32xf32>
    %285 = arith.negf %284 : vector<2x32xf32>
    %286 = math.exp %285 : vector<2x32xf32>
    %cst_146 = arith.constant 1.000000e+00 : f32
    %287 = vector.broadcast %cst_146 : f32 to vector<2x32xf32>
    %288 = arith.addf %287, %286 : vector<2x32xf32>
    %289 = arith.divf %287, %288 : vector<2x32xf32>
    %290 = vector.extract_strided_slice %250 {offsets = [0, 64], sizes = [2, 32], strides = [1, 1]} : vector<2x128xf32> to vector<2x32xf32>
    %291 = math.tanh %290 : vector<2x32xf32>
    %292 = vector.extract_strided_slice %250 {offsets = [0, 96], sizes = [2, 32], strides = [1, 1]} : vector<2x128xf32> to vector<2x32xf32>
    %293 = arith.negf %292 : vector<2x32xf32>
    %294 = math.exp %293 : vector<2x32xf32>
    %cst_147 = arith.constant 1.000000e+00 : f32
    %295 = vector.broadcast %cst_147 : f32 to vector<2x32xf32>
    %296 = arith.addf %295, %294 : vector<2x32xf32>
    %297 = arith.divf %295, %296 : vector<2x32xf32>
    %298 = arith.mulf %289, %277 : vector<2x32xf32>
    %299 = arith.mulf %283, %291 : vector<2x32xf32>
    %300 = arith.addf %298, %299 : vector<2x32xf32>
    %301 = math.tanh %300 : vector<2x32xf32>
    %302 = arith.mulf %297, %301 : vector<2x32xf32>
    %c0_148 = arith.constant 0 : index
    %c0_149 = arith.constant 0 : index
    %303 = vector.load %arg10[%c0_148, %c0_149] : memref<2x32xf32, #tpu.memory_space<vmem>>, vector<2x32xf32>
    tpu.vector_store %arg10[%c0_148, %c0_149], %274 {strides = array<i32>} : memref<2x32xf32, #tpu.memory_space<vmem>>, vector<2x32xf32>,
    %c0_150 = arith.constant 0 : index
    %c0_151 = arith.constant 0 : index
    %304 = vector.load %arg11[%c0_150, %c0_151] : memref<2x32xf32, #tpu.memory_space<vmem>>, vector<2x32xf32>
    tpu.vector_store %arg11[%c0_150, %c0_151], %300 {strides = array<i32>} : memref<2x32xf32, #tpu.memory_space<vmem>>, vector<2x32xf32>,
    %305 = arith.truncf %276 : vector<2x32xf32> to vector<2x32xbf16>
    %306 = arith.truncf %302 : vector<2x32xf32> to vector<2x32xbf16>
    %c0_152 = arith.constant 0 : index
    %c0_153 = arith.constant 0 : index
    %307 = vector.load %arg8[%c0_152, %c0_153] : memref<2x32xbf16, #tpu.memory_space<vmem>>, vector<2x32xbf16>
    tpu.vector_store %arg8[%c0_152, %c0_153], %305 {strides = array<i32>} : memref<2x32xbf16, #tpu.memory_space<vmem>>, vector<2x32xbf16>,
    %c0_154 = arith.constant 0 : index
    %c0_155 = arith.constant 0 : index
    %308 = vector.load %arg9[%c0_154, %c0_155] : memref<2x32xbf16, #tpu.memory_space<vmem>>, vector<2x32xbf16>
    tpu.vector_store %arg9[%c0_154, %c0_155], %306 {strides = array<i32>} : memref<2x32xbf16, #tpu.memory_space<vmem>>, vector<2x32xbf16>,
    %c0_156 = arith.constant 0 : index
    %c0_157 = arith.constant 0 : index
    %309 = vector.load %arg12[%c0_156, %c0_157] : memref<2x32xf32, #tpu.memory_space<vmem>>, vector<2x32xf32>
    %310 = arith.maximumf %309, %276 : vector<2x32xf32>
    %c0_158 = arith.constant 0 : index
    %c0_159 = arith.constant 0 : index
    %311 = vector.load %arg12[%c0_158, %c0_159] : memref<2x32xf32, #tpu.memory_space<vmem>>, vector<2x32xf32>
    tpu.vector_store %arg12[%c0_158, %c0_159], %310 {strides = array<i32>} : memref<2x32xf32, #tpu.memory_space<vmem>>, vector<2x32xf32>,
    %c0_160 = arith.constant 0 : index
    %c0_161 = arith.constant 0 : index
    %312 = vector.load %arg13[%c0_160, %c0_161] : memref<2x32xf32, #tpu.memory_space<vmem>>, vector<2x32xf32>
    %313 = arith.maximumf %312, %302 : vector<2x32xf32>
    %c0_162 = arith.constant 0 : index
    %c0_163 = arith.constant 0 : index
    %314 = vector.load %arg13[%c0_162, %c0_163] : memref<2x32xf32, #tpu.memory_space<vmem>>, vector<2x32xf32>
    tpu.vector_store %arg13[%c0_162, %c0_163], %313 {strides = array<i32>} : memref<2x32xf32, #tpu.memory_space<vmem>>, vector<2x32xf32>,
    %c1_i32 = arith.constant 1 : i32
    %315 = arith.cmpi eq, %arg0, %c1_i32 : i32
    %316 = arith.extui %315 : i1 to i32
    %c0_i32_164 = arith.constant 0 : i32
    %317 = arith.cmpi ne, %316, %c0_i32_164 : i32
    scf.if %317 {
      %c0_165 = arith.constant 0 : index
      %c0_166 = arith.constant 0 : index
      %318 = vector.load %arg12[%c0_165, %c0_166] : memref<2x32xf32, #tpu.memory_space<vmem>>, vector<2x32xf32>
      %c0_167 = arith.constant 0 : index
      %c0_168 = arith.constant 0 : index
      %319 = vector.load %arg5[%c0_167, %c0_168] : memref<2x32xf32, #tpu.memory_space<vmem>>, vector<1x32xf32>
      %320 = vector.broadcast %319 : vector<1x32xf32> to vector<2x32xf32>
      %321 = arith.mulf %318, %320 : vector<2x32xf32>
      %cst_169 = arith.constant dense<0.000000e+00> : vector<2xf32>
      %322 = vector.multi_reduction <add>, %321, %cst_169 [1] : vector<2x32xf32> to vector<2xf32>
      %323 = vector.shape_cast %322 : vector<2xf32> to vector<2x1xf32>
      %c0_170 = arith.constant 0 : index
      %c0_171 = arith.constant 0 : index
      %324 = vector.load %arg13[%c0_170, %c0_171] : memref<2x32xf32, #tpu.memory_space<vmem>>, vector<2x32xf32>
      %c1_172 = arith.constant 1 : index
      %c0_173 = arith.constant 0 : index
      %325 = vector.load %arg5[%c1_172, %c0_173] : memref<2x32xf32, #tpu.memory_space<vmem>>, vector<1x32xf32>
      %326 = vector.broadcast %325 : vector<1x32xf32> to vector<2x32xf32>
      %327 = arith.mulf %324, %326 : vector<2x32xf32>
      %cst_174 = arith.constant dense<0.000000e+00> : vector<2xf32>
      %328 = vector.multi_reduction <add>, %327, %cst_174 [1] : vector<2x32xf32> to vector<2xf32>
      %329 = vector.shape_cast %328 : vector<2xf32> to vector<2x1xf32>
      %330 = arith.addf %323, %329 : vector<2x1xf32>
      %c0_175 = arith.constant 0 : index
      %c0_176 = arith.constant 0 : index
      %331 = vector.load %arg6[%c0_175, %c0_176] : memref<1x1xf32, #tpu.memory_space<vmem>>, vector<1x1xf32>
      %332 = vector.broadcast %331 : vector<1x1xf32> to vector<2x1xf32>
      %333 = arith.addf %330, %332 : vector<2x1xf32>
      %334 = arith.negf %333 : vector<2x1xf32>
      %335 = math.exp %334 : vector<2x1xf32>
      %cst_177 = arith.constant 1.000000e+00 : f32
      %336 = vector.broadcast %cst_177 : f32 to vector<2x1xf32>
      %337 = arith.addf %336, %335 : vector<2x1xf32>
      %338 = arith.divf %336, %337 : vector<2x1xf32>
      %c0_178 = arith.constant 0 : index
      %c0_179 = arith.constant 0 : index
      %339 = vector.load %arg7[%c0_178, %c0_179] : memref<2x1xf32, #tpu.memory_space<vmem>>, vector<2x1xf32>
      tpu.vector_store %arg7[%c0_178, %c0_179], %338 {strides = array<i32>} : memref<2x1xf32, #tpu.memory_space<vmem>>, vector<2x1xf32>,
    } else {
    }
    return
  }
  func.func @transform_0(%arg0: i32) -> (i32, i32, i32) {
    %c0_i32 = arith.constant 0 : i32
    %c0_i32_0 = arith.constant 0 : i32
    %c0_i32_1 = arith.constant 0 : i32
    return %arg0, %c0_i32, %c0_i32_0 : i32, i32, i32
  }
  func.func @transform_1(%arg0: i32) -> (i32, i32, i32) {
    %c1_i32 = arith.constant 1 : i32
    %0 = arith.subi %c1_i32, %arg0 : i32
    %c0_i32 = arith.constant 0 : i32
    %c0_i32_0 = arith.constant 0 : i32
    %c0_i32_1 = arith.constant 0 : i32
    return %0, %c0_i32, %c0_i32_0 : i32, i32, i32
  }
  func.func @transform_2(%arg0: i32) -> (i32, i32) {
    %c0_i32 = arith.constant 0 : i32
    %c0_i32_0 = arith.constant 0 : i32
    %c0_i32_1 = arith.constant 0 : i32
    return %c0_i32, %c0_i32_0 : i32, i32
  }
  func.func @transform_3(%arg0: i32) -> (i32, i32) {
    %c0_i32 = arith.constant 0 : i32
    %c0_i32_0 = arith.constant 0 : i32
    %c0_i32_1 = arith.constant 0 : i32
    return %c0_i32, %c0_i32_0 : i32, i32
  }
  func.func @transform_4(%arg0: i32) -> (i32, i32) {
    %c0_i32 = arith.constant 0 : i32
    %c0_i32_0 = arith.constant 0 : i32
    %c0_i32_1 = arith.constant 0 : i32
    return %c0_i32, %c0_i32_0 : i32, i32
  }
  func.func @transform_5(%arg0: i32) -> (i32, i32) {
    %c0_i32 = arith.constant 0 : i32
    %c0_i32_0 = arith.constant 0 : i32
    %c0_i32_1 = arith.constant 0 : i32
    return %c0_i32, %c0_i32_0 : i32, i32
  }
  func.func @transform_6(%arg0: i32) -> (i32, i32) {
    %c0_i32 = arith.constant 0 : i32
    %c0_i32_0 = arith.constant 0 : i32
    %c0_i32_1 = arith.constant 0 : i32
    return %c0_i32, %c0_i32_0 : i32, i32
  }
}

</mosaic_0001>

<llo_original>
// kernel: lstm_pooling_classifier_forward.2
$region0: #{lstm_pooling_classifier_forward.2}
  #allocation0 [shape = 'u32[]', space=smem, size = 0x4, offset = 0x4, fixed_abs, tag = 'smem constant byte address 0x4 - core index']
  #allocation1 [shape = 'u32[144,128]{1,0:T(1,128)}', space=vmem, size = 0x12000, scoped, tag = 'internal scratch']
  #allocation2 [shape = 'bf16[2,32]{1,0:T(2,128)(2,1)}', space=vmem, size = 0x200, scoped, tag = 'scratch operand']
  #allocation3 [shape = 'bf16[2,32]{1,0:T(2,128)(2,1)}', space=vmem, size = 0x200, scoped, tag = 'scratch operand']
  #allocation4 [shape = 'f32[2,32]{1,0:T(2,128)}', space=vmem, size = 0x400, scoped, tag = 'scratch operand']
  #allocation5 [shape = 'f32[2,32]{1,0:T(2,128)}', space=vmem, size = 0x400, scoped, tag = 'scratch operand']
  %s0 = inlined_call_operand.vmem [shape: bf16[8,2,128], index: 0, kind: input, shape index: {}]
  %s1 = inlined_call_operand.vmem [shape: bf16[8,2,128], index: 1, kind: input, shape index: {}]
  %s2 = inlined_call_operand.vmem [shape: bf16[32,128], index: 2, kind: input, shape index: {}]
  %s3 = inlined_call_operand.vmem [shape: bf16[32,128], index: 3, kind: input, shape index: {}]
  %s4 = inlined_call_operand.vmem [shape: bf16[8,2,32], index: 4, kind: output, shape index: {0}]
  %s5 = inlined_call_operand.vmem [shape: bf16[8,2,32], index: 5, kind: output, shape index: {1}]
  %6 = xla_tuple %s4, %s5
  %s7 = sld [smem:[#allocation0]]
  $region61: #{lstm_pooling_classifier_forward.2} parent=0
    _
  %s9 = ssub.s32 1, %s7
  %s10 = scalar_select 0, %s9, %s7
  loop: start=0, step=1, limit=4
  $region2: #{lstm_pooling_classifier_forward.2} parent=0 // loop_pre_header
    _
  $region3: #{lstm_pooling_classifier_forward.2} parent=0 // loop_header
    %s12 = sphi 0, %s16
    %p13 = scmp.ge.s32.totalorder %s12, 4
    %s22 = sphi 0, %s24
    %s25 = sphi 0, %s22
    %s26 = sphi 0, %s25
    %s42 = sphi 0, %s26
    %s50 = sphi 0, %s52
    %s53 = sphi 0, %s50
    %s54 = sphi 0, %s53
    %s70 = sphi 0, %s54
    %s74 = sphi 0, %s74
    %s76 = sphi 0, %s74
    %s77 = sphi 0, %s76
    %s91 = sphi 0, %s77
    %s95 = sphi 0, %s95
    %s97 = sphi 0, %s95
    %s98 = sphi 0, %s97
    %s112 = sphi 0, %s98
    %s118 = sphi 0, %s120
    %s121 = sphi 0, %s118
    %s122 = sphi 0, %s121
    %s138 = sphi 0, %s122
    %s146 = sphi 0, %s148
    %s149 = sphi 0, %s146
    %s150 = sphi 0, %s149
    %s166 = sphi 0, %s150
  $region4: #{lstm_pooling_classifier_forward.2} parent=0 // loop_header_branch
    %15 = sbr.rel (%p13) target = $region8
  $region5: #{lstm_pooling_classifier_forward.2} parent=0 // loop_body
    %s17 = ssub.s32 %s12, 1
    %s18 = ssub.s32 %s12, 2
    %s19 = sadd.s32 %s12, 1
    %s20 = ssub.s32 %s12, %s19
    %p21 = scmp.eq.s32.totalorder %s20, 0
    %s23 = sadd.s32 %s22, 1
    %s24 = scalar_select %p21, %s22, %s23
    %p27 = pneg %p21
    %p28 = scmp.eq.s32.totalorder %s12, 1
    %p29 = por %p27, %p28
    %p30 = scmp.ne.s32.totalorder %s22, %s25
    %p31 = scmp.eq.s32.totalorder %s12, 0
    %p32 = por %p30, %p31
    %p33 = scmp.ne.s32.totalorder %s22, %s25
    %p34 = scmp.eq.s32.totalorder %s17, 1
    %p35 = por %p33, %p34
    %p36 = scmp.ne.s32.totalorder %s25, %s26
    %p37 = scmp.eq.s32.totalorder %s17, 0
    %p38 = por %p36, %p37
    %p39 = scmp.ne.s32.totalorder %s25, %s26
    %p40 = scmp.eq.s32.totalorder %s18, 1
    %p41 = por %p39, %p40
    %p43 = scmp.ne.s32.totalorder %s26, %s42
    %p44 = scmp.eq.s32.totalorder %s18, 0
    %p45 = por %p43, %p44
    %s46 = ssub.s32 1, %s12
    %s47 = ssub.s32 1, %s19
    %s48 = ssub.s32 %s46, %s47
    %p49 = scmp.eq.s32.totalorder %s48, 0
    %s51 = sadd.s32 %s50, 1
    %s52 = scalar_select %p49, %s50, %s51
    %p55 = pneg %p49
    %p56 = scmp.eq.s32.totalorder %s12, 1
    %p57 = por %p55, %p56
    %p58 = scmp.ne.s32.totalorder %s50, %s53
    %p59 = scmp.eq.s32.totalorder %s12, 0
    %p60 = por %p58, %p59
    %p61 = scmp.ne.s32.totalorder %s50, %s53
    %p62 = scmp.eq.s32.totalorder %s17, 1
    %p63 = por %p61, %p62
    %p64 = scmp.ne.s32.totalorder %s53, %s54
    %p65 = scmp.eq.s32.totalorder %s17, 0
    %p66 = por %p64, %p65
    %p67 = scmp.ne.s32.totalorder %s53, %s54
    %p68 = scmp.eq.s32.totalorder %s18, 1
    %p69 = por %p67, %p68
    %p71 = scmp.ne.s32.totalorder %s54, %s70
    %p72 = scmp.eq.s32.totalorder %s18, 0
    %p73 = por %p71, %p72
    %s75 = sadd.s32 %s74, 1
    %p78 = scmp.eq.s32.totalorder %s12, 1
    %p79 = scmp.ne.s32.totalorder %s74, %s76
    %p80 = scmp.eq.s32.totalorder %s12, 0
    %p81 = por %p79, %p80
    %p82 = scmp.ne.s32.totalorder %s74, %s76
    %p83 = scmp.eq.s32.totalorder %s17, 1
    %p84 = por %p82, %p83
    %p85 = scmp.ne.s32.totalorder %s76, %s77
    %p86 = scmp.eq.s32.totalorder %s17, 0
    %p87 = por %p85, %p86
    %p88 = scmp.ne.s32.totalorder %s76, %s77
    %p89 = scmp.eq.s32.totalorder %s18, 1
    %p90 = por %p88, %p89
    %p92 = scmp.ne.s32.totalorder %s77, %s91
    %p93 = scmp.eq.s32.totalorder %s18, 0
    %p94 = por %p92, %p93
    %s96 = sadd.s32 %s95, 1
    %p99 = scmp.eq.s32.totalorder %s12, 1
    %p100 = scmp.ne.s32.totalorder %s95, %s97
    %p101 = scmp.eq.s32.totalorder %s12, 0
    %p102 = por %p100, %p101
    %p103 = scmp.ne.s32.totalorder %s95, %s97
    %p104 = scmp.eq.s32.totalorder %s17, 1
    %p105 = por %p103, %p104
    %p106 = scmp.ne.s32.totalorder %s97, %s98
    %p107 = scmp.eq.s32.totalorder %s17, 0
    %p108 = por %p106, %p107
    %p109 = scmp.ne.s32.totalorder %s97, %s98
    %p110 = scmp.eq.s32.totalorder %s18, 1
    %p111 = por %p109, %p110
    %p113 = scmp.ne.s32.totalorder %s98, %s112
    %p114 = scmp.eq.s32.totalorder %s18, 0
    %p115 = por %p113, %p114
    %s116 = ssub.s32 %s12, %s19
    %p117 = scmp.eq.s32.totalorder %s116, 0
    %s119 = sadd.s32 %s118, 1
    %s120 = scalar_select %p117, %s118, %s119
    %p123 = pneg %p117
    %p124 = scmp.eq.s32.totalorder %s12, 1
    %p125 = por %p123, %p124
    %p126 = scmp.ne.s32.totalorder %s118, %s121
    %p127 = scmp.eq.s32.totalorder %s12, 0
    %p128 = por %p126, %p127
    %p129 = scmp.ne.s32.totalorder %s118, %s121
    %p130 = scmp.eq.s32.totalorder %s17, 1
    %p131 = por %p129, %p130
    %p132 = scmp.ne.s32.totalorder %s121, %s122
    %p133 = scmp.eq.s32.totalorder %s17, 0
    %p134 = por %p132, %p133
    %p135 = scmp.ne.s32.totalorder %s121, %s122
    %p136 = scmp.eq.s32.totalorder %s18, 1
    %p137 = por %p135, %p136
    %p139 = scmp.ne.s32.totalorder %s122, %s138
    %p140 = scmp.eq.s32.totalorder %s18, 0
    %p141 = por %p139, %p140
    %s142 = ssub.s32 1, %s12
    %s143 = ssub.s32 1, %s19
    %s144 = ssub.s32 %s142, %s143
    %p145 = scmp.eq.s32.totalorder %s144, 0
    %s147 = sadd.s32 %s146, 1
    %s148 = scalar_select %p145, %s146, %s147
    %p151 = pneg %p145
    %p152 = scmp.eq.s32.totalorder %s12, 1
    %p153 = por %p151, %p152
    %p154 = scmp.ne.s32.totalorder %s146, %s149
    %p155 = scmp.eq.s32.totalorder %s12, 0
    %p156 = por %p154, %p155
    %p157 = scmp.ne.s32.totalorder %s146, %s149
    %p158 = scmp.eq.s32.totalorder %s17, 1
    %p159 = por %p157, %p158
    %p160 = scmp.ne.s32.totalorder %s149, %s150
    %p161 = scmp.eq.s32.totalorder %s17, 0
    %p162 = por %p160, %p161
    %p163 = scmp.ne.s32.totalorder %s149, %s150
    %p164 = scmp.eq.s32.totalorder %s18, 1
    %p165 = por %p163, %p164
    %p167 = scmp.ne.s32.totalorder %s150, %s166
    %p168 = scmp.eq.s32.totalorder %s18, 0
    %p169 = por %p167, %p168
    %p170 = scmp.le.s32.totalorder 1, %s12
    %p171 = scmp.lt.s32.totalorder %s12, 3
    %p172 = pnand %p170, %p171
    %p173 = pneg %p172
    // Predicated region
    $region9: #{lstm_pooling_classifier_forward.2} parent=5 // pred_check
      _
    $region10: #{lstm_pooling_classifier_forward.2} parent=5 // pred_check_branch
      %175 = sbr.rel (%p172) target = $region12
    $region11: #{lstm_pooling_classifier_forward.2} parent=5 // pred_region
      %s176 = ssub.s32 %s12, 1
      // Predicated region
      $region13: #{lstm_pooling_classifier_forward.2} parent=11 // pred_check
        %p177 = pneg %p87
      $region14: #{lstm_pooling_classifier_forward.2} parent=11 // pred_check_branch
        %179 = sbr.rel (%p177) target = $region16
      $region15: #{lstm_pooling_classifier_forward.2} parent=11 // pred_region
        _
      $region16: #{lstm_pooling_classifier_forward.2} parent=11 // pred_fallthru
        _
      // Predicated region
      $region17: #{lstm_pooling_classifier_forward.2} parent=11 // pred_check
        %p180 = pneg %p108
      $region18: #{lstm_pooling_classifier_forward.2} parent=11 // pred_check_branch
        %182 = sbr.rel (%p180) target = $region20
      $region19: #{lstm_pooling_classifier_forward.2} parent=11 // pred_region
        _
      $region20: #{lstm_pooling_classifier_forward.2} parent=11 // pred_fallthru
        _
    $region12: #{lstm_pooling_classifier_forward.2} parent=5 // pred_fallthru
      _
    %p183 = scmp.lt.s32.totalorder %s12, 2
    // Predicated region
    $region21: #{lstm_pooling_classifier_forward.2} parent=5 // pred_check
      %p184 = pneg %p183
    $region22: #{lstm_pooling_classifier_forward.2} parent=5 // pred_check_branch
      %186 = sbr.rel (%p184) target = $region24
    $region23: #{lstm_pooling_classifier_forward.2} parent=5 // pred_region
      // Predicated region
      $region25: #{lstm_pooling_classifier_forward.2} parent=23 // pred_check
        %p187 = pneg %p32
      $region26: #{lstm_pooling_classifier_forward.2} parent=23 // pred_check_branch
        %189 = sbr.rel (%p187) target = $region28
      $region27: #{lstm_pooling_classifier_forward.2} parent=23 // pred_region
        %s190 = smul.u32 4, %s12
        %p191 = scmp.lt.s32.totalorder %s190, 7
        %s192 = scalar_select %p191, %s190, 7
        %s193 = scalar_lea.vmem %s0, %s192
        %s194 = smul.u32 4, %s12
      $region28: #{lstm_pooling_classifier_forward.2} parent=23 // pred_fallthru
        _
      // Predicated region
      $region29: #{lstm_pooling_classifier_forward.2} parent=23 // pred_check
        %p195 = pneg %p60
      $region30: #{lstm_pooling_classifier_forward.2} parent=23 // pred_check_branch
        %197 = sbr.rel (%p195) target = $region32
      $region31: #{lstm_pooling_classifier_forward.2} parent=23 // pred_region
        %s198 = ssub.s32 1, %s12
        %s199 = smul.u32 4, %s198
        %p200 = scmp.lt.s32.totalorder %s199, 7
        %s201 = scalar_select %p200, %s199, 7
        %s202 = scalar_lea.vmem %s1, %s201
        %s203 = ssub.s32 1, %s12
        %s204 = smul.u32 4, %s203
      $region32: #{lstm_pooling_classifier_forward.2} parent=23 // pred_fallthru
        _
    $region24: #{lstm_pooling_classifier_forward.2} parent=5 // pred_fallthru
      _
    %p205 = scmp.le.s32.totalorder 1, %s12
    %p206 = scmp.lt.s32.totalorder %s12, 3
    %p207 = pnand %p205, %p206
    %p208 = pneg %p207
    // Predicated region
    $region33: #{lstm_pooling_classifier_forward.2} parent=5 // pred_check
      _
    $region34: #{lstm_pooling_classifier_forward.2} parent=5 // pred_check_branch
      %210 = sbr.rel (%p207) target = $region36
    $region35: #{lstm_pooling_classifier_forward.2} parent=5 // pred_region
      %s211 = ssub.s32 %s12, 1
      %s212 = smul.u32 4, %s17
      %p213 = scmp.lt.s32.totalorder %s212, 7
      %s214 = scalar_select %p213, %s212, 7
      %s215 = scalar_lea.vmem %s0, %s214
      %p216 = pneg %p38
      %p217 = pneg %p35
      %s218 = ssub.s32 1, %s17
      %s219 = smul.u32 4, %s218
      %p220 = scmp.lt.s32.totalorder %s219, 7
      %s221 = scalar_select %p220, %s219, 7
      %s222 = scalar_lea.vmem %s1, %s221
      %p223 = pneg %p66
      %p224 = pneg %p63
      %p225 = pneg %p87
      %p226 = pneg %p84
      %p227 = pneg %p108
      %p228 = pneg %p105
      %p229 = pneg %p134
      %p230 = pneg %p131
      %s231 = smul.u32 4, %s17
      %p232 = scmp.lt.s32.totalorder %s231, 7
      %s233 = scalar_select %p232, %s231, 7
      %s234 = scalar_lea.vmem %s4, %s233
      %p235 = pneg %p162
      %p236 = pneg %p159
      %s237 = ssub.s32 1, %s17
      %s238 = smul.u32 4, %s237
      %p239 = scmp.lt.s32.totalorder %s238, 7
      %s240 = scalar_select %p239, %s238, 7
      %s241 = scalar_lea.vmem %s5, %s240
      %s242 = smul.u32 4, %s17
      %p243 = scmp.lt.s32.totalorder %s242, 7
      %s244 = scalar_select %p243, %s242, 7
      %s245 = scalar_lea.vmem %s0, %s244
      %s246 = smul.u32 4, %s17
      %s247 = ssub.s32 1, %s17
      %s248 = smul.u32 4, %s247
      %p249 = scmp.lt.s32.totalorder %s248, 7
      %s250 = scalar_select %p249, %s248, 7
      %s251 = scalar_lea.vmem %s1, %s250
      %s252 = ssub.s32 1, %s17
      %s253 = smul.u32 4, %s252
      %s254 = smul.u32 4, %s17
      %p255 = scmp.lt.s32.totalorder %s254, 7
      %s256 = scalar_select %p255, %s254, 7
      %s257 = scalar_lea.vmem %s4, %s256
      %s258 = smul.u32 4, %s17
      %s259 = ssub.s32 1, %s17
      %s260 = smul.u32 4, %s259
      %p261 = scmp.lt.s32.totalorder %s260, 7
      %s262 = scalar_select %p261, %s260, 7
      %s263 = scalar_lea.vmem %s5, %s262
      %s264 = ssub.s32 1, %s17
      %s265 = smul.u32 4, %s264
      %p267 = scmp.eq.s32.totalorder %s17, 0
      // Predicated region
      $region37: #{lstm_pooling_classifier_forward.2} parent=35 // pred_check
        %p268 = pneg %p267
      $region38: #{lstm_pooling_classifier_forward.2} parent=35 // pred_check_branch
        %270 = sbr.rel (%p268) target = $region40
      $region39: #{lstm_pooling_classifier_forward.2} parent=35 // pred_region
        %vm271 = vcmask 253952
        %272 = vst.msk [vmem:[#allocation2] sm:$0x1] %vm271, 0
        %273 = vst.msk [vmem:[#allocation3] sm:$0x1] %vm271, 0
        %vm274 = vcmask 254976
        %275 = vst.msk [vmem:[#allocation4] sm:$0x3] %vm274, 0.0
        %276 = vst.msk [vmem:[#allocation5] sm:$0x3] %vm274, 0.0
      $region40: #{lstm_pooling_classifier_forward.2} parent=35 // pred_fallthru
        _
      %v277 = vld [vmem:[%s245] sm:$0x1]
      %v278 = vunpack.c.l.bf16 %v277
      %v279 = vld [vmem:[#allocation2] sm:$0x1]
      %v280 = vld [vmem:[%s2] sm:$0xf]
      %v281 = vld [vmem:[%s2 + $0x4] sm:$0xf]
      %v282 = vld [vmem:[%s2 + $0x8] sm:$0xf]
      %v283 = vld [vmem:[%s2 + $0xc] sm:$0xf]
      %v288 = vunpack.c.l.b16 %v280
      %v289 = vunpack.c.l.b16 %v281
      %v290 = vunpack.c.l.b16 %v282
      %v291 = vunpack.c.l.b16 %v283
      %v292 = vpack.c.b16 %v289, %v288
      %v293 = vpack.c.b16 %v291, %v290
      %vm296 = vcmask 261120
      %v298 = vsel %vm296, %v279, 0
      %300 = vmatprep.subr.bf16.mxu0 0
      %301 = vmatpush1.bf16.msra.mxu0 %v292
      %302 = vmatprep.subr.bf16.mxu0 0
      %303 = vmatpush1.bf16.msra.mxu0 %v293
      %304 = vmatprep.subr.bf16.mxu0 0
      %305 = vmatpush1.bf16.msra.mxu0 0
      %306 = vmatprep.subr.bf16.mxu0 0
      %307 = vmatpush1.bf16.msra.mxu0 0
      %308 = vmatprep.subr.bf16.mxu0 0
      %309 = vmatpush1.bf16.msra.mxu0 0
      %310 = vmatprep.subr.bf16.mxu0 0
      %311 = vmatpush1.bf16.msra.mxu0 0
      %312 = vmatprep.subr.bf16.mxu0 0
      %313 = vmatpush1.bf16.msra.mxu0 0
      %314 = vmatprep.subr.bf16.mxu0 0
      %315 = vmatpush1.bf16.msra.mxu0 0
      %316 = vmatprep.subr.bf16.mxu0 0
      %317 = vmatpush1.bf16.msra.mxu0 0
      %318 = vmatprep.subr.bf16.mxu0 0
      %319 = vmatpush1.bf16.msra.mxu0 0
      %320 = vmatprep.subr.bf16.mxu0 0
      %321 = vmatpush1.bf16.msra.mxu0 0
      %322 = vmatprep.subr.bf16.mxu0 0
      %323 = vmatpush1.bf16.msra.mxu0 0
      %324 = vmatprep.subr.bf16.mxu0 0
      %325 = vmatpush1.bf16.msra.mxu0 0
      %326 = vmatprep.subr.bf16.mxu0 0
      %327 = vmatpush1.bf16.msra.mxu0 0
      %328 = vmatprep.subr.bf16.mxu0 0
      %329 = vmatpush1.bf16.msra.mxu0 0
      %330 = vmatprep.subr.bf16.mxu0 0
      %331 = vmatpush1.bf16.msra.mxu0 0
      %332 = vmatprep.mubr.bf16.mxu0 0
      %333 = vmatmul.mubr.bf16.gmra.mrb[0].mxu0 %v298
      %v334 = vpop.f32.mrb[0].mxu0
      %v335 = vadd.f32 0.0, %v334
      %v336 = vpop.f32.mrb[0].mxu0
      %v337 = vpop.f32.mrb[0].mxu0
      %v338 = vpop.f32.mrb[0].mxu0
      %339 = vdwg.mxu0
      %v340 = vadd.f32 %v278, %v335
      %s341 = scalar_lea.vmem %s251, 3
      %v342 = vld [vmem:[%s341] sm:$0x1]
      %v343 = vunpack.c.l.bf16 %v342
      %v344 = vld [vmem:[#allocation3] sm:$0x1]
      %v345 = vld [vmem:[%s3] sm:$0xf]
      %v346 = vld [vmem:[%s3 + $0x4] sm:$0xf]
      %v347 = vld [vmem:[%s3 + $0x8] sm:$0xf]
      %v348 = vld [vmem:[%s3 + $0xc] sm:$0xf]
      %v353 = vunpack.c.l.b16 %v345
      %v354 = vunpack.c.l.b16 %v346
      %v355 = vunpack.c.l.b16 %v347
      %v356 = vunpack.c.l.b16 %v348
      %v357 = vpack.c.b16 %v354, %v353
      %v358 = vpack.c.b16 %v356, %v355
      %v362 = vsel %vm296, %v344, 0
      %364 = vmatprep.subr.bf16.mxu0 0
      %365 = vmatpush1.bf16.msra.mxu0 %v357
      %366 = vmatprep.subr.bf16.mxu0 0
      %367 = vmatpush1.bf16.msra.mxu0 %v358
      %368 = vmatprep.subr.bf16.mxu0 0
      %369 = vmatpush1.bf16.msra.mxu0 0
      %370 = vmatprep.subr.bf16.mxu0 0
      %371 = vmatpush1.bf16.msra.mxu0 0
      %372 = vmatprep.subr.bf16.mxu0 0
      %373 = vmatpush1.bf16.msra.mxu0 0
      %374 = vmatprep.subr.bf16.mxu0 0
      %375 = vmatpush1.bf16.msra.mxu0 0
      %376 = vmatprep.subr.bf16.mxu0 0
      %377 = vmatpush1.bf16.msra.mxu0 0
      %378 = vmatprep.subr.bf16.mxu0 0
      %379 = vmatpush1.bf16.msra.mxu0 0
      %380 = vmatprep.subr.bf16.mxu0 0
      %381 = vmatpush1.bf16.msra.mxu0 0
      %382 = vmatprep.subr.bf16.mxu0 0
      %383 = vmatpush1.bf16.msra.mxu0 0
      %384 = vmatprep.subr.bf16.mxu0 0
      %385 = vmatpush1.bf16.msra.mxu0 0
      %386 = vmatprep.subr.bf16.mxu0 0
      %387 = vmatpush1.bf16.msra.mxu0 0
      %388 = vmatprep.subr.bf16.mxu0 0
      %389 = vmatpush1.bf16.msra.mxu0 0
      %390 = vmatprep.subr.bf16.mxu0 0
      %391 = vmatpush1.bf16.msra.mxu0 0
      %392 = vmatprep.subr.bf16.mxu0 0
      %393 = vmatpush1.bf16.msra.mxu0 0
      %394 = vmatprep.subr.bf16.mxu0 0
      %395 = vmatpush1.bf16.msra.mxu0 0
      %396 = vmatprep.mubr.bf16.mxu0 0
      %397 = vmatmul.mubr.bf16.gmra.mrb[0].mxu0 %v362
      %v398 = vpop.f32.mrb[0].mxu0
      %v399 = vadd.f32 0.0, %v398
      %v400 = vpop.f32.mrb[0].mxu0
      %v401 = vpop.f32.mrb[0].mxu0
      %v402 = vpop.f32.mrb[0].mxu0
      %403 = vdwg.mxu0
      %v404 = vadd.f32 %v343, %v399
      %v405 = vld [vmem:[#allocation4] sm:$0x3]
      %v406 = vxor.u32 %v340, 2147483648
      %v407 = vmul.f32 %v406, 1.442695
      %v408 = vpow.pop %v407
      %v409 = vadd.f32 %v408, 1.0
      %v410 = vrcp.pop %v409
      %v411 = vmul.f32 1.0, %v410
      %v412 = vtanh.pop %v340
      %v415 = vunpack.c.l.s4 1983009808
      %v416 = vunpack.c.0.s8 %v415
      %v417 = vlaneseq
      %v418 = vshrl.u32 %v417, 7
      %v419 = vsub.s32 %v416, %v418
      %v420 = vrot.slane %v405, %v419
      %421 = vrot.lane.b32.xlu0 %v420, 32
      %v422 = vpop.permute.xlu0 %421
      %v424 = vmul.f32 %v411, %v422
      %426 = vrot.lane.b32.xlu0 %v412, 64
      %v427 = vpop.permute.xlu0 %426
      %v429 = vmul.f32 %v411, %v427
      %431 = vrot.lane.b32.xlu0 %v429, 32
      %v432 = vpop.permute.xlu0 %431
      %v434 = vadd.f32 %v424, %v432
      %v435 = vtanh.pop %v434
      %437 = vrot.lane.b32.xlu0 %v435, 64
      %v438 = vpop.permute.xlu0 %437
      %v440 = vmul.f32 %v411, %v438
      %v441 = vld [vmem:[#allocation5] sm:$0x3]
      %v442 = vxor.u32 %v404, 2147483648
      %v443 = vmul.f32 %v442, 1.442695
      %v444 = vpow.pop %v443
      %v445 = vadd.f32 %v444, 1.0
      %v446 = vrcp.pop %v445
      %v447 = vmul.f32 1.0, %v446
      %v448 = vtanh.pop %v404
      %v451 = vunpack.c.l.s4 1983009808
      %v452 = vunpack.c.0.s8 %v451
      %v453 = vlaneseq
      %v454 = vshrl.u32 %v453, 7
      %v455 = vsub.s32 %v452, %v454
      %v456 = vrot.slane %v441, %v455
      %457 = vrot.lane.b32.xlu0 %v456, 32
      %v458 = vpop.permute.xlu0 %457
      %v460 = vmul.f32 %v447, %v458
      %462 = vrot.lane.b32.xlu0 %v448, 64
      %v463 = vpop.permute.xlu0 %462
      %v465 = vmul.f32 %v447, %v463
      %467 = vrot.lane.b32.xlu0 %v465, 32
      %v468 = vpop.permute.xlu0 %467
      %v470 = vadd.f32 %v460, %v468
      %v471 = vtanh.pop %v470
      %473 = vrot.lane.b32.xlu0 %v471, 64
      %v474 = vpop.permute.xlu0 %473
      %v476 = vmul.f32 %v447, %v474
      %v479 = vunpack.c.l.s4 1983009808
      %v480 = vunpack.c.0.s8 %v479
      %v481 = vlaneseq
      %v482 = vshrl.u32 %v481, 7
      %v483 = vsub.s32 %v480, %v482
      %v484 = vrot.slane %v434, %v483
      %485 = vrot.lane.b32.xlu0 %v484, 96
      %v486 = vpop.permute.xlu0 %485
      %vm488 = vcmask 254976
      %489 = vst.msk [vmem:[#allocation4] sm:$0x3] %vm488, %v486
      %v492 = vunpack.c.l.s4 1983009808
      %v493 = vunpack.c.0.s8 %v492
      %v494 = vlaneseq
      %v495 = vshrl.u32 %v494, 7
      %v496 = vsub.s32 %v493, %v495
      %v497 = vrot.slane %v470, %v496
      %498 = vrot.lane.b32.xlu0 %v497, 96
      %v499 = vpop.permute.xlu0 %498
      %501 = vst.msk [vmem:[#allocation5] sm:$0x3] %vm488, %v499
      %v502 = vpack.c.bf16 %v440, %v440
      %v503 = vpack.c.bf16 %v476, %v476
      %v506 = vunpack.c.l.s4 1966171168
      %v507 = vunpack.c.0.s8 %v506
      %v508 = vlaneseq
      %v509 = vshrl.u32 %v508, 7
      %v510 = vsub.s32 %v507, %v509
      %v511 = vrot.slane %v502, %v510
      %v513 = vunpack.c.l.s4 1966171168
      %v514 = vunpack.c.0.s8 %v513
      %v515 = vlaneseq
      %v516 = vshrl.u32 %v515, 7
      %v517 = vsub.s32 %v514, %v516
      %v518 = vrot.slane %v511, %v517
      %519 = vrot.lane.b32.xlu0 %v518, 32
      %v520 = vpop.permute.xlu0 %519
      %vm522 = vcmask 253952
      %523 = vst.msk [vmem:[#allocation2] sm:$0x1] %vm522, %v520
      %v526 = vunpack.c.l.s4 1966171168
      %v527 = vunpack.c.0.s8 %v526
      %v528 = vlaneseq
      %v529 = vshrl.u32 %v528, 7
      %v530 = vsub.s32 %v527, %v529
      %v531 = vrot.slane %v503, %v530
      %v533 = vunpack.c.l.s4 1966171168
      %v534 = vunpack.c.0.s8 %v533
      %v535 = vlaneseq
      %v536 = vshrl.u32 %v535, 7
      %v537 = vsub.s32 %v534, %v536
      %v538 = vrot.slane %v531, %v537
      %539 = vrot.lane.b32.xlu0 %v538, 32
      %v540 = vpop.permute.xlu0 %539
      %542 = vst.msk [vmem:[#allocation3] sm:$0x1] %vm522, %v540
      %543 = vst.msk [vmem:[%s257] sm:$0x1] %vm522, %v520
      %s544 = scalar_lea.vmem %s263, 3
      %545 = vst.msk [vmem:[%s544] sm:$0x1] %vm522, %v540
      %s546 = scalar_lea.vmem %s245, 1
      %v547 = vld [vmem:[%s546] sm:$0x1]
      %v548 = vunpack.c.l.bf16 %v547
      %v549 = vld [vmem:[#allocation2] sm:$0x1]
      %v550 = vld [vmem:[%s2] sm:$0xf]
      %v551 = vld [vmem:[%s2 + $0x4] sm:$0xf]
      %v552 = vld [vmem:[%s2 + $0x8] sm:$0xf]
      %v553 = vld [vmem:[%s2 + $0xc] sm:$0xf]
      %v558 = vunpack.c.l.b16 %v550
      %v559 = vunpack.c.l.b16 %v551
      %v560 = vunpack.c.l.b16 %v552
      %v561 = vunpack.c.l.b16 %v553
      %v562 = vpack.c.b16 %v559, %v558
      %v563 = vpack.c.b16 %v561, %v560
      %v567 = vsel %vm296, %v549, 0
      %569 = vmatprep.subr.bf16.mxu0 0
      %570 = vmatpush1.bf16.msra.mxu0 %v562
      %571 = vmatprep.subr.bf16.mxu0 0
      %572 = vmatpush1.bf16.msra.mxu0 %v563
      %573 = vmatprep.subr.bf16.mxu0 0
      %574 = vmatpush1.bf16.msra.mxu0 0
      %575 = vmatprep.subr.bf16.mxu0 0
      %576 = vmatpush1.bf16.msra.mxu0 0
      %577 = vmatprep.subr.bf16.mxu0 0
      %578 = vmatpush1.bf16.msra.mxu0 0
      %579 = vmatprep.subr.bf16.mxu0 0
      %580 = vmatpush1.bf16.msra.mxu0 0
      %581 = vmatprep.subr.bf16.mxu0 0
      %582 = vmatpush1.bf16.msra.mxu0 0
      %583 = vmatprep.subr.bf16.mxu0 0
      %584 = vmatpush1.bf16.msra.mxu0 0
      %585 = vmatprep.subr.bf16.mxu0 0
      %586 = vmatpush1.bf16.msra.mxu0 0
      %587 = vmatprep.subr.bf16.mxu0 0
      %588 = vmatpush1.bf16.msra.mxu0 0
      %589 = vmatprep.subr.bf16.mxu0 0
      %590 = vmatpush1.bf16.msra.mxu0 0
      %591 = vmatprep.subr.bf16.mxu0 0
      %592 = vmatpush1.bf16.msra.mxu0 0
      %593 = vmatprep.subr.bf16.mxu0 0
      %594 = vmatpush1.bf16.msra.mxu0 0
      %595 = vmatprep.subr.bf16.mxu0 0
      %596 = vmatpush1.bf16.msra.mxu0 0
      %597 = vmatprep.subr.bf16.mxu0 0
      %598 = vmatpush1.bf16.msra.mxu0 0
      %599 = vmatprep.subr.bf16.mxu0 0
      %600 = vmatpush1.bf16.msra.mxu0 0
      %601 = vmatprep.mubr.bf16.mxu0 0
      %602 = vmatmul.mubr.bf16.gmra.mrb[0].mxu0 %v567
      %v603 = vpop.f32.mrb[0].mxu0
      %v604 = vadd.f32 0.0, %v603
      %v605 = vpop.f32.mrb[0].mxu0
      %v606 = vpop.f32.mrb[0].mxu0
      %v607 = vpop.f32.mrb[0].mxu0
      %608 = vdwg.mxu0
      %v609 = vadd.f32 %v548, %v604
      %s610 = scalar_lea.vmem %s251, 2
      %v611 = vld [vmem:[%s610] sm:$0x1]
      %v612 = vunpack.c.l.bf16 %v611
      %v613 = vld [vmem:[#allocation3] sm:$0x1]
      %v614 = vld [vmem:[%s3] sm:$0xf]
      %v615 = vld [vmem:[%s3 + $0x4] sm:$0xf]
      %v616 = vld [vmem:[%s3 + $0x8] sm:$0xf]
      %v617 = vld [vmem:[%s3 + $0xc] sm:$0xf]
      %v622 = vunpack.c.l.b16 %v614
      %v623 = vunpack.c.l.b16 %v615
      %v624 = vunpack.c.l.b16 %v616
      %v625 = vunpack.c.l.b16 %v617
      %v626 = vpack.c.b16 %v623, %v622
      %v627 = vpack.c.b16 %v625, %v624
      %v631 = vsel %vm296, %v613, 0
      %633 = vmatprep.subr.bf16.mxu0 0
      %634 = vmatpush1.bf16.msra.mxu0 %v626
      %635 = vmatprep.subr.bf16.mxu0 0
      %636 = vmatpush1.bf16.msra.mxu0 %v627
      %637 = vmatprep.subr.bf16.mxu0 0
      %638 = vmatpush1.bf16.msra.mxu0 0
      %639 = vmatprep.subr.bf16.mxu0 0
      %640 = vmatpush1.bf16.msra.mxu0 0
      %641 = vmatprep.subr.bf16.mxu0 0
      %642 = vmatpush1.bf16.msra.mxu0 0
      %643 = vmatprep.subr.bf16.mxu0 0
      %644 = vmatpush1.bf16.msra.mxu0 0
      %645 = vmatprep.subr.bf16.mxu0 0
      %646 = vmatpush1.bf16.msra.mxu0 0
      %647 = vmatprep.subr.bf16.mxu0 0
      %648 = vmatpush1.bf16.msra.mxu0 0
      %649 = vmatprep.subr.bf16.mxu0 0
      %650 = vmatpush1.bf16.msra.mxu0 0
      %651 = vmatprep.subr.bf16.mxu0 0
      %652 = vmatpush1.bf16.msra.mxu0 0
      %653 = vmatprep.subr.bf16.mxu0 0
      %654 = vmatpush1.bf16.msra.mxu0 0
      %655 = vmatprep.subr.bf16.mxu0 0
      %656 = vmatpush1.bf16.msra.mxu0 0
      %657 = vmatprep.subr.bf16.mxu0 0
      %658 = vmatpush1.bf16.msra.mxu0 0
      %659 = vmatprep.subr.bf16.mxu0 0
      %660 = vmatpush1.bf16.msra.mxu0 0
      %661 = vmatprep.subr.bf16.mxu0 0
      %662 = vmatpush1.bf16.msra.mxu0 0
      %663 = vmatprep.subr.bf16.mxu0 0
      %664 = vmatpush1.bf16.msra.mxu0 0
      %665 = vmatprep.mubr.bf16.mxu0 0
      %666 = vmatmul.mubr.bf16.gmra.mrb[0].mxu0 %v631
      %v667 = vpop.f32.mrb[0].mxu0
      %v668 = vadd.f32 0.0, %v667
      %v669 = vpop.f32.mrb[0].mxu0
      %v670 = vpop.f32.mrb[0].mxu0
      %v671 = vpop.f32.mrb[0].mxu0
      %672 = vdwg.mxu0
      %v673 = vadd.f32 %v612, %v668
      %v674 = vld [vmem:[#allocation4] sm:$0x3]
      %v675 = vxor.u32 %v609, 2147483648
      %v676 = vmul.f32 %v675, 1.442695
      %v677 = vpow.pop %v676
      %v678 = vadd.f32 %v677, 1.0
      %v679 = vrcp.pop %v678
      %v680 = vmul.f32 1.0, %v679
      %v681 = vtanh.pop %v609
      %v684 = vunpack.c.l.s4 1983009808
      %v685 = vunpack.c.0.s8 %v684
      %v686 = vlaneseq
      %v687 = vshrl.u32 %v686, 7
      %v688 = vsub.s32 %v685, %v687
      %v689 = vrot.slane %v674, %v688
      %690 = vrot.lane.b32.xlu0 %v689, 32
      %v691 = vpop.permute.xlu0 %690
      %v693 = vmul.f32 %v680, %v691
      %695 = vrot.lane.b32.xlu0 %v681, 64
      %v696 = vpop.permute.xlu0 %695
      %v698 = vmul.f32 %v680, %v696
      %700 = vrot.lane.b32.xlu0 %v698, 32
      %v701 = vpop.permute.xlu0 %700
      %v703 = vadd.f32 %v693, %v701
      %v704 = vtanh.pop %v703
      %706 = vrot.lane.b32.xlu0 %v704, 64
      %v707 = vpop.permute.xlu0 %706
      %v709 = vmul.f32 %v680, %v707
      %v710 = vld [vmem:[#allocation5] sm:$0x3]
      %v711 = vxor.u32 %v673, 2147483648
      %v712 = vmul.f32 %v711, 1.442695
      %v713 = vpow.pop %v712
      %v714 = vadd.f32 %v713, 1.0
      %v715 = vrcp.pop %v714
      %v716 = vmul.f32 1.0, %v715
      %v717 = vtanh.pop %v673
      %v720 = vunpack.c.l.s4 1983009808
      %v721 = vunpack.c.0.s8 %v720
      %v722 = vlaneseq
      %v723 = vshrl.u32 %v722, 7
      %v724 = vsub.s32 %v721, %v723
      %v725 = vrot.slane %v710, %v724
      %726 = vrot.lane.b32.xlu0 %v725, 32
      %v727 = vpop.permute.xlu0 %726
      %v729 = vmul.f32 %v716, %v727
      %731 = vrot.lane.b32.xlu0 %v717, 64
      %v732 = vpop.permute.xlu0 %731
      %v734 = vmul.f32 %v716, %v732
      %736 = vrot.lane.b32.xlu0 %v734, 32
      %v737 = vpop.permute.xlu0 %736
      %v739 = vadd.f32 %v729, %v737
      %v740 = vtanh.pop %v739
      %742 = vrot.lane.b32.xlu0 %v740, 64
      %v743 = vpop.permute.xlu0 %742
      %v745 = vmul.f32 %v716, %v743
      %v748 = vunpack.c.l.s4 1983009808
      %v749 = vunpack.c.0.s8 %v748
      %v750 = vlaneseq
      %v751 = vshrl.u32 %v750, 7
      %v752 = vsub.s32 %v749, %v751
      %v753 = vrot.slane %v703, %v752
      %754 = vrot.lane.b32.xlu0 %v753, 96
      %v755 = vpop.permute.xlu0 %754
      %757 = vst.msk [vmem:[#allocation4] sm:$0x3] %vm488, %v755
      %v760 = vunpack.c.l.s4 1983009808
      %v761 = vunpack.c.0.s8 %v760
      %v762 = vlaneseq
      %v763 = vshrl.u32 %v762, 7
      %v764 = vsub.s32 %v761, %v763
      %v765 = vrot.slane %v739, %v764
      %766 = vrot.lane.b32.xlu0 %v765, 96
      %v767 = vpop.permute.xlu0 %766
      %769 = vst.msk [vmem:[#allocation5] sm:$0x3] %vm488, %v767
      %v770 = vpack.c.bf16 %v709, %v709
      %v771 = vpack.c.bf16 %v745, %v745
      %v774 = vunpack.c.l.s4 1966171168
      %v775 = vunpack.c.0.s8 %v774
      %v776 = vlaneseq
      %v777 = vshrl.u32 %v776, 7
      %v778 = vsub.s32 %v775, %v777
      %v779 = vrot.slane %v770, %v778
      %v781 = vunpack.c.l.s4 1966171168
      %v782 = vunpack.c.0.s8 %v781
      %v783 = vlaneseq
      %v784 = vshrl.u32 %v783, 7
      %v785 = vsub.s32 %v782, %v784
      %v786 = vrot.slane %v779, %v785
      %787 = vrot.lane.b32.xlu0 %v786, 32
      %v788 = vpop.permute.xlu0 %787
      %790 = vst.msk [vmem:[#allocation2] sm:$0x1] %vm522, %v788
      %v793 = vunpack.c.l.s4 1966171168
      %v794 = vunpack.c.0.s8 %v793
      %v795 = vlaneseq
      %v796 = vshrl.u32 %v795, 7
      %v797 = vsub.s32 %v794, %v796
      %v798 = vrot.slane %v771, %v797
      %v800 = vunpack.c.l.s4 1966171168
      %v801 = vunpack.c.0.s8 %v800
      %v802 = vlaneseq
      %v803 = vshrl.u32 %v802, 7
      %v804 = vsub.s32 %v801, %v803
      %v805 = vrot.slane %v798, %v804
      %806 = vrot.lane.b32.xlu0 %v805, 32
      %v807 = vpop.permute.xlu0 %806
      %809 = vst.msk [vmem:[#allocation3] sm:$0x1] %vm522, %v807
      %s810 = scalar_lea.vmem %s257, 1
      %811 = vst.msk [vmem:[%s810] sm:$0x1] %vm522, %v788
      %s812 = scalar_lea.vmem %s263, 2
      %813 = vst.msk [vmem:[%s812] sm:$0x1] %vm522, %v807
      %s814 = scalar_lea.vmem %s245, 2
      %v815 = vld [vmem:[%s814] sm:$0x1]
      %v816 = vunpack.c.l.bf16 %v815
      %v817 = vld [vmem:[#allocation2] sm:$0x1]
      %v818 = vld [vmem:[%s2] sm:$0xf]
      %v819 = vld [vmem:[%s2 + $0x4] sm:$0xf]
      %v820 = vld [vmem:[%s2 + $0x8] sm:$0xf]
      %v821 = vld [vmem:[%s2 + $0xc] sm:$0xf]
      %v826 = vunpack.c.l.b16 %v818
      %v827 = vunpack.c.l.b16 %v819
      %v828 = vunpack.c.l.b16 %v820
      %v829 = vunpack.c.l.b16 %v821
      %v830 = vpack.c.b16 %v827, %v826
      %v831 = vpack.c.b16 %v829, %v828
      %v835 = vsel %vm296, %v817, 0
      %837 = vmatprep.subr.bf16.mxu0 0
      %838 = vmatpush1.bf16.msra.mxu0 %v830
      %839 = vmatprep.subr.bf16.mxu0 0
      %840 = vmatpush1.bf16.msra.mxu0 %v831
      %841 = vmatprep.subr.bf16.mxu0 0
      %842 = vmatpush1.bf16.msra.mxu0 0
      %843 = vmatprep.subr.bf16.mxu0 0
      %844 = vmatpush1.bf16.msra.mxu0 0
      %845 = vmatprep.subr.bf16.mxu0 0
      %846 = vmatpush1.bf16.msra.mxu0 0
      %847 = vmatprep.subr.bf16.mxu0 0
      %848 = vmatpush1.bf16.msra.mxu0 0
      %849 = vmatprep.subr.bf16.mxu0 0
      %850 = vmatpush1.bf16.msra.mxu0 0
      %851 = vmatprep.subr.bf16.mxu0 0
      %852 = vmatpush1.bf16.msra.mxu0 0
      %853 = vmatprep.subr.bf16.mxu0 0
      %854 = vmatpush1.bf16.msra.mxu0 0
      %855 = vmatprep.subr.bf16.mxu0 0
      %856 = vmatpush1.bf16.msra.mxu0 0
      %857 = vmatprep.subr.bf16.mxu0 0
      %858 = vmatpush1.bf16.msra.mxu0 0
      %859 = vmatprep.subr.bf16.mxu0 0
      %860 = vmatpush1.bf16.msra.mxu0 0
      %861 = vmatprep.subr.bf16.mxu0 0
      %862 = vmatpush1.bf16.msra.mxu0 0
      %863 = vmatprep.subr.bf16.mxu0 0
      %864 = vmatpush1.bf16.msra.mxu0 0
      %865 = vmatprep.subr.bf16.mxu0 0
      %866 = vmatpush1.bf16.msra.mxu0 0
      %867 = vmatprep.subr.bf16.mxu0 0
      %868 = vmatpush1.bf16.msra.mxu0 0
      %869 = vmatprep.mubr.bf16.mxu0 0
      %870 = vmatmul.mubr.bf16.gmra.mrb[0].mxu0 %v835
      %v871 = vpop.f32.mrb[0].mxu0
      %v872 = vadd.f32 0.0, %v871
      %v873 = vpop.f32.mrb[0].mxu0
      %v874 = vpop.f32.mrb[0].mxu0
      %v875 = vpop.f32.mrb[0].mxu0
      %876 = vdwg.mxu0
      %v877 = vadd.f32 %v816, %v872
      %s878 = scalar_lea.vmem %s251, 1
      %v879 = vld [vmem:[%s878] sm:$0x1]
      %v880 = vunpack.c.l.bf16 %v879
      %v881 = vld [vmem:[#allocation3] sm:$0x1]
      %v882 = vld [vmem:[%s3] sm:$0xf]
      %v883 = vld [vmem:[%s3 + $0x4] sm:$0xf]
      %v884 = vld [vmem:[%s3 + $0x8] sm:$0xf]
      %v885 = vld [vmem:[%s3 + $0xc] sm:$0xf]
      %v890 = vunpack.c.l.b16 %v882
      %v891 = vunpack.c.l.b16 %v883
      %v892 = vunpack.c.l.b16 %v884
      %v893 = vunpack.c.l.b16 %v885
      %v894 = vpack.c.b16 %v891, %v890
      %v895 = vpack.c.b16 %v893, %v892
      %v899 = vsel %vm296, %v881, 0
      %901 = vmatprep.subr.bf16.mxu0 0
      %902 = vmatpush1.bf16.msra.mxu0 %v894
      %903 = vmatprep.subr.bf16.mxu0 0
      %904 = vmatpush1.bf16.msra.mxu0 %v895
      %905 = vmatprep.subr.bf16.mxu0 0
      %906 = vmatpush1.bf16.msra.mxu0 0
      %907 = vmatprep.subr.bf16.mxu0 0
      %908 = vmatpush1.bf16.msra.mxu0 0
      %909 = vmatprep.subr.bf16.mxu0 0
      %910 = vmatpush1.bf16.msra.mxu0 0
      %911 = vmatprep.subr.bf16.mxu0 0
      %912 = vmatpush1.bf16.msra.mxu0 0
      %913 = vmatprep.subr.bf16.mxu0 0
      %914 = vmatpush1.bf16.msra.mxu0 0
      %915 = vmatprep.subr.bf16.mxu0 0
      %916 = vmatpush1.bf16.msra.mxu0 0
      %917 = vmatprep.subr.bf16.mxu0 0
      %918 = vmatpush1.bf16.msra.mxu0 0
      %919 = vmatprep.subr.bf16.mxu0 0
      %920 = vmatpush1.bf16.msra.mxu0 0
      %921 = vmatprep.subr.bf16.mxu0 0
      %922 = vmatpush1.bf16.msra.mxu0 0
      %923 = vmatprep.subr.bf16.mxu0 0
      %924 = vmatpush1.bf16.msra.mxu0 0
      %925 = vmatprep.subr.bf16.mxu0 0
      %926 = vmatpush1.bf16.msra.mxu0 0
      %927 = vmatprep.subr.bf16.mxu0 0
      %928 = vmatpush1.bf16.msra.mxu0 0
      %929 = vmatprep.subr.bf16.mxu0 0
      %930 = vmatpush1.bf16.msra.mxu0 0
      %931 = vmatprep.subr.bf16.mxu0 0
      %932 = vmatpush1.bf16.msra.mxu0 0
      %933 = vmatprep.mubr.bf16.mxu0 0
      %934 = vmatmul.mubr.bf16.gmra.mrb[0].mxu0 %v899
      %v935 = vpop.f32.mrb[0].mxu0
      %v936 = vadd.f32 0.0, %v935
      %v937 = vpop.f32.mrb[0].mxu0
      %v938 = vpop.f32.mrb[0].mxu0
      %v939 = vpop.f32.mrb[0].mxu0
      %940 = vdwg.mxu0
      %v941 = vadd.f32 %v880, %v936
      %v942 = vld [vmem:[#allocation4] sm:$0x3]
      %v943 = vxor.u32 %v877, 2147483648
      %v944 = vmul.f32 %v943, 1.442695
      %v945 = vpow.pop %v944
      %v946 = vadd.f32 %v945, 1.0
      %v947 = vrcp.pop %v946
      %v948 = vmul.f32 1.0, %v947
      %v949 = vtanh.pop %v877
      %v952 = vunpack.c.l.s4 1983009808
      %v953 = vunpack.c.0.s8 %v952
      %v954 = vlaneseq
      %v955 = vshrl.u32 %v954, 7
      %v956 = vsub.s32 %v953, %v955
      %v957 = vrot.slane %v942, %v956
      %958 = vrot.lane.b32.xlu0 %v957, 32
      %v959 = vpop.permute.xlu0 %958
      %v961 = vmul.f32 %v948, %v959
      %963 = vrot.lane.b32.xlu0 %v949, 64
      %v964 = vpop.permute.xlu0 %963
      %v966 = vmul.f32 %v948, %v964
      %968 = vrot.lane.b32.xlu0 %v966, 32
      %v969 = vpop.permute.xlu0 %968
      %v971 = vadd.f32 %v961, %v969
      %v972 = vtanh.pop %v971
      %974 = vrot.lane.b32.xlu0 %v972, 64
      %v975 = vpop.permute.xlu0 %974
      %v977 = vmul.f32 %v948, %v975
      %v978 = vld [vmem:[#allocation5] sm:$0x3]
      %v979 = vxor.u32 %v941, 2147483648
      %v980 = vmul.f32 %v979, 1.442695
      %v981 = vpow.pop %v980
      %v982 = vadd.f32 %v981, 1.0
      %v983 = vrcp.pop %v982
      %v984 = vmul.f32 1.0, %v983
      %v985 = vtanh.pop %v941
      %v988 = vunpack.c.l.s4 1983009808
      %v989 = vunpack.c.0.s8 %v988
      %v990 = vlaneseq
      %v991 = vshrl.u32 %v990, 7
      %v992 = vsub.s32 %v989, %v991
      %v993 = vrot.slane %v978, %v992
      %994 = vrot.lane.b32.xlu0 %v993, 32
      %v995 = vpop.permute.xlu0 %994
      %v997 = vmul.f32 %v984, %v995
      %999 = vrot.lane.b32.xlu0 %v985, 64
      %v1000 = vpop.permute.xlu0 %999
      %v1002 = vmul.f32 %v984, %v1000
      %1004 = vrot.lane.b32.xlu0 %v1002, 32
      %v1005 = vpop.permute.xlu0 %1004
      %v1007 = vadd.f32 %v997, %v1005
      %v1008 = vtanh.pop %v1007
      %1010 = vrot.lane.b32.xlu0 %v1008, 64
      %v1011 = vpop.permute.xlu0 %1010
      %v1013 = vmul.f32 %v984, %v1011
      %v1016 = vunpack.c.l.s4 1983009808
      %v1017 = vunpack.c.0.s8 %v1016
      %v1018 = vlaneseq
      %v1019 = vshrl.u32 %v1018, 7
      %v1020 = vsub.s32 %v1017, %v1019
      %v1021 = vrot.slane %v971, %v1020
      %1022 = vrot.lane.b32.xlu0 %v1021, 96
      %v1023 = vpop.permute.xlu0 %1022
      %1025 = vst.msk [vmem:[#allocation4] sm:$0x3] %vm488, %v1023
      %v1028 = vunpack.c.l.s4 1983009808
      %v1029 = vunpack.c.0.s8 %v1028
      %v1030 = vlaneseq
      %v1031 = vshrl.u32 %v1030, 7
      %v1032 = vsub.s32 %v1029, %v1031
      %v1033 = vrot.slane %v1007, %v1032
      %1034 = vrot.lane.b32.xlu0 %v1033, 96
      %v1035 = vpop.permute.xlu0 %1034
      %1037 = vst.msk [vmem:[#allocation5] sm:$0x3] %vm488, %v1035
      %v1038 = vpack.c.bf16 %v977, %v977
      %v1039 = vpack.c.bf16 %v1013, %v1013
      %v1042 = vunpack.c.l.s4 1966171168
      %v1043 = vunpack.c.0.s8 %v1042
      %v1044 = vlaneseq
      %v1045 = vshrl.u32 %v1044, 7
      %v1046 = vsub.s32 %v1043, %v1045
      %v1047 = vrot.slane %v1038, %v1046
      %v1049 = vunpack.c.l.s4 1966171168
      %v1050 = vunpack.c.0.s8 %v1049
      %v1051 = vlaneseq
      %v1052 = vshrl.u32 %v1051, 7
      %v1053 = vsub.s32 %v1050, %v1052
      %v1054 = vrot.slane %v1047, %v1053
      %1055 = vrot.lane.b32.xlu0 %v1054, 32
      %v1056 = vpop.permute.xlu0 %1055
      %1058 = vst.msk [vmem:[#allocation2] sm:$0x1] %vm522, %v1056
      %v1061 = vunpack.c.l.s4 1966171168
      %v1062 = vunpack.c.0.s8 %v1061
      %v1063 = vlaneseq
      %v1064 = vshrl.u32 %v1063, 7
      %v1065 = vsub.s32 %v1062, %v1064
      %v1066 = vrot.slane %v1039, %v1065
      %v1068 = vunpack.c.l.s4 1966171168
      %v1069 = vunpack.c.0.s8 %v1068
      %v1070 = vlaneseq
      %v1071 = vshrl.u32 %v1070, 7
      %v1072 = vsub.s32 %v1069, %v1071
      %v1073 = vrot.slane %v1066, %v1072
      %1074 = vrot.lane.b32.xlu0 %v1073, 32
      %v1075 = vpop.permute.xlu0 %1074
      %1077 = vst.msk [vmem:[#allocation3] sm:$0x1] %vm522, %v1075
      %s1078 = scalar_lea.vmem %s257, 2
      %1079 = vst.msk [vmem:[%s1078] sm:$0x1] %vm522, %v1056
      %s1080 = scalar_lea.vmem %s263, 1
      %1081 = vst.msk [vmem:[%s1080] sm:$0x1] %vm522, %v1075
      %s1082 = scalar_lea.vmem %s245, 3
      %v1083 = vld [vmem:[%s1082] sm:$0x1]
      %v1084 = vunpack.c.l.bf16 %v1083
      %v1085 = vld [vmem:[#allocation2] sm:$0x1]
      %v1086 = vld [vmem:[%s2] sm:$0xf]
      %v1087 = vld [vmem:[%s2 + $0x4] sm:$0xf]
      %v1088 = vld [vmem:[%s2 + $0x8] sm:$0xf]
      %v1089 = vld [vmem:[%s2 + $0xc] sm:$0xf]
      %v1094 = vunpack.c.l.b16 %v1086
      %v1095 = vunpack.c.l.b16 %v1087
      %v1096 = vunpack.c.l.b16 %v1088
      %v1097 = vunpack.c.l.b16 %v1089
      %v1098 = vpack.c.b16 %v1095, %v1094
      %v1099 = vpack.c.b16 %v1097, %v1096
      %v1103 = vsel %vm296, %v1085, 0
      %1105 = vmatprep.subr.bf16.mxu0 0
      %1106 = vmatpush1.bf16.msra.mxu0 %v1098
      %1107 = vmatprep.subr.bf16.mxu0 0
      %1108 = vmatpush1.bf16.msra.mxu0 %v1099
      %1109 = vmatprep.subr.bf16.mxu0 0
      %1110 = vmatpush1.bf16.msra.mxu0 0
      %1111 = vmatprep.subr.bf16.mxu0 0
      %1112 = vmatpush1.bf16.msra.mxu0 0
      %1113 = vmatprep.subr.bf16.mxu0 0
      %1114 = vmatpush1.bf16.msra.mxu0 0
      %1115 = vmatprep.subr.bf16.mxu0 0
      %1116 = vmatpush1.bf16.msra.mxu0 0
      %1117 = vmatprep.subr.bf16.mxu0 0
      %1118 = vmatpush1.bf16.msra.mxu0 0
      %1119 = vmatprep.subr.bf16.mxu0 0
      %1120 = vmatpush1.bf16.msra.mxu0 0
      %1121 = vmatprep.subr.bf16.mxu0 0
      %1122 = vmatpush1.bf16.msra.mxu0 0
      %1123 = vmatprep.subr.bf16.mxu0 0
      %1124 = vmatpush1.bf16.msra.mxu0 0
      %1125 = vmatprep.subr.bf16.mxu0 0
      %1126 = vmatpush1.bf16.msra.mxu0 0
      %1127 = vmatprep.subr.bf16.mxu0 0
      %1128 = vmatpush1.bf16.msra.mxu0 0
      %1129 = vmatprep.subr.bf16.mxu0 0
      %1130 = vmatpush1.bf16.msra.mxu0 0
      %1131 = vmatprep.subr.bf16.mxu0 0
      %1132 = vmatpush1.bf16.msra.mxu0 0
      %1133 = vmatprep.subr.bf16.mxu0 0
      %1134 = vmatpush1.bf16.msra.mxu0 0
      %1135 = vmatprep.subr.bf16.mxu0 0
      %1136 = vmatpush1.bf16.msra.mxu0 0
      %1137 = vmatprep.mubr.bf16.mxu0 0
      %1138 = vmatmul.mubr.bf16.gmra.mrb[0].mxu0 %v1103
      %v1139 = vpop.f32.mrb[0].mxu0
      %v1140 = vadd.f32 0.0, %v1139
      %v1141 = vpop.f32.mrb[0].mxu0
      %v1142 = vpop.f32.mrb[0].mxu0
      %v1143 = vpop.f32.mrb[0].mxu0
      %1144 = vdwg.mxu0
      %v1145 = vadd.f32 %v1084, %v1140
      %v1146 = vld [vmem:[%s251] sm:$0x1]
      %v1147 = vunpack.c.l.bf16 %v1146
      %v1148 = vld [vmem:[#allocation3] sm:$0x1]
      %v1149 = vld [vmem:[%s3] sm:$0xf]
      %v1150 = vld [vmem:[%s3 + $0x4] sm:$0xf]
      %v1151 = vld [vmem:[%s3 + $0x8] sm:$0xf]
      %v1152 = vld [vmem:[%s3 + $0xc] sm:$0xf]
      %v1157 = vunpack.c.l.b16 %v1149
      %v1158 = vunpack.c.l.b16 %v1150
      %v1159 = vunpack.c.l.b16 %v1151
      %v1160 = vunpack.c.l.b16 %v1152
      %v1161 = vpack.c.b16 %v1158, %v1157
      %v1162 = vpack.c.b16 %v1160, %v1159
      %v1166 = vsel %vm296, %v1148, 0
      %1168 = vmatprep.subr.bf16.mxu0 0
      %1169 = vmatpush1.bf16.msra.mxu0 %v1161
      %1170 = vmatprep.subr.bf16.mxu0 0
      %1171 = vmatpush1.bf16.msra.mxu0 %v1162
      %1172 = vmatprep.subr.bf16.mxu0 0
      %1173 = vmatpush1.bf16.msra.mxu0 0
      %1174 = vmatprep.subr.bf16.mxu0 0
      %1175 = vmatpush1.bf16.msra.mxu0 0
      %1176 = vmatprep.subr.bf16.mxu0 0
      %1177 = vmatpush1.bf16.msra.mxu0 0
      %1178 = vmatprep.subr.bf16.mxu0 0
      %1179 = vmatpush1.bf16.msra.mxu0 0
      %1180 = vmatprep.subr.bf16.mxu0 0
      %1181 = vmatpush1.bf16.msra.mxu0 0
      %1182 = vmatprep.subr.bf16.mxu0 0
      %1183 = vmatpush1.bf16.msra.mxu0 0
      %1184 = vmatprep.subr.bf16.mxu0 0
      %1185 = vmatpush1.bf16.msra.mxu0 0
      %1186 = vmatprep.subr.bf16.mxu0 0
      %1187 = vmatpush1.bf16.msra.mxu0 0
      %1188 = vmatprep.subr.bf16.mxu0 0
      %1189 = vmatpush1.bf16.msra.mxu0 0
      %1190 = vmatprep.subr.bf16.mxu0 0
      %1191 = vmatpush1.bf16.msra.mxu0 0
      %1192 = vmatprep.subr.bf16.mxu0 0
      %1193 = vmatpush1.bf16.msra.mxu0 0
      %1194 = vmatprep.subr.bf16.mxu0 0
      %1195 = vmatpush1.bf16.msra.mxu0 0
      %1196 = vmatprep.subr.bf16.mxu0 0
      %1197 = vmatpush1.bf16.msra.mxu0 0
      %1198 = vmatprep.subr.bf16.mxu0 0
      %1199 = vmatpush1.bf16.msra.mxu0 0
      %1200 = vmatprep.mubr.bf16.mxu0 0
      %1201 = vmatmul.mubr.bf16.gmra.mrb[0].mxu0 %v1166
      %v1202 = vpop.f32.mrb[0].mxu0
      %v1203 = vadd.f32 0.0, %v1202
      %v1204 = vpop.f32.mrb[0].mxu0
      %v1205 = vpop.f32.mrb[0].mxu0
      %v1206 = vpop.f32.mrb[0].mxu0
      %1207 = vdwg.mxu0
      %v1208 = vadd.f32 %v1147, %v1203
      %v1209 = vld [vmem:[#allocation4] sm:$0x3]
      %v1210 = vxor.u32 %v1145, 2147483648
      %v1211 = vmul.f32 %v1210, 1.442695
      %v1212 = vpow.pop %v1211
      %v1213 = vadd.f32 %v1212, 1.0
      %v1214 = vrcp.pop %v1213
      %v1215 = vmul.f32 1.0, %v1214
      %v1216 = vtanh.pop %v1145
      %v1219 = vunpack.c.l.s4 1983009808
      %v1220 = vunpack.c.0.s8 %v1219
      %v1221 = vlaneseq
      %v1222 = vshrl.u32 %v1221, 7
      %v1223 = vsub.s32 %v1220, %v1222
      %v1224 = vrot.slane %v1209, %v1223
      %1225 = vrot.lane.b32.xlu0 %v1224, 32
      %v1226 = vpop.permute.xlu0 %1225
      %v1228 = vmul.f32 %v1215, %v1226
      %1230 = vrot.lane.b32.xlu0 %v1216, 64
      %v1231 = vpop.permute.xlu0 %1230
      %v1233 = vmul.f32 %v1215, %v1231
      %1235 = vrot.lane.b32.xlu0 %v1233, 32
      %v1236 = vpop.permute.xlu0 %1235
      %v1238 = vadd.f32 %v1228, %v1236
      %v1239 = vtanh.pop %v1238
      %1241 = vrot.lane.b32.xlu0 %v1239, 64
      %v1242 = vpop.permute.xlu0 %1241
      %v1244 = vmul.f32 %v1215, %v1242
      %v1245 = vld [vmem:[#allocation5] sm:$0x3]
      %v1246 = vxor.u32 %v1208, 2147483648
      %v1247 = vmul.f32 %v1246, 1.442695
      %v1248 = vpow.pop %v1247
      %v1249 = vadd.f32 %v1248, 1.0
      %v1250 = vrcp.pop %v1249
      %v1251 = vmul.f32 1.0, %v1250
      %v1252 = vtanh.pop %v1208
      %v1255 = vunpack.c.l.s4 1983009808
      %v1256 = vunpack.c.0.s8 %v1255
      %v1257 = vlaneseq
      %v1258 = vshrl.u32 %v1257, 7
      %v1259 = vsub.s32 %v1256, %v1258
      %v1260 = vrot.slane %v1245, %v1259
      %1261 = vrot.lane.b32.xlu0 %v1260, 32
      %v1262 = vpop.permute.xlu0 %1261
      %v1264 = vmul.f32 %v1251, %v1262
      %1266 = vrot.lane.b32.xlu0 %v1252, 64
      %v1267 = vpop.permute.xlu0 %1266
      %v1269 = vmul.f32 %v1251, %v1267
      %1271 = vrot.lane.b32.xlu0 %v1269, 32
      %v1272 = vpop.permute.xlu0 %1271
      %v1274 = vadd.f32 %v1264, %v1272
      %v1275 = vtanh.pop %v1274
      %1277 = vrot.lane.b32.xlu0 %v1275, 64
      %v1278 = vpop.permute.xlu0 %1277
      %v1280 = vmul.f32 %v1251, %v1278
      %v1283 = vunpack.c.l.s4 1983009808
      %v1284 = vunpack.c.0.s8 %v1283
      %v1285 = vlaneseq
      %v1286 = vshrl.u32 %v1285, 7
      %v1287 = vsub.s32 %v1284, %v1286
      %v1288 = vrot.slane %v1238, %v1287
      %1289 = vrot.lane.b32.xlu0 %v1288, 96
      %v1290 = vpop.permute.xlu0 %1289
      %1292 = vst.msk [vmem:[#allocation4] sm:$0x3] %vm488, %v1290
      %v1295 = vunpack.c.l.s4 1983009808
      %v1296 = vunpack.c.0.s8 %v1295
      %v1297 = vlaneseq
      %v1298 = vshrl.u32 %v1297, 7
      %v1299 = vsub.s32 %v1296, %v1298
      %v1300 = vrot.slane %v1274, %v1299
      %1301 = vrot.lane.b32.xlu0 %v1300, 96
      %v1302 = vpop.permute.xlu0 %1301
      %1304 = vst.msk [vmem:[#allocation5] sm:$0x3] %vm488, %v1302
      %v1305 = vpack.c.bf16 %v1244, %v1244
      %v1306 = vpack.c.bf16 %v1280, %v1280
      %v1309 = vunpack.c.l.s4 1966171168
      %v1310 = vunpack.c.0.s8 %v1309
      %v1311 = vlaneseq
      %v1312 = vshrl.u32 %v1311, 7
      %v1313 = vsub.s32 %v1310, %v1312
      %v1314 = vrot.slane %v1305, %v1313
      %v1316 = vunpack.c.l.s4 1966171168
      %v1317 = vunpack.c.0.s8 %v1316
      %v1318 = vlaneseq
      %v1319 = vshrl.u32 %v1318, 7
      %v1320 = vsub.s32 %v1317, %v1319
      %v1321 = vrot.slane %v1314, %v1320
      %1322 = vrot.lane.b32.xlu0 %v1321, 32
      %v1323 = vpop.permute.xlu0 %1322
      %1325 = vst.msk [vmem:[#allocation2] sm:$0x1] %vm522, %v1323
      %v1328 = vunpack.c.l.s4 1966171168
      %v1329 = vunpack.c.0.s8 %v1328
      %v1330 = vlaneseq
      %v1331 = vshrl.u32 %v1330, 7
      %v1332 = vsub.s32 %v1329, %v1331
      %v1333 = vrot.slane %v1306, %v1332
      %v1335 = vunpack.c.l.s4 1966171168
      %v1336 = vunpack.c.0.s8 %v1335
      %v1337 = vlaneseq
      %v1338 = vshrl.u32 %v1337, 7
      %v1339 = vsub.s32 %v1336, %v1338
      %v1340 = vrot.slane %v1333, %v1339
      %1341 = vrot.lane.b32.xlu0 %v1340, 32
      %v1342 = vpop.permute.xlu0 %1341
      %1344 = vst.msk [vmem:[#allocation3] sm:$0x1] %vm522, %v1342
      %s1345 = scalar_lea.vmem %s257, 3
      %1346 = vst.msk [vmem:[%s1345] sm:$0x1] %vm522, %v1323
      %1347 = vst.msk [vmem:[%s263] sm:$0x1] %vm522, %v1342
      %s1348 = smul.u32 4, %s17
      %p1349 = scmp.lt.s32.totalorder %s1348, 7
      %s1350 = scalar_select %p1349, %s1348, 7
      %s1351 = scalar_lea.vmem %s4, %s1350
      %s1352 = ssub.s32 1, %s17
      %s1353 = smul.u32 4, %s1352
      %p1354 = scmp.lt.s32.totalorder %s1353, 7
      %s1355 = scalar_select %p1354, %s1353, 7
      %s1356 = scalar_lea.vmem %s5, %s1355
      // Predicated region
      $region41: #{lstm_pooling_classifier_forward.2} parent=35 // pred_check
        %p1357 = pneg %p131
      $region42: #{lstm_pooling_classifier_forward.2} parent=35 // pred_check_branch
        %1359 = sbr.rel (%p1357) target = $region44
      $region43: #{lstm_pooling_classifier_forward.2} parent=35 // pred_region
        %s1360 = smul.u32 4, %s17
      $region44: #{lstm_pooling_classifier_forward.2} parent=35 // pred_fallthru
        _
      // Predicated region
      $region45: #{lstm_pooling_classifier_forward.2} parent=35 // pred_check
        %p1361 = pneg %p159
      $region46: #{lstm_pooling_classifier_forward.2} parent=35 // pred_check_branch
        %1363 = sbr.rel (%p1361) target = $region48
      $region47: #{lstm_pooling_classifier_forward.2} parent=35 // pred_region
        %s1364 = ssub.s32 1, %s17
        %s1365 = smul.u32 4, %s1364
      $region48: #{lstm_pooling_classifier_forward.2} parent=35 // pred_fallthru
        _
    $region36: #{lstm_pooling_classifier_forward.2} parent=5 // pred_fallthru
      _
    %p1366 = scmp.le.s32.totalorder 2, %s12
    // Predicated region
    $region49: #{lstm_pooling_classifier_forward.2} parent=5 // pred_check
      %p1367 = pneg %p1366
    $region50: #{lstm_pooling_classifier_forward.2} parent=5 // pred_check_branch
      %1369 = sbr.rel (%p1367) target = $region52
    $region51: #{lstm_pooling_classifier_forward.2} parent=5 // pred_region
      %s1370 = ssub.s32 %s12, 2
      // Predicated region
      $region53: #{lstm_pooling_classifier_forward.2} parent=51 // pred_check
        %p1371 = pneg %p137
      $region54: #{lstm_pooling_classifier_forward.2} parent=51 // pred_check_branch
        %1373 = sbr.rel (%p1371) target = $region56
      $region55: #{lstm_pooling_classifier_forward.2} parent=51 // pred_region
        %s1374 = smul.u32 4, %s18
        %p1375 = scmp.lt.s32.totalorder %s1374, 7
        %s1376 = scalar_select %p1375, %s1374, 7
        %s1377 = scalar_lea.vmem %s4, %s1376
      $region56: #{lstm_pooling_classifier_forward.2} parent=51 // pred_fallthru
        _
      // Predicated region
      $region57: #{lstm_pooling_classifier_forward.2} parent=51 // pred_check
        %p1378 = pneg %p165
      $region58: #{lstm_pooling_classifier_forward.2} parent=51 // pred_check_branch
        %1380 = sbr.rel (%p1378) target = $region60
      $region59: #{lstm_pooling_classifier_forward.2} parent=51 // pred_region
        %s1381 = ssub.s32 1, %s18
        %s1382 = smul.u32 4, %s1381
        %p1383 = scmp.lt.s32.totalorder %s1382, 7
        %s1384 = scalar_select %p1383, %s1382, 7
        %s1385 = scalar_lea.vmem %s5, %s1384
      $region60: #{lstm_pooling_classifier_forward.2} parent=51 // pred_fallthru
        _
    $region52: #{lstm_pooling_classifier_forward.2} parent=5 // pred_fallthru
      _
  $region6: #{lstm_pooling_classifier_forward.2} parent=0 // loop_footer
    %s16 = sadd.s32 1, %s12
  $region7: #{lstm_pooling_classifier_forward.2} parent=0 // loop_footer_branch
    %11 = sbr.rel target = $region3
  $region8: #{lstm_pooling_classifier_forward.2} parent=0 // loop_exit
    _

// kernel: lstm_pooling_classifier_forward.3
$region0: #{lstm_pooling_classifier_forward.3}
  #allocation0 [shape = 'u32[]', space=smem, size = 0x4, offset = 0x4, fixed_abs, tag = 'smem constant byte address 0x4 - core index']
  #allocation1 [shape = 'u32[144,128]{1,0:T(1,128)}', space=vmem, size = 0x12000, scoped, tag = 'internal scratch']
  #allocation2 [shape = 'bf16[2,32]{1,0:T(2,128)(2,1)}', space=vmem, size = 0x200, scoped, tag = 'scratch operand']
  #allocation3 [shape = 'bf16[2,32]{1,0:T(2,128)(2,1)}', space=vmem, size = 0x200, scoped, tag = 'scratch operand']
  #allocation4 [shape = 'f32[2,32]{1,0:T(2,128)}', space=vmem, size = 0x400, scoped, tag = 'scratch operand']
  #allocation5 [shape = 'f32[2,32]{1,0:T(2,128)}', space=vmem, size = 0x400, scoped, tag = 'scratch operand']
  #allocation6 [shape = 'f32[2,32]{1,0:T(2,128)}', space=vmem, size = 0x400, scoped, tag = 'scratch operand']
  #allocation7 [shape = 'f32[2,32]{1,0:T(2,128)}', space=vmem, size = 0x400, scoped, tag = 'scratch operand']
  #allocation8 [shape = 'f32[1,1]{1,0:T(1,128)S(1)}', space=vmem, size = 0x200, scoped, tag = 'scoped memory for lstm_pooling_classifier_forward.3']
  %s0 = inlined_call_operand.vmem [shape: bf16[8,2,128], index: 0, kind: input, shape index: {}]
  %s1 = inlined_call_operand.vmem [shape: bf16[8,2,128], index: 1, kind: input, shape index: {}]
  %s2 = inlined_call_operand.vmem [shape: bf16[32,128], index: 2, kind: input, shape index: {}]
  %s3 = inlined_call_operand.vmem [shape: bf16[32,128], index: 3, kind: input, shape index: {}]
  %s4 = inlined_call_operand.vmem [shape: f32[2,32], index: 4, kind: input, shape index: {}]
  %s5 = inlined_call_operand.<no memory space> [shape: f32[1,1], index: 5, kind: input, shape index: {}]
  %s6 = inlined_call_operand.vmem [shape: f32[2,1], index: 6, kind: output, shape index: {}]
  %s7 = sld [smem:[#allocation0]]
  $region65: #{lstm_pooling_classifier_forward.3} parent=0
    _
  %s9 = ssub.s32 1, %s7
  %s10 = scalar_select 0, %s9, %s7
  %v11 = vstv %s5
  %12 = vst [vmem:[#allocation8] sm:$0x1] %v11
  loop: start=0, step=1, limit=4
  $region2: #{lstm_pooling_classifier_forward.3} parent=0 // loop_pre_header
    _
  $region3: #{lstm_pooling_classifier_forward.3} parent=0 // loop_header
    %s14 = sphi 0, %s18
    %p15 = scmp.ge.s32.totalorder %s14, 4
    %s24 = sphi 0, %s26
    %s27 = sphi 0, %s24
    %s28 = sphi 0, %s27
    %s44 = sphi 0, %s28
    %s52 = sphi 0, %s54
    %s55 = sphi 0, %s52
    %s56 = sphi 0, %s55
    %s72 = sphi 0, %s56
    %s76 = sphi 0, %s76
    %s78 = sphi 0, %s76
    %s79 = sphi 0, %s78
    %s93 = sphi 0, %s79
    %s97 = sphi 0, %s97
    %s99 = sphi 0, %s97
    %s100 = sphi 0, %s99
    %s114 = sphi 0, %s100
    %s118 = sphi 0, %s118
    %s120 = sphi 0, %s118
    %s121 = sphi 0, %s120
    %s135 = sphi 0, %s121
    %s139 = sphi 0, %s139
    %s141 = sphi 0, %s139
    %s142 = sphi 0, %s141
    %s156 = sphi 0, %s142
    %s160 = sphi 0, %s160
    %s162 = sphi 0, %s160
    %s163 = sphi 0, %s162
    %s177 = sphi 0, %s163
  $region4: #{lstm_pooling_classifier_forward.3} parent=0 // loop_header_branch
    %17 = sbr.rel (%p15) target = $region8
  $region5: #{lstm_pooling_classifier_forward.3} parent=0 // loop_body
    %s19 = ssub.s32 %s14, 1
    %s20 = ssub.s32 %s14, 2
    %s21 = sadd.s32 %s14, 1
    %s22 = ssub.s32 %s14, %s21
    %p23 = scmp.eq.s32.totalorder %s22, 0
    %s25 = sadd.s32 %s24, 1
    %s26 = scalar_select %p23, %s24, %s25
    %p29 = pneg %p23
    %p30 = scmp.eq.s32.totalorder %s14, 1
    %p31 = por %p29, %p30
    %p32 = scmp.ne.s32.totalorder %s24, %s27
    %p33 = scmp.eq.s32.totalorder %s14, 0
    %p34 = por %p32, %p33
    %p35 = scmp.ne.s32.totalorder %s24, %s27
    %p36 = scmp.eq.s32.totalorder %s19, 1
    %p37 = por %p35, %p36
    %p38 = scmp.ne.s32.totalorder %s27, %s28
    %p39 = scmp.eq.s32.totalorder %s19, 0
    %p40 = por %p38, %p39
    %p41 = scmp.ne.s32.totalorder %s27, %s28
    %p42 = scmp.eq.s32.totalorder %s20, 1
    %p43 = por %p41, %p42
    %p45 = scmp.ne.s32.totalorder %s28, %s44
    %p46 = scmp.eq.s32.totalorder %s20, 0
    %p47 = por %p45, %p46
    %s48 = ssub.s32 1, %s14
    %s49 = ssub.s32 1, %s21
    %s50 = ssub.s32 %s48, %s49
    %p51 = scmp.eq.s32.totalorder %s50, 0
    %s53 = sadd.s32 %s52, 1
    %s54 = scalar_select %p51, %s52, %s53
    %p57 = pneg %p51
    %p58 = scmp.eq.s32.totalorder %s14, 1
    %p59 = por %p57, %p58
    %p60 = scmp.ne.s32.totalorder %s52, %s55
    %p61 = scmp.eq.s32.totalorder %s14, 0
    %p62 = por %p60, %p61
    %p63 = scmp.ne.s32.totalorder %s52, %s55
    %p64 = scmp.eq.s32.totalorder %s19, 1
    %p65 = por %p63, %p64
    %p66 = scmp.ne.s32.totalorder %s55, %s56
    %p67 = scmp.eq.s32.totalorder %s19, 0
    %p68 = por %p66, %p67
    %p69 = scmp.ne.s32.totalorder %s55, %s56
    %p70 = scmp.eq.s32.totalorder %s20, 1
    %p71 = por %p69, %p70
    %p73 = scmp.ne.s32.totalorder %s56, %s72
    %p74 = scmp.eq.s32.totalorder %s20, 0
    %p75 = por %p73, %p74
    %s77 = sadd.s32 %s76, 1
    %p80 = scmp.eq.s32.totalorder %s14, 1
    %p81 = scmp.ne.s32.totalorder %s76, %s78
    %p82 = scmp.eq.s32.totalorder %s14, 0
    %p83 = por %p81, %p82
    %p84 = scmp.ne.s32.totalorder %s76, %s78
    %p85 = scmp.eq.s32.totalorder %s19, 1
    %p86 = por %p84, %p85
    %p87 = scmp.ne.s32.totalorder %s78, %s79
    %p88 = scmp.eq.s32.totalorder %s19, 0
    %p89 = por %p87, %p88
    %p90 = scmp.ne.s32.totalorder %s78, %s79
    %p91 = scmp.eq.s32.totalorder %s20, 1
    %p92 = por %p90, %p91
    %p94 = scmp.ne.s32.totalorder %s79, %s93
    %p95 = scmp.eq.s32.totalorder %s20, 0
    %p96 = por %p94, %p95
    %s98 = sadd.s32 %s97, 1
    %p101 = scmp.eq.s32.totalorder %s14, 1
    %p102 = scmp.ne.s32.totalorder %s97, %s99
    %p103 = scmp.eq.s32.totalorder %s14, 0
    %p104 = por %p102, %p103
    %p105 = scmp.ne.s32.totalorder %s97, %s99
    %p106 = scmp.eq.s32.totalorder %s19, 1
    %p107 = por %p105, %p106
    %p108 = scmp.ne.s32.totalorder %s99, %s100
    %p109 = scmp.eq.s32.totalorder %s19, 0
    %p110 = por %p108, %p109
    %p111 = scmp.ne.s32.totalorder %s99, %s100
    %p112 = scmp.eq.s32.totalorder %s20, 1
    %p113 = por %p111, %p112
    %p115 = scmp.ne.s32.totalorder %s100, %s114
    %p116 = scmp.eq.s32.totalorder %s20, 0
    %p117 = por %p115, %p116
    %s119 = sadd.s32 %s118, 1
    %p122 = scmp.eq.s32.totalorder %s14, 1
    %p123 = scmp.ne.s32.totalorder %s118, %s120
    %p124 = scmp.eq.s32.totalorder %s14, 0
    %p125 = por %p123, %p124
    %p126 = scmp.ne.s32.totalorder %s118, %s120
    %p127 = scmp.eq.s32.totalorder %s19, 1
    %p128 = por %p126, %p127
    %p129 = scmp.ne.s32.totalorder %s120, %s121
    %p130 = scmp.eq.s32.totalorder %s19, 0
    %p131 = por %p129, %p130
    %p132 = scmp.ne.s32.totalorder %s120, %s121
    %p133 = scmp.eq.s32.totalorder %s20, 1
    %p134 = por %p132, %p133
    %p136 = scmp.ne.s32.totalorder %s121, %s135
    %p137 = scmp.eq.s32.totalorder %s20, 0
    %p138 = por %p136, %p137
    %s140 = sadd.s32 %s139, 1
    %p143 = scmp.eq.s32.totalorder %s14, 1
    %p144 = scmp.ne.s32.totalorder %s139, %s141
    %p145 = scmp.eq.s32.totalorder %s14, 0
    %p146 = por %p144, %p145
    %p147 = scmp.ne.s32.totalorder %s139, %s141
    %p148 = scmp.eq.s32.totalorder %s19, 1
    %p149 = por %p147, %p148
    %p150 = scmp.ne.s32.totalorder %s141, %s142
    %p151 = scmp.eq.s32.totalorder %s19, 0
    %p152 = por %p150, %p151
    %p153 = scmp.ne.s32.totalorder %s141, %s142
    %p154 = scmp.eq.s32.totalorder %s20, 1
    %p155 = por %p153, %p154
    %p157 = scmp.ne.s32.totalorder %s142, %s156
    %p158 = scmp.eq.s32.totalorder %s20, 0
    %p159 = por %p157, %p158
    %s161 = sadd.s32 %s160, 1
    %p164 = scmp.eq.s32.totalorder %s14, 1
    %p165 = scmp.ne.s32.totalorder %s160, %s162
    %p166 = scmp.eq.s32.totalorder %s14, 0
    %p167 = por %p165, %p166
    %p168 = scmp.ne.s32.totalorder %s160, %s162
    %p169 = scmp.eq.s32.totalorder %s19, 1
    %p170 = por %p168, %p169
    %p171 = scmp.ne.s32.totalorder %s162, %s163
    %p172 = scmp.eq.s32.totalorder %s19, 0
    %p173 = por %p171, %p172
    %p174 = scmp.ne.s32.totalorder %s162, %s163
    %p175 = scmp.eq.s32.totalorder %s20, 1
    %p176 = por %p174, %p175
    %p178 = scmp.ne.s32.totalorder %s163, %s177
    %p179 = scmp.eq.s32.totalorder %s20, 0
    %p180 = por %p178, %p179
    %p181 = scmp.le.s32.totalorder 1, %s14
    %p182 = scmp.lt.s32.totalorder %s14, 3
    %p183 = pnand %p181, %p182
    %p184 = pneg %p183
    // Predicated region
    $region9: #{lstm_pooling_classifier_forward.3} parent=5 // pred_check
      _
    $region10: #{lstm_pooling_classifier_forward.3} parent=5 // pred_check_branch
      %186 = sbr.rel (%p183) target = $region12
    $region11: #{lstm_pooling_classifier_forward.3} parent=5 // pred_region
      %s187 = ssub.s32 %s14, 1
      // Predicated region
      $region13: #{lstm_pooling_classifier_forward.3} parent=11 // pred_check
        %p188 = pneg %p89
      $region14: #{lstm_pooling_classifier_forward.3} parent=11 // pred_check_branch
        %190 = sbr.rel (%p188) target = $region16
      $region15: #{lstm_pooling_classifier_forward.3} parent=11 // pred_region
        _
      $region16: #{lstm_pooling_classifier_forward.3} parent=11 // pred_fallthru
        _
      // Predicated region
      $region17: #{lstm_pooling_classifier_forward.3} parent=11 // pred_check
        %p191 = pneg %p110
      $region18: #{lstm_pooling_classifier_forward.3} parent=11 // pred_check_branch
        %193 = sbr.rel (%p191) target = $region20
      $region19: #{lstm_pooling_classifier_forward.3} parent=11 // pred_region
        _
      $region20: #{lstm_pooling_classifier_forward.3} parent=11 // pred_fallthru
        _
      // Predicated region
      $region21: #{lstm_pooling_classifier_forward.3} parent=11 // pred_check
        %p194 = pneg %p131
      $region22: #{lstm_pooling_classifier_forward.3} parent=11 // pred_check_branch
        %196 = sbr.rel (%p194) target = $region24
      $region23: #{lstm_pooling_classifier_forward.3} parent=11 // pred_region
        _
      $region24: #{lstm_pooling_classifier_forward.3} parent=11 // pred_fallthru
        _
      // Predicated region
      $region25: #{lstm_pooling_classifier_forward.3} parent=11 // pred_check
        %p197 = pneg %p152
      $region26: #{lstm_pooling_classifier_forward.3} parent=11 // pred_check_branch
        %199 = sbr.rel (%p197) target = $region28
      $region27: #{lstm_pooling_classifier_forward.3} parent=11 // pred_region
        _
      $region28: #{lstm_pooling_classifier_forward.3} parent=11 // pred_fallthru
        _
    $region12: #{lstm_pooling_classifier_forward.3} parent=5 // pred_fallthru
      _
    %p200 = scmp.lt.s32.totalorder %s14, 2
    // Predicated region
    $region29: #{lstm_pooling_classifier_forward.3} parent=5 // pred_check
      %p201 = pneg %p200
    $region30: #{lstm_pooling_classifier_forward.3} parent=5 // pred_check_branch
      %203 = sbr.rel (%p201) target = $region32
    $region31: #{lstm_pooling_classifier_forward.3} parent=5 // pred_region
      // Predicated region
      $region33: #{lstm_pooling_classifier_forward.3} parent=31 // pred_check
        %p204 = pneg %p34
      $region34: #{lstm_pooling_classifier_forward.3} parent=31 // pred_check_branch
        %206 = sbr.rel (%p204) target = $region36
      $region35: #{lstm_pooling_classifier_forward.3} parent=31 // pred_region
        %s207 = smul.u32 4, %s14
        %p208 = scmp.lt.s32.totalorder %s207, 7
        %s209 = scalar_select %p208, %s207, 7
        %s210 = scalar_lea.vmem %s0, %s209
        %s211 = smul.u32 4, %s14
      $region36: #{lstm_pooling_classifier_forward.3} parent=31 // pred_fallthru
        _
      // Predicated region
      $region37: #{lstm_pooling_classifier_forward.3} parent=31 // pred_check
        %p212 = pneg %p62
      $region38: #{lstm_pooling_classifier_forward.3} parent=31 // pred_check_branch
        %214 = sbr.rel (%p212) target = $region40
      $region39: #{lstm_pooling_classifier_forward.3} parent=31 // pred_region
        %s215 = ssub.s32 1, %s14
        %s216 = smul.u32 4, %s215
        %p217 = scmp.lt.s32.totalorder %s216, 7
        %s218 = scalar_select %p217, %s216, 7
        %s219 = scalar_lea.vmem %s1, %s218
        %s220 = ssub.s32 1, %s14
        %s221 = smul.u32 4, %s220
      $region40: #{lstm_pooling_classifier_forward.3} parent=31 // pred_fallthru
        _
    $region32: #{lstm_pooling_classifier_forward.3} parent=5 // pred_fallthru
      _
    %p222 = scmp.le.s32.totalorder 1, %s14
    %p223 = scmp.lt.s32.totalorder %s14, 3
    %p224 = pnand %p222, %p223
    %p225 = pneg %p224
    // Predicated region
    $region41: #{lstm_pooling_classifier_forward.3} parent=5 // pred_check
      _
    $region42: #{lstm_pooling_classifier_forward.3} parent=5 // pred_check_branch
      %227 = sbr.rel (%p224) target = $region44
    $region43: #{lstm_pooling_classifier_forward.3} parent=5 // pred_region
      %s228 = ssub.s32 %s14, 1
      %s229 = smul.u32 4, %s19
      %p230 = scmp.lt.s32.totalorder %s229, 7
      %s231 = scalar_select %p230, %s229, 7
      %s232 = scalar_lea.vmem %s0, %s231
      %p233 = pneg %p40
      %p234 = pneg %p37
      %s235 = ssub.s32 1, %s19
      %s236 = smul.u32 4, %s235
      %p237 = scmp.lt.s32.totalorder %s236, 7
      %s238 = scalar_select %p237, %s236, 7
      %s239 = scalar_lea.vmem %s1, %s238
      %p240 = pneg %p68
      %p241 = pneg %p65
      %p242 = pneg %p89
      %p243 = pneg %p86
      %p244 = pneg %p110
      %p245 = pneg %p107
      %p246 = pneg %p131
      %p247 = pneg %p128
      %p248 = pneg %p152
      %p249 = pneg %p149
      %p250 = pneg %p173
      %p251 = pneg %p170
      %s252 = smul.u32 4, %s19
      %p253 = scmp.lt.s32.totalorder %s252, 7
      %s254 = scalar_select %p253, %s252, 7
      %s255 = scalar_lea.vmem %s0, %s254
      %s256 = smul.u32 4, %s19
      %s257 = ssub.s32 1, %s19
      %s258 = smul.u32 4, %s257
      %p259 = scmp.lt.s32.totalorder %s258, 7
      %s260 = scalar_select %p259, %s258, 7
      %s261 = scalar_lea.vmem %s1, %s260
      %s262 = ssub.s32 1, %s19
      %s263 = smul.u32 4, %s262
      %p265 = scmp.eq.s32.totalorder %s19, 0
      // Predicated region
      $region45: #{lstm_pooling_classifier_forward.3} parent=43 // pred_check
        %p266 = pneg %p265
      $region46: #{lstm_pooling_classifier_forward.3} parent=43 // pred_check_branch
        %268 = sbr.rel (%p266) target = $region48
      $region47: #{lstm_pooling_classifier_forward.3} parent=43 // pred_region
        %vm269 = vcmask 253952
        %270 = vst.msk [vmem:[#allocation2] sm:$0x1] %vm269, 0
        %271 = vst.msk [vmem:[#allocation3] sm:$0x1] %vm269, 0
        %vm272 = vcmask 254976
        %273 = vst.msk [vmem:[#allocation4] sm:$0x3] %vm272, 0.0
        %274 = vst.msk [vmem:[#allocation5] sm:$0x3] %vm272, 0.0
        %275 = vst.msk [vmem:[#allocation6] sm:$0x3] %vm272, -inf
        %276 = vst.msk [vmem:[#allocation7] sm:$0x3] %vm272, -inf
      $region48: #{lstm_pooling_classifier_forward.3} parent=43 // pred_fallthru
        _
      %v277 = vld [vmem:[%s255] sm:$0x1]
      %v278 = vunpack.c.l.bf16 %v277
      %v279 = vld [vmem:[#allocation2] sm:$0x1]
      %v280 = vld [vmem:[%s2] sm:$0xf]
      %v281 = vld [vmem:[%s2 + $0x4] sm:$0xf]
      %v282 = vld [vmem:[%s2 + $0x8] sm:$0xf]
      %v283 = vld [vmem:[%s2 + $0xc] sm:$0xf]
      %v288 = vunpack.c.l.b16 %v280
      %v289 = vunpack.c.l.b16 %v281
      %v290 = vunpack.c.l.b16 %v282
      %v291 = vunpack.c.l.b16 %v283
      %v292 = vpack.c.b16 %v289, %v288
      %v293 = vpack.c.b16 %v291, %v290
      %vm296 = vcmask 261120
      %v298 = vsel %vm296, %v279, 0
      %300 = vmatprep.subr.bf16.mxu0 0
      %301 = vmatpush1.bf16.msra.mxu0 %v292
      %302 = vmatprep.subr.bf16.mxu0 0
      %303 = vmatpush1.bf16.msra.mxu0 %v293
      %304 = vmatprep.subr.bf16.mxu0 0
      %305 = vmatpush1.bf16.msra.mxu0 0
      %306 = vmatprep.subr.bf16.mxu0 0
      %307 = vmatpush1.bf16.msra.mxu0 0
      %308 = vmatprep.subr.bf16.mxu0 0
      %309 = vmatpush1.bf16.msra.mxu0 0
      %310 = vmatprep.subr.bf16.mxu0 0
      %311 = vmatpush1.bf16.msra.mxu0 0
      %312 = vmatprep.subr.bf16.mxu0 0
      %313 = vmatpush1.bf16.msra.mxu0 0
      %314 = vmatprep.subr.bf16.mxu0 0
      %315 = vmatpush1.bf16.msra.mxu0 0
      %316 = vmatprep.subr.bf16.mxu0 0
      %317 = vmatpush1.bf16.msra.mxu0 0
      %318 = vmatprep.subr.bf16.mxu0 0
      %319 = vmatpush1.bf16.msra.mxu0 0
      %320 = vmatprep.subr.bf16.mxu0 0
      %321 = vmatpush1.bf16.msra.mxu0 0
      %322 = vmatprep.subr.bf16.mxu0 0
      %323 = vmatpush1.bf16.msra.mxu0 0
      %324 = vmatprep.subr.bf16.mxu0 0
      %325 = vmatpush1.bf16.msra.mxu0 0
      %326 = vmatprep.subr.bf16.mxu0 0
      %327 = vmatpush1.bf16.msra.mxu0 0
      %328 = vmatprep.subr.bf16.mxu0 0
      %329 = vmatpush1.bf16.msra.mxu0 0
      %330 = vmatprep.subr.bf16.mxu0 0
      %331 = vmatpush1.bf16.msra.mxu0 0
      %332 = vmatprep.mubr.bf16.mxu0 0
      %333 = vmatmul.mubr.bf16.gmra.mrb[0].mxu0 %v298
      %v334 = vpop.f32.mrb[0].mxu0
      %v335 = vadd.f32 0.0, %v334
      %v336 = vpop.f32.mrb[0].mxu0
      %v337 = vpop.f32.mrb[0].mxu0
      %v338 = vpop.f32.mrb[0].mxu0
      %339 = vdwg.mxu0
      %v340 = vadd.f32 %v278, %v335
      %s341 = scalar_lea.vmem %s261, 3
      %v342 = vld [vmem:[%s341] sm:$0x1]
      %v343 = vunpack.c.l.bf16 %v342
      %v344 = vld [vmem:[#allocation3] sm:$0x1]
      %v345 = vld [vmem:[%s3] sm:$0xf]
      %v346 = vld [vmem:[%s3 + $0x4] sm:$0xf]
      %v347 = vld [vmem:[%s3 + $0x8] sm:$0xf]
      %v348 = vld [vmem:[%s3 + $0xc] sm:$0xf]
      %v353 = vunpack.c.l.b16 %v345
      %v354 = vunpack.c.l.b16 %v346
      %v355 = vunpack.c.l.b16 %v347
      %v356 = vunpack.c.l.b16 %v348
      %v357 = vpack.c.b16 %v354, %v353
      %v358 = vpack.c.b16 %v356, %v355
      %v362 = vsel %vm296, %v344, 0
      %364 = vmatprep.subr.bf16.mxu0 0
      %365 = vmatpush1.bf16.msra.mxu0 %v357
      %366 = vmatprep.subr.bf16.mxu0 0
      %367 = vmatpush1.bf16.msra.mxu0 %v358
      %368 = vmatprep.subr.bf16.mxu0 0
      %369 = vmatpush1.bf16.msra.mxu0 0
      %370 = vmatprep.subr.bf16.mxu0 0
      %371 = vmatpush1.bf16.msra.mxu0 0
      %372 = vmatprep.subr.bf16.mxu0 0
      %373 = vmatpush1.bf16.msra.mxu0 0
      %374 = vmatprep.subr.bf16.mxu0 0
      %375 = vmatpush1.bf16.msra.mxu0 0
      %376 = vmatprep.subr.bf16.mxu0 0
      %377 = vmatpush1.bf16.msra.mxu0 0
      %378 = vmatprep.subr.bf16.mxu0 0
      %379 = vmatpush1.bf16.msra.mxu0 0
      %380 = vmatprep.subr.bf16.mxu0 0
      %381 = vmatpush1.bf16.msra.mxu0 0
      %382 = vmatprep.subr.bf16.mxu0 0
      %383 = vmatpush1.bf16.msra.mxu0 0
      %384 = vmatprep.subr.bf16.mxu0 0
      %385 = vmatpush1.bf16.msra.mxu0 0
      %386 = vmatprep.subr.bf16.mxu0 0
      %387 = vmatpush1.bf16.msra.mxu0 0
      %388 = vmatprep.subr.bf16.mxu0 0
      %389 = vmatpush1.bf16.msra.mxu0 0
      %390 = vmatprep.subr.bf16.mxu0 0
      %391 = vmatpush1.bf16.msra.mxu0 0
      %392 = vmatprep.subr.bf16.mxu0 0
      %393 = vmatpush1.bf16.msra.mxu0 0
      %394 = vmatprep.subr.bf16.mxu0 0
      %395 = vmatpush1.bf16.msra.mxu0 0
      %396 = vmatprep.mubr.bf16.mxu0 0
      %397 = vmatmul.mubr.bf16.gmra.mrb[0].mxu0 %v362
      %v398 = vpop.f32.mrb[0].mxu0
      %v399 = vadd.f32 0.0, %v398
      %v400 = vpop.f32.mrb[0].mxu0
      %v401 = vpop.f32.mrb[0].mxu0
      %v402 = vpop.f32.mrb[0].mxu0
      %403 = vdwg.mxu0
      %v404 = vadd.f32 %v343, %v399
      %v405 = vld [vmem:[#allocation4] sm:$0x3]
      %v406 = vxor.u32 %v340, 2147483648
      %v407 = vmul.f32 %v406, 1.442695
      %v408 = vpow.pop %v407
      %v409 = vadd.f32 %v408, 1.0
      %v410 = vrcp.pop %v409
      %v411 = vmul.f32 1.0, %v410
      %v412 = vtanh.pop %v340
      %v415 = vunpack.c.l.s4 1983009808
      %v416 = vunpack.c.0.s8 %v415
      %v417 = vlaneseq
      %v418 = vshrl.u32 %v417, 7
      %v419 = vsub.s32 %v416, %v418
      %v420 = vrot.slane %v405, %v419
      %421 = vrot.lane.b32.xlu0 %v420, 32
      %v422 = vpop.permute.xlu0 %421
      %v424 = vmul.f32 %v411, %v422
      %426 = vrot.lane.b32.xlu0 %v412, 64
      %v427 = vpop.permute.xlu0 %426
      %v429 = vmul.f32 %v411, %v427
      %431 = vrot.lane.b32.xlu0 %v429, 32
      %v432 = vpop.permute.xlu0 %431
      %v434 = vadd.f32 %v424, %v432
      %v435 = vtanh.pop %v434
      %437 = vrot.lane.b32.xlu0 %v435, 64
      %v438 = vpop.permute.xlu0 %437
      %v440 = vmul.f32 %v411, %v438
      %v441 = vld [vmem:[#allocation5] sm:$0x3]
      %v442 = vxor.u32 %v404, 2147483648
      %v443 = vmul.f32 %v442, 1.442695
      %v444 = vpow.pop %v443
      %v445 = vadd.f32 %v444, 1.0
      %v446 = vrcp.pop %v445
      %v447 = vmul.f32 1.0, %v446
      %v448 = vtanh.pop %v404
      %v451 = vunpack.c.l.s4 1983009808
      %v452 = vunpack.c.0.s8 %v451
      %v453 = vlaneseq
      %v454 = vshrl.u32 %v453, 7
      %v455 = vsub.s32 %v452, %v454
      %v456 = vrot.slane %v441, %v455
      %457 = vrot.lane.b32.xlu0 %v456, 32
      %v458 = vpop.permute.xlu0 %457
      %v460 = vmul.f32 %v447, %v458
      %462 = vrot.lane.b32.xlu0 %v448, 64
      %v463 = vpop.permute.xlu0 %462
      %v465 = vmul.f32 %v447, %v463
      %467 = vrot.lane.b32.xlu0 %v465, 32
      %v468 = vpop.permute.xlu0 %467
      %v470 = vadd.f32 %v460, %v468
      %v471 = vtanh.pop %v470
      %473 = vrot.lane.b32.xlu0 %v471, 64
      %v474 = vpop.permute.xlu0 %473
      %v476 = vmul.f32 %v447, %v474
      %v479 = vunpack.c.l.s4 1983009808
      %v480 = vunpack.c.0.s8 %v479
      %v481 = vlaneseq
      %v482 = vshrl.u32 %v481, 7
      %v483 = vsub.s32 %v480, %v482
      %v484 = vrot.slane %v434, %v483
      %485 = vrot.lane.b32.xlu0 %v484, 96
      %v486 = vpop.permute.xlu0 %485
      %vm488 = vcmask 254976
      %489 = vst.msk [vmem:[#allocation4] sm:$0x3] %vm488, %v486
      %v492 = vunpack.c.l.s4 1983009808
      %v493 = vunpack.c.0.s8 %v492
      %v494 = vlaneseq
      %v495 = vshrl.u32 %v494, 7
      %v496 = vsub.s32 %v493, %v495
      %v497 = vrot.slane %v470, %v496
      %498 = vrot.lane.b32.xlu0 %v497, 96
      %v499 = vpop.permute.xlu0 %498
      %501 = vst.msk [vmem:[#allocation5] sm:$0x3] %vm488, %v499
      %v502 = vpack.c.bf16 %v440, %v440
      %v503 = vpack.c.bf16 %v476, %v476
      %v506 = vunpack.c.l.s4 1966171168
      %v507 = vunpack.c.0.s8 %v506
      %v508 = vlaneseq
      %v509 = vshrl.u32 %v508, 7
      %v510 = vsub.s32 %v507, %v509
      %v511 = vrot.slane %v502, %v510
      %v513 = vunpack.c.l.s4 1966171168
      %v514 = vunpack.c.0.s8 %v513
      %v515 = vlaneseq
      %v516 = vshrl.u32 %v515, 7
      %v517 = vsub.s32 %v514, %v516
      %v518 = vrot.slane %v511, %v517
      %519 = vrot.lane.b32.xlu0 %v518, 32
      %v520 = vpop.permute.xlu0 %519
      %vm522 = vcmask 253952
      %523 = vst.msk [vmem:[#allocation2] sm:$0x1] %vm522, %v520
      %v526 = vunpack.c.l.s4 1966171168
      %v527 = vunpack.c.0.s8 %v526
      %v528 = vlaneseq
      %v529 = vshrl.u32 %v528, 7
      %v530 = vsub.s32 %v527, %v529
      %v531 = vrot.slane %v503, %v530
      %v533 = vunpack.c.l.s4 1966171168
      %v534 = vunpack.c.0.s8 %v533
      %v535 = vlaneseq
      %v536 = vshrl.u32 %v535, 7
      %v537 = vsub.s32 %v534, %v536
      %v538 = vrot.slane %v531, %v537
      %539 = vrot.lane.b32.xlu0 %v538, 32
      %v540 = vpop.permute.xlu0 %539
      %542 = vst.msk [vmem:[#allocation3] sm:$0x1] %vm522, %v540
      %v543 = vld [vmem:[#allocation6] sm:$0x3]
      %v546 = vunpack.c.l.s4 1983009808
      %v547 = vunpack.c.0.s8 %v546
      %v548 = vlaneseq
      %v549 = vshrl.u32 %v548, 7
      %v550 = vsub.s32 %v547, %v549
      %v551 = vrot.slane %v440, %v550
      %552 = vrot.lane.b32.xlu0 %v551, 32
      %v553 = vpop.permute.xlu0 %552
      %v555 = vmax.f32 %v543, %v553
      %556 = vst.msk [vmem:[#allocation6] sm:$0x3] %vm488, %v555
      %v557 = vld [vmem:[#allocation7] sm:$0x3]
      %v560 = vunpack.c.l.s4 1983009808
      %v561 = vunpack.c.0.s8 %v560
      %v562 = vlaneseq
      %v563 = vshrl.u32 %v562, 7
      %v564 = vsub.s32 %v561, %v563
      %v565 = vrot.slane %v476, %v564
      %566 = vrot.lane.b32.xlu0 %v565, 32
      %v567 = vpop.permute.xlu0 %566
      %v569 = vmax.f32 %v557, %v567
      %570 = vst.msk [vmem:[#allocation7] sm:$0x3] %vm488, %v569
      %s571 = scalar_lea.vmem %s255, 1
      %v572 = vld [vmem:[%s571] sm:$0x1]
      %v573 = vunpack.c.l.bf16 %v572
      %v574 = vld [vmem:[#allocation2] sm:$0x1]
      %v575 = vld [vmem:[%s2] sm:$0xf]
      %v576 = vld [vmem:[%s2 + $0x4] sm:$0xf]
      %v577 = vld [vmem:[%s2 + $0x8] sm:$0xf]
      %v578 = vld [vmem:[%s2 + $0xc] sm:$0xf]
      %v583 = vunpack.c.l.b16 %v575
      %v584 = vunpack.c.l.b16 %v576
      %v585 = vunpack.c.l.b16 %v577
      %v586 = vunpack.c.l.b16 %v578
      %v587 = vpack.c.b16 %v584, %v583
      %v588 = vpack.c.b16 %v586, %v585
      %v592 = vsel %vm296, %v574, 0
      %594 = vmatprep.subr.bf16.mxu0 0
      %595 = vmatpush1.bf16.msra.mxu0 %v587
      %596 = vmatprep.subr.bf16.mxu0 0
      %597 = vmatpush1.bf16.msra.mxu0 %v588
      %598 = vmatprep.subr.bf16.mxu0 0
      %599 = vmatpush1.bf16.msra.mxu0 0
      %600 = vmatprep.subr.bf16.mxu0 0
      %601 = vmatpush1.bf16.msra.mxu0 0
      %602 = vmatprep.subr.bf16.mxu0 0
      %603 = vmatpush1.bf16.msra.mxu0 0
      %604 = vmatprep.subr.bf16.mxu0 0
      %605 = vmatpush1.bf16.msra.mxu0 0
      %606 = vmatprep.subr.bf16.mxu0 0
      %607 = vmatpush1.bf16.msra.mxu0 0
      %608 = vmatprep.subr.bf16.mxu0 0
      %609 = vmatpush1.bf16.msra.mxu0 0
      %610 = vmatprep.subr.bf16.mxu0 0
      %611 = vmatpush1.bf16.msra.mxu0 0
      %612 = vmatprep.subr.bf16.mxu0 0
      %613 = vmatpush1.bf16.msra.mxu0 0
      %614 = vmatprep.subr.bf16.mxu0 0
      %615 = vmatpush1.bf16.msra.mxu0 0
      %616 = vmatprep.subr.bf16.mxu0 0
      %617 = vmatpush1.bf16.msra.mxu0 0
      %618 = vmatprep.subr.bf16.mxu0 0
      %619 = vmatpush1.bf16.msra.mxu0 0
      %620 = vmatprep.subr.bf16.mxu0 0
      %621 = vmatpush1.bf16.msra.mxu0 0
      %622 = vmatprep.subr.bf16.mxu0 0
      %623 = vmatpush1.bf16.msra.mxu0 0
      %624 = vmatprep.subr.bf16.mxu0 0
      %625 = vmatpush1.bf16.msra.mxu0 0
      %626 = vmatprep.mubr.bf16.mxu0 0
      %627 = vmatmul.mubr.bf16.gmra.mrb[0].mxu0 %v592
      %v628 = vpop.f32.mrb[0].mxu0
      %v629 = vadd.f32 0.0, %v628
      %v630 = vpop.f32.mrb[0].mxu0
      %v631 = vpop.f32.mrb[0].mxu0
      %v632 = vpop.f32.mrb[0].mxu0
      %633 = vdwg.mxu0
      %v634 = vadd.f32 %v573, %v629
      %s635 = scalar_lea.vmem %s261, 2
      %v636 = vld [vmem:[%s635] sm:$0x1]
      %v637 = vunpack.c.l.bf16 %v636
      %v638 = vld [vmem:[#allocation3] sm:$0x1]
      %v639 = vld [vmem:[%s3] sm:$0xf]
      %v640 = vld [vmem:[%s3 + $0x4] sm:$0xf]
      %v641 = vld [vmem:[%s3 + $0x8] sm:$0xf]
      %v642 = vld [vmem:[%s3 + $0xc] sm:$0xf]
      %v647 = vunpack.c.l.b16 %v639
      %v648 = vunpack.c.l.b16 %v640
      %v649 = vunpack.c.l.b16 %v641
      %v650 = vunpack.c.l.b16 %v642
      %v651 = vpack.c.b16 %v648, %v647
      %v652 = vpack.c.b16 %v650, %v649
      %v656 = vsel %vm296, %v638, 0
      %658 = vmatprep.subr.bf16.mxu0 0
      %659 = vmatpush1.bf16.msra.mxu0 %v651
      %660 = vmatprep.subr.bf16.mxu0 0
      %661 = vmatpush1.bf16.msra.mxu0 %v652
      %662 = vmatprep.subr.bf16.mxu0 0
      %663 = vmatpush1.bf16.msra.mxu0 0
      %664 = vmatprep.subr.bf16.mxu0 0
      %665 = vmatpush1.bf16.msra.mxu0 0
      %666 = vmatprep.subr.bf16.mxu0 0
      %667 = vmatpush1.bf16.msra.mxu0 0
      %668 = vmatprep.subr.bf16.mxu0 0
      %669 = vmatpush1.bf16.msra.mxu0 0
      %670 = vmatprep.subr.bf16.mxu0 0
      %671 = vmatpush1.bf16.msra.mxu0 0
      %672 = vmatprep.subr.bf16.mxu0 0
      %673 = vmatpush1.bf16.msra.mxu0 0
      %674 = vmatprep.subr.bf16.mxu0 0
      %675 = vmatpush1.bf16.msra.mxu0 0
      %676 = vmatprep.subr.bf16.mxu0 0
      %677 = vmatpush1.bf16.msra.mxu0 0
      %678 = vmatprep.subr.bf16.mxu0 0
      %679 = vmatpush1.bf16.msra.mxu0 0
      %680 = vmatprep.subr.bf16.mxu0 0
      %681 = vmatpush1.bf16.msra.mxu0 0
      %682 = vmatprep.subr.bf16.mxu0 0
      %683 = vmatpush1.bf16.msra.mxu0 0
      %684 = vmatprep.subr.bf16.mxu0 0
      %685 = vmatpush1.bf16.msra.mxu0 0
      %686 = vmatprep.subr.bf16.mxu0 0
      %687 = vmatpush1.bf16.msra.mxu0 0
      %688 = vmatprep.subr.bf16.mxu0 0
      %689 = vmatpush1.bf16.msra.mxu0 0
      %690 = vmatprep.mubr.bf16.mxu0 0
      %691 = vmatmul.mubr.bf16.gmra.mrb[0].mxu0 %v656
      %v692 = vpop.f32.mrb[0].mxu0
      %v693 = vadd.f32 0.0, %v692
      %v694 = vpop.f32.mrb[0].mxu0
      %v695 = vpop.f32.mrb[0].mxu0
      %v696 = vpop.f32.mrb[0].mxu0
      %697 = vdwg.mxu0
      %v698 = vadd.f32 %v637, %v693
      %v699 = vld [vmem:[#allocation4] sm:$0x3]
      %v700 = vxor.u32 %v634, 2147483648
      %v701 = vmul.f32 %v700, 1.442695
      %v702 = vpow.pop %v701
      %v703 = vadd.f32 %v702, 1.0
      %v704 = vrcp.pop %v703
      %v705 = vmul.f32 1.0, %v704
      %v706 = vtanh.pop %v634
      %v709 = vunpack.c.l.s4 1983009808
      %v710 = vunpack.c.0.s8 %v709
      %v711 = vlaneseq
      %v712 = vshrl.u32 %v711, 7
      %v713 = vsub.s32 %v710, %v712
      %v714 = vrot.slane %v699, %v713
      %715 = vrot.lane.b32.xlu0 %v714, 32
      %v716 = vpop.permute.xlu0 %715
      %v718 = vmul.f32 %v705, %v716
      %720 = vrot.lane.b32.xlu0 %v706, 64
      %v721 = vpop.permute.xlu0 %720
      %v723 = vmul.f32 %v705, %v721
      %725 = vrot.lane.b32.xlu0 %v723, 32
      %v726 = vpop.permute.xlu0 %725
      %v728 = vadd.f32 %v718, %v726
      %v729 = vtanh.pop %v728
      %731 = vrot.lane.b32.xlu0 %v729, 64
      %v732 = vpop.permute.xlu0 %731
      %v734 = vmul.f32 %v705, %v732
      %v735 = vld [vmem:[#allocation5] sm:$0x3]
      %v736 = vxor.u32 %v698, 2147483648
      %v737 = vmul.f32 %v736, 1.442695
      %v738 = vpow.pop %v737
      %v739 = vadd.f32 %v738, 1.0
      %v740 = vrcp.pop %v739
      %v741 = vmul.f32 1.0, %v740
      %v742 = vtanh.pop %v698
      %v745 = vunpack.c.l.s4 1983009808
      %v746 = vunpack.c.0.s8 %v745
      %v747 = vlaneseq
      %v748 = vshrl.u32 %v747, 7
      %v749 = vsub.s32 %v746, %v748
      %v750 = vrot.slane %v735, %v749
      %751 = vrot.lane.b32.xlu0 %v750, 32
      %v752 = vpop.permute.xlu0 %751
      %v754 = vmul.f32 %v741, %v752
      %756 = vrot.lane.b32.xlu0 %v742, 64
      %v757 = vpop.permute.xlu0 %756
      %v759 = vmul.f32 %v741, %v757
      %761 = vrot.lane.b32.xlu0 %v759, 32
      %v762 = vpop.permute.xlu0 %761
      %v764 = vadd.f32 %v754, %v762
      %v765 = vtanh.pop %v764
      %767 = vrot.lane.b32.xlu0 %v765, 64
      %v768 = vpop.permute.xlu0 %767
      %v770 = vmul.f32 %v741, %v768
      %v773 = vunpack.c.l.s4 1983009808
      %v774 = vunpack.c.0.s8 %v773
      %v775 = vlaneseq
      %v776 = vshrl.u32 %v775, 7
      %v777 = vsub.s32 %v774, %v776
      %v778 = vrot.slane %v728, %v777
      %779 = vrot.lane.b32.xlu0 %v778, 96
      %v780 = vpop.permute.xlu0 %779
      %782 = vst.msk [vmem:[#allocation4] sm:$0x3] %vm488, %v780
      %v785 = vunpack.c.l.s4 1983009808
      %v786 = vunpack.c.0.s8 %v785
      %v787 = vlaneseq
      %v788 = vshrl.u32 %v787, 7
      %v789 = vsub.s32 %v786, %v788
      %v790 = vrot.slane %v764, %v789
      %791 = vrot.lane.b32.xlu0 %v790, 96
      %v792 = vpop.permute.xlu0 %791
      %794 = vst.msk [vmem:[#allocation5] sm:$0x3] %vm488, %v792
      %v795 = vpack.c.bf16 %v734, %v734
      %v796 = vpack.c.bf16 %v770, %v770
      %v799 = vunpack.c.l.s4 1966171168
      %v800 = vunpack.c.0.s8 %v799
      %v801 = vlaneseq
      %v802 = vshrl.u32 %v801, 7
      %v803 = vsub.s32 %v800, %v802
      %v804 = vrot.slane %v795, %v803
      %v806 = vunpack.c.l.s4 1966171168
      %v807 = vunpack.c.0.s8 %v806
      %v808 = vlaneseq
      %v809 = vshrl.u32 %v808, 7
      %v810 = vsub.s32 %v807, %v809
      %v811 = vrot.slane %v804, %v810
      %812 = vrot.lane.b32.xlu0 %v811, 32
      %v813 = vpop.permute.xlu0 %812
      %815 = vst.msk [vmem:[#allocation2] sm:$0x1] %vm522, %v813
      %v818 = vunpack.c.l.s4 1966171168
      %v819 = vunpack.c.0.s8 %v818
      %v820 = vlaneseq
      %v821 = vshrl.u32 %v820, 7
      %v822 = vsub.s32 %v819, %v821
      %v823 = vrot.slane %v796, %v822
      %v825 = vunpack.c.l.s4 1966171168
      %v826 = vunpack.c.0.s8 %v825
      %v827 = vlaneseq
      %v828 = vshrl.u32 %v827, 7
      %v829 = vsub.s32 %v826, %v828
      %v830 = vrot.slane %v823, %v829
      %831 = vrot.lane.b32.xlu0 %v830, 32
      %v832 = vpop.permute.xlu0 %831
      %834 = vst.msk [vmem:[#allocation3] sm:$0x1] %vm522, %v832
      %v835 = vld [vmem:[#allocation6] sm:$0x3]
      %v838 = vunpack.c.l.s4 1983009808
      %v839 = vunpack.c.0.s8 %v838
      %v840 = vlaneseq
      %v841 = vshrl.u32 %v840, 7
      %v842 = vsub.s32 %v839, %v841
      %v843 = vrot.slane %v734, %v842
      %844 = vrot.lane.b32.xlu0 %v843, 32
      %v845 = vpop.permute.xlu0 %844
      %v847 = vmax.f32 %v835, %v845
      %848 = vst.msk [vmem:[#allocation6] sm:$0x3] %vm488, %v847
      %v849 = vld [vmem:[#allocation7] sm:$0x3]
      %v852 = vunpack.c.l.s4 1983009808
      %v853 = vunpack.c.0.s8 %v852
      %v854 = vlaneseq
      %v855 = vshrl.u32 %v854, 7
      %v856 = vsub.s32 %v853, %v855
      %v857 = vrot.slane %v770, %v856
      %858 = vrot.lane.b32.xlu0 %v857, 32
      %v859 = vpop.permute.xlu0 %858
      %v861 = vmax.f32 %v849, %v859
      %862 = vst.msk [vmem:[#allocation7] sm:$0x3] %vm488, %v861
      %s863 = scalar_lea.vmem %s255, 2
      %v864 = vld [vmem:[%s863] sm:$0x1]
      %v865 = vunpack.c.l.bf16 %v864
      %v866 = vld [vmem:[#allocation2] sm:$0x1]
      %v867 = vld [vmem:[%s2] sm:$0xf]
      %v868 = vld [vmem:[%s2 + $0x4] sm:$0xf]
      %v869 = vld [vmem:[%s2 + $0x8] sm:$0xf]
      %v870 = vld [vmem:[%s2 + $0xc] sm:$0xf]
      %v875 = vunpack.c.l.b16 %v867
      %v876 = vunpack.c.l.b16 %v868
      %v877 = vunpack.c.l.b16 %v869
      %v878 = vunpack.c.l.b16 %v870
      %v879 = vpack.c.b16 %v876, %v875
      %v880 = vpack.c.b16 %v878, %v877
      %v884 = vsel %vm296, %v866, 0
      %886 = vmatprep.subr.bf16.mxu0 0
      %887 = vmatpush1.bf16.msra.mxu0 %v879
      %888 = vmatprep.subr.bf16.mxu0 0
      %889 = vmatpush1.bf16.msra.mxu0 %v880
      %890 = vmatprep.subr.bf16.mxu0 0
      %891 = vmatpush1.bf16.msra.mxu0 0
      %892 = vmatprep.subr.bf16.mxu0 0
      %893 = vmatpush1.bf16.msra.mxu0 0
      %894 = vmatprep.subr.bf16.mxu0 0
      %895 = vmatpush1.bf16.msra.mxu0 0
      %896 = vmatprep.subr.bf16.mxu0 0
      %897 = vmatpush1.bf16.msra.mxu0 0
      %898 = vmatprep.subr.bf16.mxu0 0
      %899 = vmatpush1.bf16.msra.mxu0 0
      %900 = vmatprep.subr.bf16.mxu0 0
      %901 = vmatpush1.bf16.msra.mxu0 0
      %902 = vmatprep.subr.bf16.mxu0 0
      %903 = vmatpush1.bf16.msra.mxu0 0
      %904 = vmatprep.subr.bf16.mxu0 0
      %905 = vmatpush1.bf16.msra.mxu0 0
      %906 = vmatprep.subr.bf16.mxu0 0
      %907 = vmatpush1.bf16.msra.mxu0 0
      %908 = vmatprep.subr.bf16.mxu0 0
      %909 = vmatpush1.bf16.msra.mxu0 0
      %910 = vmatprep.subr.bf16.mxu0 0
      %911 = vmatpush1.bf16.msra.mxu0 0
      %912 = vmatprep.subr.bf16.mxu0 0
      %913 = vmatpush1.bf16.msra.mxu0 0
      %914 = vmatprep.subr.bf16.mxu0 0
      %915 = vmatpush1.bf16.msra.mxu0 0
      %916 = vmatprep.subr.bf16.mxu0 0
      %917 = vmatpush1.bf16.msra.mxu0 0
      %918 = vmatprep.mubr.bf16.mxu0 0
      %919 = vmatmul.mubr.bf16.gmra.mrb[0].mxu0 %v884
      %v920 = vpop.f32.mrb[0].mxu0
      %v921 = vadd.f32 0.0, %v920
      %v922 = vpop.f32.mrb[0].mxu0
      %v923 = vpop.f32.mrb[0].mxu0
      %v924 = vpop.f32.mrb[0].mxu0
      %925 = vdwg.mxu0
      %v926 = vadd.f32 %v865, %v921
      %s927 = scalar_lea.vmem %s261, 1
      %v928 = vld [vmem:[%s927] sm:$0x1]
      %v929 = vunpack.c.l.bf16 %v928
      %v930 = vld [vmem:[#allocation3] sm:$0x1]
      %v931 = vld [vmem:[%s3] sm:$0xf]
      %v932 = vld [vmem:[%s3 + $0x4] sm:$0xf]
      %v933 = vld [vmem:[%s3 + $0x8] sm:$0xf]
      %v934 = vld [vmem:[%s3 + $0xc] sm:$0xf]
      %v939 = vunpack.c.l.b16 %v931
      %v940 = vunpack.c.l.b16 %v932
      %v941 = vunpack.c.l.b16 %v933
      %v942 = vunpack.c.l.b16 %v934
      %v943 = vpack.c.b16 %v940, %v939
      %v944 = vpack.c.b16 %v942, %v941
      %v948 = vsel %vm296, %v930, 0
      %950 = vmatprep.subr.bf16.mxu0 0
      %951 = vmatpush1.bf16.msra.mxu0 %v943
      %952 = vmatprep.subr.bf16.mxu0 0
      %953 = vmatpush1.bf16.msra.mxu0 %v944
      %954 = vmatprep.subr.bf16.mxu0 0
      %955 = vmatpush1.bf16.msra.mxu0 0
      %956 = vmatprep.subr.bf16.mxu0 0
      %957 = vmatpush1.bf16.msra.mxu0 0
      %958 = vmatprep.subr.bf16.mxu0 0
      %959 = vmatpush1.bf16.msra.mxu0 0
      %960 = vmatprep.subr.bf16.mxu0 0
      %961 = vmatpush1.bf16.msra.mxu0 0
      %962 = vmatprep.subr.bf16.mxu0 0
      %963 = vmatpush1.bf16.msra.mxu0 0
      %964 = vmatprep.subr.bf16.mxu0 0
      %965 = vmatpush1.bf16.msra.mxu0 0
      %966 = vmatprep.subr.bf16.mxu0 0
      %967 = vmatpush1.bf16.msra.mxu0 0
      %968 = vmatprep.subr.bf16.mxu0 0
      %969 = vmatpush1.bf16.msra.mxu0 0
      %970 = vmatprep.subr.bf16.mxu0 0
      %971 = vmatpush1.bf16.msra.mxu0 0
      %972 = vmatprep.subr.bf16.mxu0 0
      %973 = vmatpush1.bf16.msra.mxu0 0
      %974 = vmatprep.subr.bf16.mxu0 0
      %975 = vmatpush1.bf16.msra.mxu0 0
      %976 = vmatprep.subr.bf16.mxu0 0
      %977 = vmatpush1.bf16.msra.mxu0 0
      %978 = vmatprep.subr.bf16.mxu0 0
      %979 = vmatpush1.bf16.msra.mxu0 0
      %980 = vmatprep.subr.bf16.mxu0 0
      %981 = vmatpush1.bf16.msra.mxu0 0
      %982 = vmatprep.mubr.bf16.mxu0 0
      %983 = vmatmul.mubr.bf16.gmra.mrb[0].mxu0 %v948
      %v984 = vpop.f32.mrb[0].mxu0
      %v985 = vadd.f32 0.0, %v984
      %v986 = vpop.f32.mrb[0].mxu0
      %v987 = vpop.f32.mrb[0].mxu0
      %v988 = vpop.f32.mrb[0].mxu0
      %989 = vdwg.mxu0
      %v990 = vadd.f32 %v929, %v985
      %v991 = vld [vmem:[#allocation4] sm:$0x3]
      %v992 = vxor.u32 %v926, 2147483648
      %v993 = vmul.f32 %v992, 1.442695
      %v994 = vpow.pop %v993
      %v995 = vadd.f32 %v994, 1.0
      %v996 = vrcp.pop %v995
      %v997 = vmul.f32 1.0, %v996
      %v998 = vtanh.pop %v926
      %v1001 = vunpack.c.l.s4 1983009808
      %v1002 = vunpack.c.0.s8 %v1001
      %v1003 = vlaneseq
      %v1004 = vshrl.u32 %v1003, 7
      %v1005 = vsub.s32 %v1002, %v1004
      %v1006 = vrot.slane %v991, %v1005
      %1007 = vrot.lane.b32.xlu0 %v1006, 32
      %v1008 = vpop.permute.xlu0 %1007
      %v1010 = vmul.f32 %v997, %v1008
      %1012 = vrot.lane.b32.xlu0 %v998, 64
      %v1013 = vpop.permute.xlu0 %1012
      %v1015 = vmul.f32 %v997, %v1013
      %1017 = vrot.lane.b32.xlu0 %v1015, 32
      %v1018 = vpop.permute.xlu0 %1017
      %v1020 = vadd.f32 %v1010, %v1018
      %v1021 = vtanh.pop %v1020
      %1023 = vrot.lane.b32.xlu0 %v1021, 64
      %v1024 = vpop.permute.xlu0 %1023
      %v1026 = vmul.f32 %v997, %v1024
      %v1027 = vld [vmem:[#allocation5] sm:$0x3]
      %v1028 = vxor.u32 %v990, 2147483648
      %v1029 = vmul.f32 %v1028, 1.442695
      %v1030 = vpow.pop %v1029
      %v1031 = vadd.f32 %v1030, 1.0
      %v1032 = vrcp.pop %v1031
      %v1033 = vmul.f32 1.0, %v1032
      %v1034 = vtanh.pop %v990
      %v1037 = vunpack.c.l.s4 1983009808
      %v1038 = vunpack.c.0.s8 %v1037
      %v1039 = vlaneseq
      %v1040 = vshrl.u32 %v1039, 7
      %v1041 = vsub.s32 %v1038, %v1040
      %v1042 = vrot.slane %v1027, %v1041
      %1043 = vrot.lane.b32.xlu0 %v1042, 32
      %v1044 = vpop.permute.xlu0 %1043
      %v1046 = vmul.f32 %v1033, %v1044
      %1048 = vrot.lane.b32.xlu0 %v1034, 64
      %v1049 = vpop.permute.xlu0 %1048
      %v1051 = vmul.f32 %v1033, %v1049
      %1053 = vrot.lane.b32.xlu0 %v1051, 32
      %v1054 = vpop.permute.xlu0 %1053
      %v1056 = vadd.f32 %v1046, %v1054
      %v1057 = vtanh.pop %v1056
      %1059 = vrot.lane.b32.xlu0 %v1057, 64
      %v1060 = vpop.permute.xlu0 %1059
      %v1062 = vmul.f32 %v1033, %v1060
      %v1065 = vunpack.c.l.s4 1983009808
      %v1066 = vunpack.c.0.s8 %v1065
      %v1067 = vlaneseq
      %v1068 = vshrl.u32 %v1067, 7
      %v1069 = vsub.s32 %v1066, %v1068
      %v1070 = vrot.slane %v1020, %v1069
      %1071 = vrot.lane.b32.xlu0 %v1070, 96
      %v1072 = vpop.permute.xlu0 %1071
      %1074 = vst.msk [vmem:[#allocation4] sm:$0x3] %vm488, %v1072
      %v1077 = vunpack.c.l.s4 1983009808
      %v1078 = vunpack.c.0.s8 %v1077
      %v1079 = vlaneseq
      %v1080 = vshrl.u32 %v1079, 7
      %v1081 = vsub.s32 %v1078, %v1080
      %v1082 = vrot.slane %v1056, %v1081
      %1083 = vrot.lane.b32.xlu0 %v1082, 96
      %v1084 = vpop.permute.xlu0 %1083
      %1086 = vst.msk [vmem:[#allocation5] sm:$0x3] %vm488, %v1084
      %v1087 = vpack.c.bf16 %v1026, %v1026
      %v1088 = vpack.c.bf16 %v1062, %v1062
      %v1091 = vunpack.c.l.s4 1966171168
      %v1092 = vunpack.c.0.s8 %v1091
      %v1093 = vlaneseq
      %v1094 = vshrl.u32 %v1093, 7
      %v1095 = vsub.s32 %v1092, %v1094
      %v1096 = vrot.slane %v1087, %v1095
      %v1098 = vunpack.c.l.s4 1966171168
      %v1099 = vunpack.c.0.s8 %v1098
      %v1100 = vlaneseq
      %v1101 = vshrl.u32 %v1100, 7
      %v1102 = vsub.s32 %v1099, %v1101
      %v1103 = vrot.slane %v1096, %v1102
      %1104 = vrot.lane.b32.xlu0 %v1103, 32
      %v1105 = vpop.permute.xlu0 %1104
      %1107 = vst.msk [vmem:[#allocation2] sm:$0x1] %vm522, %v1105
      %v1110 = vunpack.c.l.s4 1966171168
      %v1111 = vunpack.c.0.s8 %v1110
      %v1112 = vlaneseq
      %v1113 = vshrl.u32 %v1112, 7
      %v1114 = vsub.s32 %v1111, %v1113
      %v1115 = vrot.slane %v1088, %v1114
      %v1117 = vunpack.c.l.s4 1966171168
      %v1118 = vunpack.c.0.s8 %v1117
      %v1119 = vlaneseq
      %v1120 = vshrl.u32 %v1119, 7
      %v1121 = vsub.s32 %v1118, %v1120
      %v1122 = vrot.slane %v1115, %v1121
      %1123 = vrot.lane.b32.xlu0 %v1122, 32
      %v1124 = vpop.permute.xlu0 %1123
      %1126 = vst.msk [vmem:[#allocation3] sm:$0x1] %vm522, %v1124
      %v1127 = vld [vmem:[#allocation6] sm:$0x3]
      %v1130 = vunpack.c.l.s4 1983009808
      %v1131 = vunpack.c.0.s8 %v1130
      %v1132 = vlaneseq
      %v1133 = vshrl.u32 %v1132, 7
      %v1134 = vsub.s32 %v1131, %v1133
      %v1135 = vrot.slane %v1026, %v1134
      %1136 = vrot.lane.b32.xlu0 %v1135, 32
      %v1137 = vpop.permute.xlu0 %1136
      %v1139 = vmax.f32 %v1127, %v1137
      %1140 = vst.msk [vmem:[#allocation6] sm:$0x3] %vm488, %v1139
      %v1141 = vld [vmem:[#allocation7] sm:$0x3]
      %v1144 = vunpack.c.l.s4 1983009808
      %v1145 = vunpack.c.0.s8 %v1144
      %v1146 = vlaneseq
      %v1147 = vshrl.u32 %v1146, 7
      %v1148 = vsub.s32 %v1145, %v1147
      %v1149 = vrot.slane %v1062, %v1148
      %1150 = vrot.lane.b32.xlu0 %v1149, 32
      %v1151 = vpop.permute.xlu0 %1150
      %v1153 = vmax.f32 %v1141, %v1151
      %1154 = vst.msk [vmem:[#allocation7] sm:$0x3] %vm488, %v1153
      %s1155 = scalar_lea.vmem %s255, 3
      %v1156 = vld [vmem:[%s1155] sm:$0x1]
      %v1157 = vunpack.c.l.bf16 %v1156
      %v1158 = vld [vmem:[#allocation2] sm:$0x1]
      %v1159 = vld [vmem:[%s2] sm:$0xf]
      %v1160 = vld [vmem:[%s2 + $0x4] sm:$0xf]
      %v1161 = vld [vmem:[%s2 + $0x8] sm:$0xf]
      %v1162 = vld [vmem:[%s2 + $0xc] sm:$0xf]
      %v1167 = vunpack.c.l.b16 %v1159
      %v1168 = vunpack.c.l.b16 %v1160
      %v1169 = vunpack.c.l.b16 %v1161
      %v1170 = vunpack.c.l.b16 %v1162
      %v1171 = vpack.c.b16 %v1168, %v1167
      %v1172 = vpack.c.b16 %v1170, %v1169
      %v1176 = vsel %vm296, %v1158, 0
      %1178 = vmatprep.subr.bf16.mxu0 0
      %1179 = vmatpush1.bf16.msra.mxu0 %v1171
      %1180 = vmatprep.subr.bf16.mxu0 0
      %1181 = vmatpush1.bf16.msra.mxu0 %v1172
      %1182 = vmatprep.subr.bf16.mxu0 0
      %1183 = vmatpush1.bf16.msra.mxu0 0
      %1184 = vmatprep.subr.bf16.mxu0 0
      %1185 = vmatpush1.bf16.msra.mxu0 0
      %1186 = vmatprep.subr.bf16.mxu0 0
      %1187 = vmatpush1.bf16.msra.mxu0 0
      %1188 = vmatprep.subr.bf16.mxu0 0
      %1189 = vmatpush1.bf16.msra.mxu0 0
      %1190 = vmatprep.subr.bf16.mxu0 0
      %1191 = vmatpush1.bf16.msra.mxu0 0
      %1192 = vmatprep.subr.bf16.mxu0 0
      %1193 = vmatpush1.bf16.msra.mxu0 0
      %1194 = vmatprep.subr.bf16.mxu0 0
      %1195 = vmatpush1.bf16.msra.mxu0 0
      %1196 = vmatprep.subr.bf16.mxu0 0
      %1197 = vmatpush1.bf16.msra.mxu0 0
      %1198 = vmatprep.subr.bf16.mxu0 0
      %1199 = vmatpush1.bf16.msra.mxu0 0
      %1200 = vmatprep.subr.bf16.mxu0 0
      %1201 = vmatpush1.bf16.msra.mxu0 0
      %1202 = vmatprep.subr.bf16.mxu0 0
      %1203 = vmatpush1.bf16.msra.mxu0 0
      %1204 = vmatprep.subr.bf16.mxu0 0
      %1205 = vmatpush1.bf16.msra.mxu0 0
      %1206 = vmatprep.subr.bf16.mxu0 0
      %1207 = vmatpush1.bf16.msra.mxu0 0
      %1208 = vmatprep.subr.bf16.mxu0 0
      %1209 = vmatpush1.bf16.msra.mxu0 0
      %1210 = vmatprep.mubr.bf16.mxu0 0
      %1211 = vmatmul.mubr.bf16.gmra.mrb[0].mxu0 %v1176
      %v1212 = vpop.f32.mrb[0].mxu0
      %v1213 = vadd.f32 0.0, %v1212
      %v1214 = vpop.f32.mrb[0].mxu0
      %v1215 = vpop.f32.mrb[0].mxu0
      %v1216 = vpop.f32.mrb[0].mxu0
      %1217 = vdwg.mxu0
      %v1218 = vadd.f32 %v1157, %v1213
      %v1219 = vld [vmem:[%s261] sm:$0x1]
      %v1220 = vunpack.c.l.bf16 %v1219
      %v1221 = vld [vmem:[#allocation3] sm:$0x1]
      %v1222 = vld [vmem:[%s3] sm:$0xf]
      %v1223 = vld [vmem:[%s3 + $0x4] sm:$0xf]
      %v1224 = vld [vmem:[%s3 + $0x8] sm:$0xf]
      %v1225 = vld [vmem:[%s3 + $0xc] sm:$0xf]
      %v1230 = vunpack.c.l.b16 %v1222
      %v1231 = vunpack.c.l.b16 %v1223
      %v1232 = vunpack.c.l.b16 %v1224
      %v1233 = vunpack.c.l.b16 %v1225
      %v1234 = vpack.c.b16 %v1231, %v1230
      %v1235 = vpack.c.b16 %v1233, %v1232
      %v1239 = vsel %vm296, %v1221, 0
      %1241 = vmatprep.subr.bf16.mxu0 0
      %1242 = vmatpush1.bf16.msra.mxu0 %v1234
      %1243 = vmatprep.subr.bf16.mxu0 0
      %1244 = vmatpush1.bf16.msra.mxu0 %v1235
      %1245 = vmatprep.subr.bf16.mxu0 0
      %1246 = vmatpush1.bf16.msra.mxu0 0
      %1247 = vmatprep.subr.bf16.mxu0 0
      %1248 = vmatpush1.bf16.msra.mxu0 0
      %1249 = vmatprep.subr.bf16.mxu0 0
      %1250 = vmatpush1.bf16.msra.mxu0 0
      %1251 = vmatprep.subr.bf16.mxu0 0
      %1252 = vmatpush1.bf16.msra.mxu0 0
      %1253 = vmatprep.subr.bf16.mxu0 0
      %1254 = vmatpush1.bf16.msra.mxu0 0
      %1255 = vmatprep.subr.bf16.mxu0 0
      %1256 = vmatpush1.bf16.msra.mxu0 0
      %1257 = vmatprep.subr.bf16.mxu0 0
      %1258 = vmatpush1.bf16.msra.mxu0 0
      %1259 = vmatprep.subr.bf16.mxu0 0
      %1260 = vmatpush1.bf16.msra.mxu0 0
      %1261 = vmatprep.subr.bf16.mxu0 0
      %1262 = vmatpush1.bf16.msra.mxu0 0
      %1263 = vmatprep.subr.bf16.mxu0 0
      %1264 = vmatpush1.bf16.msra.mxu0 0
      %1265 = vmatprep.subr.bf16.mxu0 0
      %1266 = vmatpush1.bf16.msra.mxu0 0
      %1267 = vmatprep.subr.bf16.mxu0 0
      %1268 = vmatpush1.bf16.msra.mxu0 0
      %1269 = vmatprep.subr.bf16.mxu0 0
      %1270 = vmatpush1.bf16.msra.mxu0 0
      %1271 = vmatprep.subr.bf16.mxu0 0
      %1272 = vmatpush1.bf16.msra.mxu0 0
      %1273 = vmatprep.mubr.bf16.mxu0 0
      %1274 = vmatmul.mubr.bf16.gmra.mrb[0].mxu0 %v1239
      %v1275 = vpop.f32.mrb[0].mxu0
      %v1276 = vadd.f32 0.0, %v1275
      %v1277 = vpop.f32.mrb[0].mxu0
      %v1278 = vpop.f32.mrb[0].mxu0
      %v1279 = vpop.f32.mrb[0].mxu0
      %1280 = vdwg.mxu0
      %v1281 = vadd.f32 %v1220, %v1276
      %v1282 = vld [vmem:[#allocation4] sm:$0x3]
      %v1283 = vxor.u32 %v1218, 2147483648
      %v1284 = vmul.f32 %v1283, 1.442695
      %v1285 = vpow.pop %v1284
      %v1286 = vadd.f32 %v1285, 1.0
      %v1287 = vrcp.pop %v1286
      %v1288 = vmul.f32 1.0, %v1287
      %v1289 = vtanh.pop %v1218
      %v1292 = vunpack.c.l.s4 1983009808
      %v1293 = vunpack.c.0.s8 %v1292
      %v1294 = vlaneseq
      %v1295 = vshrl.u32 %v1294, 7
      %v1296 = vsub.s32 %v1293, %v1295
      %v1297 = vrot.slane %v1282, %v1296
      %1298 = vrot.lane.b32.xlu0 %v1297, 32
      %v1299 = vpop.permute.xlu0 %1298
      %v1301 = vmul.f32 %v1288, %v1299
      %1303 = vrot.lane.b32.xlu0 %v1289, 64
      %v1304 = vpop.permute.xlu0 %1303
      %v1306 = vmul.f32 %v1288, %v1304
      %1308 = vrot.lane.b32.xlu0 %v1306, 32
      %v1309 = vpop.permute.xlu0 %1308
      %v1311 = vadd.f32 %v1301, %v1309
      %v1312 = vtanh.pop %v1311
      %1314 = vrot.lane.b32.xlu0 %v1312, 64
      %v1315 = vpop.permute.xlu0 %1314
      %v1317 = vmul.f32 %v1288, %v1315
      %v1318 = vld [vmem:[#allocation5] sm:$0x3]
      %v1319 = vxor.u32 %v1281, 2147483648
      %v1320 = vmul.f32 %v1319, 1.442695
      %v1321 = vpow.pop %v1320
      %v1322 = vadd.f32 %v1321, 1.0
      %v1323 = vrcp.pop %v1322
      %v1324 = vmul.f32 1.0, %v1323
      %v1325 = vtanh.pop %v1281
      %v1328 = vunpack.c.l.s4 1983009808
      %v1329 = vunpack.c.0.s8 %v1328
      %v1330 = vlaneseq
      %v1331 = vshrl.u32 %v1330, 7
      %v1332 = vsub.s32 %v1329, %v1331
      %v1333 = vrot.slane %v1318, %v1332
      %1334 = vrot.lane.b32.xlu0 %v1333, 32
      %v1335 = vpop.permute.xlu0 %1334
      %v1337 = vmul.f32 %v1324, %v1335
      %1339 = vrot.lane.b32.xlu0 %v1325, 64
      %v1340 = vpop.permute.xlu0 %1339
      %v1342 = vmul.f32 %v1324, %v1340
      %1344 = vrot.lane.b32.xlu0 %v1342, 32
      %v1345 = vpop.permute.xlu0 %1344
      %v1347 = vadd.f32 %v1337, %v1345
      %v1348 = vtanh.pop %v1347
      %1350 = vrot.lane.b32.xlu0 %v1348, 64
      %v1351 = vpop.permute.xlu0 %1350
      %v1353 = vmul.f32 %v1324, %v1351
      %v1356 = vunpack.c.l.s4 1983009808
      %v1357 = vunpack.c.0.s8 %v1356
      %v1358 = vlaneseq
      %v1359 = vshrl.u32 %v1358, 7
      %v1360 = vsub.s32 %v1357, %v1359
      %v1361 = vrot.slane %v1311, %v1360
      %1362 = vrot.lane.b32.xlu0 %v1361, 96
      %v1363 = vpop.permute.xlu0 %1362
      %1365 = vst.msk [vmem:[#allocation4] sm:$0x3] %vm488, %v1363
      %v1368 = vunpack.c.l.s4 1983009808
      %v1369 = vunpack.c.0.s8 %v1368
      %v1370 = vlaneseq
      %v1371 = vshrl.u32 %v1370, 7
      %v1372 = vsub.s32 %v1369, %v1371
      %v1373 = vrot.slane %v1347, %v1372
      %1374 = vrot.lane.b32.xlu0 %v1373, 96
      %v1375 = vpop.permute.xlu0 %1374
      %1377 = vst.msk [vmem:[#allocation5] sm:$0x3] %vm488, %v1375
      %v1378 = vpack.c.bf16 %v1317, %v1317
      %v1379 = vpack.c.bf16 %v1353, %v1353
      %v1382 = vunpack.c.l.s4 1966171168
      %v1383 = vunpack.c.0.s8 %v1382
      %v1384 = vlaneseq
      %v1385 = vshrl.u32 %v1384, 7
      %v1386 = vsub.s32 %v1383, %v1385
      %v1387 = vrot.slane %v1378, %v1386
      %v1389 = vunpack.c.l.s4 1966171168
      %v1390 = vunpack.c.0.s8 %v1389
      %v1391 = vlaneseq
      %v1392 = vshrl.u32 %v1391, 7
      %v1393 = vsub.s32 %v1390, %v1392
      %v1394 = vrot.slane %v1387, %v1393
      %1395 = vrot.lane.b32.xlu0 %v1394, 32
      %v1396 = vpop.permute.xlu0 %1395
      %1398 = vst.msk [vmem:[#allocation2] sm:$0x1] %vm522, %v1396
      %v1401 = vunpack.c.l.s4 1966171168
      %v1402 = vunpack.c.0.s8 %v1401
      %v1403 = vlaneseq
      %v1404 = vshrl.u32 %v1403, 7
      %v1405 = vsub.s32 %v1402, %v1404
      %v1406 = vrot.slane %v1379, %v1405
      %v1408 = vunpack.c.l.s4 1966171168
      %v1409 = vunpack.c.0.s8 %v1408
      %v1410 = vlaneseq
      %v1411 = vshrl.u32 %v1410, 7
      %v1412 = vsub.s32 %v1409, %v1411
      %v1413 = vrot.slane %v1406, %v1412
      %1414 = vrot.lane.b32.xlu0 %v1413, 32
      %v1415 = vpop.permute.xlu0 %1414
      %1417 = vst.msk [vmem:[#allocation3] sm:$0x1] %vm522, %v1415
      %v1418 = vld [vmem:[#allocation6] sm:$0x3]
      %v1421 = vunpack.c.l.s4 1983009808
      %v1422 = vunpack.c.0.s8 %v1421
      %v1423 = vlaneseq
      %v1424 = vshrl.u32 %v1423, 7
      %v1425 = vsub.s32 %v1422, %v1424
      %v1426 = vrot.slane %v1317, %v1425
      %1427 = vrot.lane.b32.xlu0 %v1426, 32
      %v1428 = vpop.permute.xlu0 %1427
      %v1430 = vmax.f32 %v1418, %v1428
      %1431 = vst.msk [vmem:[#allocation6] sm:$0x3] %vm488, %v1430
      %v1432 = vld [vmem:[#allocation7] sm:$0x3]
      %v1435 = vunpack.c.l.s4 1983009808
      %v1436 = vunpack.c.0.s8 %v1435
      %v1437 = vlaneseq
      %v1438 = vshrl.u32 %v1437, 7
      %v1439 = vsub.s32 %v1436, %v1438
      %v1440 = vrot.slane %v1353, %v1439
      %1441 = vrot.lane.b32.xlu0 %v1440, 32
      %v1442 = vpop.permute.xlu0 %1441
      %v1444 = vmax.f32 %v1432, %v1442
      %1445 = vst.msk [vmem:[#allocation7] sm:$0x3] %vm488, %v1444
      %p1446 = scmp.eq.s32.totalorder %s19, 1
      // Predicated region
      $region49: #{lstm_pooling_classifier_forward.3} parent=43 // pred_check
        %p1447 = pneg %p1446
      $region50: #{lstm_pooling_classifier_forward.3} parent=43 // pred_check_branch
        %1449 = sbr.rel (%p1447) target = $region52
      $region51: #{lstm_pooling_classifier_forward.3} parent=43 // pred_region
        %v1450 = vld [vmem:[#allocation6] sm:$0x3]
        %v1451 = vld [vmem:[%s4] sm:$0x1]
        %v1452 = vlaneseq
        %v1453 = vshrl.u32 %v1452, 7
        %v1454 = vsub.s32 0, %v1453
        %v1455 = vrot.slane %v1451, %v1454
        %v1456 = vmul.f32 %v1450, %v1455
        %v1457 = vsel %vm488, %v1456, 0.0
        %1458 = vadd.xlane.f32.xlu0 %v1457
        %v1459 = vpop.xlane.xlu0 %1458
        %v1460 = vld [vmem:[#allocation7] sm:$0x3]
        %v1461 = vld [vmem:[%s4 + $0x1] sm:$0x1]
        %v1462 = vlaneseq
        %v1463 = vshrl.u32 %v1462, 7
        %v1464 = vsub.s32 0, %v1463
        %v1465 = vrot.slane %v1461, %v1464
        %v1466 = vmul.f32 %v1460, %v1465
        %v1467 = vsel %vm488, %v1466, 0.0
        %1468 = vadd.xlane.f32.xlu0 %v1467
        %v1469 = vpop.xlane.xlu0 %1468
        %v1470 = vadd.f32 %v1459, %v1469
        %v1471 = vld [vmem:[#allocation8] sm:$0x1]
        %v1473 = vlaneseq
        %v1474 = vshrl.u32 %v1473, 7
        %v1475 = vsub.s32 0, %v1474
        %v1476 = vrot.slane %v1471, %v1475
        %v1478 = vadd.f32 %v1470, %v1476
        %v1479 = vxor.u32 %v1478, 2147483648
        %v1480 = vmul.f32 %v1479, 1.442695
        %v1481 = vpow.pop %v1480
        %v1482 = vadd.f32 %v1481, 1.0
        %v1483 = vrcp.pop %v1482
        %v1484 = vmul.f32 1.0, %v1483
        %vm1485 = vcmask 1024
        %1486 = vst.msk [vmem:[%s6] sm:$0x3] %vm1485, %v1484
      $region52: #{lstm_pooling_classifier_forward.3} parent=43 // pred_fallthru
        _
      // Predicated region
      $region53: #{lstm_pooling_classifier_forward.3} parent=43 // pred_check
        %p1487 = pneg %p170
      $region54: #{lstm_pooling_classifier_forward.3} parent=43 // pred_check_branch
        %1489 = sbr.rel (%p1487) target = $region56
      $region55: #{lstm_pooling_classifier_forward.3} parent=43 // pred_region
        _
      $region56: #{lstm_pooling_classifier_forward.3} parent=43 // pred_fallthru
        _
      // Predicated region
      $region57: #{lstm_pooling_classifier_forward.3} parent=43 // pred_check
        %p1490 = pneg %p170
      $region58: #{lstm_pooling_classifier_forward.3} parent=43 // pred_check_branch
        %1492 = sbr.rel (%p1490) target = $region60
      $region59: #{lstm_pooling_classifier_forward.3} parent=43 // pred_region
        _
      $region60: #{lstm_pooling_classifier_forward.3} parent=43 // pred_fallthru
        _
    $region44: #{lstm_pooling_classifier_forward.3} parent=5 // pred_fallthru
      _
    %p1493 = scmp.le.s32.totalorder 2, %s14
    // Predicated region
    $region61: #{lstm_pooling_classifier_forward.3} parent=5 // pred_check
      %p1494 = pneg %p1493
    $region62: #{lstm_pooling_classifier_forward.3} parent=5 // pred_check_branch
      %1496 = sbr.rel (%p1494) target = $region64
    $region63: #{lstm_pooling_classifier_forward.3} parent=5 // pred_region
      %s1497 = ssub.s32 %s14, 2
    $region64: #{lstm_pooling_classifier_forward.3} parent=5 // pred_fallthru
      _
  $region6: #{lstm_pooling_classifier_forward.3} parent=0 // loop_footer
    %s18 = sadd.s32 1, %s14
  $region7: #{lstm_pooling_classifier_forward.3} parent=0 // loop_footer_branch
    %13 = sbr.rel target = $region3
  $region8: #{lstm_pooling_classifier_forward.3} parent=0 // loop_exit
    _

</llo_original>
